<compile_context>
chip_gen: v6e
topology: v6e:2x2x1
jax: 0.10.0
libtpu: 0.0.40
codegen_flags: <defaults>
</compile_context>

<pallas_src>
import functools

import jax
import jax.numpy as jnp
from jax.experimental import pallas as pl
from jax.experimental.pallas import tpu as pltpu


def _mha_kernel(q_ref, k_ref, v_ref,
                wq_ref, bq_ref, wk_ref, bk_ref, wv_ref, bv_ref,
                wout_ref, bout_ref, out_ref, *, n_heads, batch):
    rows, embed = q_ref.shape            # rows = t_block * batch
    t_block = rows // batch

    x_q = q_ref[...]                     # (rows, E), loaded once for all heads
    x_k = k_ref[...]
    x_v = v_ref[...]

    # linear_out bias, broadcast once (hoisted out of the head loop)
    acc = jnp.broadcast_to(bout_ref[...], (rows, embed))

    # n_heads is small and static: unrolled loop inside one grid step, so the
    # concat + linear_out over heads is a register accumulation (no scratch).
    for h in range(n_heads):
        # projections as plain 2-D MXU matmuls; the 1/sqrt(E) score scale is
        # already folded into wq/bq by the wrapper.
        q = jnp.dot(x_q, wq_ref[h], preferred_element_type=jnp.float32) + bq_ref[h]
        k = jnp.dot(x_k, wk_ref[h], preferred_element_type=jnp.float32) + bk_ref[h]
        v = jnp.dot(x_v, wv_ref[h], preferred_element_type=jnp.float32) + bv_ref[h]

        # attention over the batch axis, batched over time (module semantics)
        q3 = q.reshape(t_block, batch, embed)
        k3 = k.reshape(t_block, batch, embed)
        v3 = v.reshape(t_block, batch, embed)
        scores = jnp.einsum('tbe,tce->tbc', q3, k3,
                            preferred_element_type=jnp.float32)

        m = jnp.max(scores, axis=-1, keepdims=True)
        e = jnp.exp(scores - m)
        attn = e * pl.reciprocal(jnp.sum(e, axis=-1, keepdims=True), approx=True)

        head_out = jnp.einsum('tbc,tce->tbe', attn, v3,
                              preferred_element_type=jnp.float32)

        # this head's slice of linear_out(concat(heads))
        acc = acc + jnp.dot(head_out.reshape(rows, embed), wout_ref[h],
                            preferred_element_type=jnp.float32)

    out_ref[...] = acc


def multiheaded_attention(key, value, query, params, *, time_block=None):
    """key/value/query: (T, B, E) float32. params: dict of stacked per-head weights."""
    T, B, E = query.shape
    n_heads = params['wq'].shape[0]
    tq = T if time_block is None else time_block
    assert T % tq == 0, "time_block must divide T"

    # fold the 1/sqrt(key_dim) score scale into the q projection (host-side, exact)
    scale = E ** -0.5
    wq = params['wq'] * scale
    bq = params['bq'] * scale

    # (T, B, E) -> (T*B, E): free row-major reshape; gives M = T*B matmul rows
    q2 = query.reshape(T * B, E)
    k2 = key.reshape(T * B, E)
    v2 = value.reshape(T * B, E)

    rows_blk = tq * B
    grid = (T // tq,)
    row_spec = pl.BlockSpec((rows_blk, E), lambda i: (i, 0))

    def full(arr):
        nd = arr.ndim
        return pl.BlockSpec(arr.shape, lambda i: (0,) * nd)

    # advisory cost estimate: 4 (E,E) matmuls + 2 (B,B,E) attention matmuls per head
    flops = n_heads * (4 * 2 * T * B * E * E + 4 * T * B * B * E)
    transcendentals = n_heads * T * B * B
    bytes_accessed = 4 * (4 * T * B * E + n_heads * (4 * E * E + 3 * E) + E)

    kernel = functools.partial(_mha_kernel, n_heads=n_heads, batch=B)

    out2 = pl.pallas_call(
        kernel,
        out_shape=jax.ShapeDtypeStruct((T * B, E), jnp.float32),
        grid=grid,
        in_specs=[
            row_spec,                 # query rows
            row_spec,                 # key rows
            row_spec,                 # value rows
            full(wq), full(bq),       # q projection (scale folded in)
            full(params['wk']), full(params['bk']),
            full(params['wv']), full(params['bv']),
            full(params['wout']), full(params['bout']),
        ],
        out_specs=row_spec,
        compiler_params=pltpu.CompilerParams(
            dimension_semantics=("parallel",)),
        cost_estimate=pl.CostEstimate(
            flops=flops, transcendentals=transcendentals,
            bytes_accessed=bytes_accessed),
    )(q2, k2, v2,
      wq, bq,
      params['wk'], params['bk'],
      params['wv'], params['bv'],
      params['wout'], params['bout'])

    return out2.reshape(T, B, E)


def init_params(rng, n_heads, embed_dim):
    """Deterministic parameter init mirroring the module's reset_parameters()."""
    E = embed_dim
    keys = jax.random.split(rng, 8)

    # xavier_uniform for q/k/v projection weights (square E x E)
    xav_u = (6.0 / (E + E)) ** 0.5
    wq = jax.random.uniform(keys[0], (E, E), jnp.float32, -xav_u, xav_u)
    wk = jax.random.uniform(keys[1], (E, E), jnp.float32, -xav_u, xav_u)
    wv = jax.random.uniform(keys[2], (E, E), jnp.float32, -xav_u, xav_u)

    # xavier_normal on the (1, E) reshaped biases -> std = sqrt(2 / (1 + E))
    b_std = (2.0 / (1.0 + E)) ** 0.5
    bq = jax.random.normal(keys[3], (E,), jnp.float32) * b_std
    bk = jax.random.normal(keys[4], (E,), jnp.float32) * b_std
    bv = jax.random.normal(keys[5], (E,), jnp.float32) * b_std

    # linear_out: torch default init, uniform(-1/sqrt(fan_in), 1/sqrt(fan_in))
    fan_in = n_heads * E
    bound = 1.0 / (fan_in ** 0.5)
    w_lin = jax.random.uniform(keys[6], (E, fan_in), jnp.float32, -bound, bound)
    b_lin = jax.random.uniform(keys[7], (E,), jnp.float32, -bound, bound)

    # All heads are deepcopies of the same BasicAttention -> identical params.
    tile = lambda x: jnp.broadcast_to(x[None], (n_heads,) + x.shape)
    # linear_out computes attended @ w_lin.T ; w_lin.T is (nH*E, E); block h is (E, E)
    wout = jnp.transpose(w_lin).reshape(n_heads, E, E)

    return dict(
        wq=tile(wq), bq=tile(bq),
        wk=tile(wk), bk=tile(bk),
        wv=tile(wv), bv=tile(bv),
        wout=wout, bout=b_lin.reshape(1, E),
    ), (w_lin, b_lin)


def reference_forward(key, value, query, params, w_lin, b_lin):
    """Pure-JAX replica of the PyTorch forward, for correctness checking."""
    n_heads, E, _ = params['wq'].shape
    outs = []
    for h in range(n_heads):
        q = query @ params['wq'][h] + params['bq'][h]
        k = key @ params['wk'][h] + params['bk'][h]
        v = value @ params['wv'][h] + params['bv'][h]
        scores = jnp.einsum('tbe,tce->tbc', q, k) * (E ** -0.5)
        attn = jax.nn.softmax(scores, axis=-1)
        outs.append(jnp.einsum('tbc,tce->tbe', attn, v))
    attended = jnp.concatenate(outs, axis=-1)
    return attended @ w_lin.T + b_lin


if __name__ == "__main__":
    n_heads = 2
    embed_dim = 32
    T, B = 8, 4   # (time, batch, features) as the module expects

    root = jax.random.PRNGKey(0)
    k_in, k_par = jax.random.split(root)
    k1, k2, k3 = jax.random.split(k_in, 3)

    key = jax.random.normal(k1, (T, B, embed_dim), jnp.float32)
    value = jax.random.normal(k2, (T, B, embed_dim), jnp.float32)
    query = jax.random.normal(k3, (T, B, embed_dim), jnp.float32)

    params, (w_lin, b_lin) = init_params(k_par, n_heads, embed_dim)

    out = multiheaded_attention(key, value, query, params)
    out = jax.block_until_ready(out)

    ref = reference_forward(key, value, query, params, w_lin, b_lin)
    assert out.shape == (T, B, embed_dim)
    # approx reciprocal in the softmax denominator loosens tolerance slightly
    assert jnp.allclose(out, ref, atol=5e-3, rtol=5e-3), "mismatch vs. JAX reference"

    print("KERNEL_OK")
</pallas_src>

<mosaic_0001>
module attributes {stable_mosaic.version = 11 : i64} {
  func.func @_mha_kernel(%arg0: i32, %arg1: memref<32x32xf32, #tpu.memory_space<vmem>>, %arg2: memref<32x32xf32, #tpu.memory_space<vmem>>, %arg3: memref<32x32xf32, #tpu.memory_space<vmem>>, %arg4: memref<2x32x32xf32, #tpu.memory_space<vmem>>, %arg5: memref<2x32xf32, #tpu.memory_space<vmem>>, %arg6: memref<2x32x32xf32, #tpu.memory_space<vmem>>, %arg7: memref<2x32xf32, #tpu.memory_space<vmem>>, %arg8: memref<2x32x32xf32, #tpu.memory_space<vmem>>, %arg9: memref<2x32xf32, #tpu.memory_space<vmem>>, %arg10: memref<2x32x32xf32, #tpu.memory_space<vmem>>, %arg11: memref<1x32xf32, #tpu.memory_space<vmem>>, %arg12: memref<32x32xf32, #tpu.memory_space<vmem>>) attributes {dimension_semantics = [#tpu.dimension_semantics<parallel>], iteration_bounds = array<i64: 1>, scalar_prefetch = 0 : i64, scratch_operands = 0 : i64, tpu.core_type = #tpu.core_type<tc>, window_params = [{transform_indices = @transform_0, window_bounds = array<i64: 32, 32>}, {transform_indices = @transform_1, window_bounds = array<i64: 32, 32>}, {transform_indices = @transform_2, window_bounds = array<i64: 32, 32>}, {pipeline_mode = #tpu.pipeline_mode<synchronous>, transform_indices = @transform_3, window_bounds = array<i64: 2, 32, 32>}, {pipeline_mode = #tpu.pipeline_mode<synchronous>, transform_indices = @transform_4, window_bounds = array<i64: 2, 32>}, {pipeline_mode = #tpu.pipeline_mode<synchronous>, transform_indices = @transform_5, window_bounds = array<i64: 2, 32, 32>}, {pipeline_mode = #tpu.pipeline_mode<synchronous>, transform_indices = @transform_6, window_bounds = array<i64: 2, 32>}, {pipeline_mode = #tpu.pipeline_mode<synchronous>, transform_indices = @transform_7, window_bounds = array<i64: 2, 32, 32>}, {pipeline_mode = #tpu.pipeline_mode<synchronous>, transform_indices = @transform_8, window_bounds = array<i64: 2, 32>}, {pipeline_mode = #tpu.pipeline_mode<synchronous>, transform_indices = @transform_9, window_bounds = array<i64: 2, 32, 32>}, {pipeline_mode = #tpu.pipeline_mode<synchronous>, transform_indices = @transform_10, window_bounds = array<i64: 1, 32>}, {transform_indices = @transform_11, window_bounds = array<i64: 32, 32>}]} {
    %c0 = arith.constant 0 : index
    %c0_0 = arith.constant 0 : index
    %0 = vector.load %arg1[%c0, %c0_0] : memref<32x32xf32, #tpu.memory_space<vmem>>, vector<32x32xf32>
    %c0_1 = arith.constant 0 : index
    %c0_2 = arith.constant 0 : index
    %1 = vector.load %arg2[%c0_1, %c0_2] : memref<32x32xf32, #tpu.memory_space<vmem>>, vector<32x32xf32>
    %c0_3 = arith.constant 0 : index
    %c0_4 = arith.constant 0 : index
    %2 = vector.load %arg3[%c0_3, %c0_4] : memref<32x32xf32, #tpu.memory_space<vmem>>, vector<32x32xf32>
    %c0_5 = arith.constant 0 : index
    %c0_6 = arith.constant 0 : index
    %3 = vector.load %arg11[%c0_5, %c0_6] : memref<1x32xf32, #tpu.memory_space<vmem>>, vector<1x32xf32>
    %4 = vector.shape_cast %3 : vector<1x32xf32> to vector<1x32xf32>
    %5 = vector.broadcast %4 : vector<1x32xf32> to vector<32x32xf32>
    %c0_7 = arith.constant 0 : index
    %c0_8 = arith.constant 0 : index
    %c0_9 = arith.constant 0 : index
    %6 = vector.load %arg4[%c0_7, %c0_8, %c0_9] : memref<2x32x32xf32, #tpu.memory_space<vmem>>, vector<1x32x32xf32>
    %7 = vector.shape_cast %6 : vector<1x32x32xf32> to vector<32x32xf32>
    %cst = arith.constant dense<0.000000e+00> : vector<32x32xf32>
    %8 = tpu.matmul %0, %7, %cst {dimension_numbers = #tpu.dot_dimension_numbers<[1], [0], [0], [1], [0, 0, 1, 1], [], []>} : vector<32x32xf32>, vector<32x32xf32>, vector<32x32xf32> -> vector<32x32xf32>
    %c0_10 = arith.constant 0 : index
    %c0_11 = arith.constant 0 : index
    %9 = vector.load %arg5[%c0_10, %c0_11] : memref<2x32xf32, #tpu.memory_space<vmem>>, vector<1x32xf32>
    %10 = vector.shape_cast %9 : vector<1x32xf32> to vector<32xf32>
    %11 = vector.shape_cast %10 : vector<32xf32> to vector<1x32xf32>
    %12 = vector.broadcast %11 : vector<1x32xf32> to vector<32x32xf32>
    %13 = arith.addf %8, %12 : vector<32x32xf32>
    %c0_12 = arith.constant 0 : index
    %c0_13 = arith.constant 0 : index
    %c0_14 = arith.constant 0 : index
    %14 = vector.load %arg6[%c0_12, %c0_13, %c0_14] : memref<2x32x32xf32, #tpu.memory_space<vmem>>, vector<1x32x32xf32>
    %15 = vector.shape_cast %14 : vector<1x32x32xf32> to vector<32x32xf32>
    %cst_15 = arith.constant dense<0.000000e+00> : vector<32x32xf32>
    %16 = tpu.matmul %1, %15, %cst_15 {dimension_numbers = #tpu.dot_dimension_numbers<[1], [0], [0], [1], [0, 0, 1, 1], [], []>} : vector<32x32xf32>, vector<32x32xf32>, vector<32x32xf32> -> vector<32x32xf32>
    %c0_16 = arith.constant 0 : index
    %c0_17 = arith.constant 0 : index
    %17 = vector.load %arg7[%c0_16, %c0_17] : memref<2x32xf32, #tpu.memory_space<vmem>>, vector<1x32xf32>
    %18 = vector.shape_cast %17 : vector<1x32xf32> to vector<32xf32>
    %19 = vector.shape_cast %18 : vector<32xf32> to vector<1x32xf32>
    %20 = vector.broadcast %19 : vector<1x32xf32> to vector<32x32xf32>
    %21 = arith.addf %16, %20 : vector<32x32xf32>
    %c0_18 = arith.constant 0 : index
    %c0_19 = arith.constant 0 : index
    %c0_20 = arith.constant 0 : index
    %22 = vector.load %arg8[%c0_18, %c0_19, %c0_20] : memref<2x32x32xf32, #tpu.memory_space<vmem>>, vector<1x32x32xf32>
    %23 = vector.shape_cast %22 : vector<1x32x32xf32> to vector<32x32xf32>
    %cst_21 = arith.constant dense<0.000000e+00> : vector<32x32xf32>
    %24 = tpu.matmul %2, %23, %cst_21 {dimension_numbers = #tpu.dot_dimension_numbers<[1], [0], [0], [1], [0, 0, 1, 1], [], []>} : vector<32x32xf32>, vector<32x32xf32>, vector<32x32xf32> -> vector<32x32xf32>
    %c0_22 = arith.constant 0 : index
    %c0_23 = arith.constant 0 : index
    %25 = vector.load %arg9[%c0_22, %c0_23] : memref<2x32xf32, #tpu.memory_space<vmem>>, vector<1x32xf32>
    %26 = vector.shape_cast %25 : vector<1x32xf32> to vector<32xf32>
    %27 = vector.shape_cast %26 : vector<32xf32> to vector<1x32xf32>
    %28 = vector.broadcast %27 : vector<1x32xf32> to vector<32x32xf32>
    %29 = arith.addf %24, %28 : vector<32x32xf32>
    %30 = vector.shape_cast %13 : vector<32x32xf32> to vector<8x4x32xf32>
    %31 = vector.shape_cast %21 : vector<32x32xf32> to vector<8x4x32xf32>
    %32 = vector.shape_cast %29 : vector<32x32xf32> to vector<8x4x32xf32>
    "tpu.trace_start"() <{level = 10 : i32, message = "tbe,tce->tbc"}> : () -> ()
    %cst_24 = arith.constant dense<0.000000e+00> : vector<8x4x4xf32>
    %33 = tpu.matmul %30, %31, %cst_24 {dimension_numbers = #tpu.dot_dimension_numbers<[2], [2], [1], [1], [0, 0, 0, 1, 1, 1], [0], [0]>} : vector<8x4x32xf32>, vector<8x4x32xf32>, vector<8x4x4xf32> -> vector<8x4x4xf32>
    "tpu.trace_stop"() : () -> ()
    %cst_25 = arith.constant dense<0xFF800000> : vector<8x4xf32>
    %34 = vector.multi_reduction <maximumf>, %33, %cst_25 [2] : vector<8x4x4xf32> to vector<8x4xf32>
    %35 = vector.shape_cast %34 : vector<8x4xf32> to vector<8x4x1xf32>
    %36 = vector.broadcast %35 : vector<8x4x1xf32> to vector<8x4x4xf32>
    %37 = arith.subf %33, %36 : vector<8x4x4xf32>
    %38 = math.exp %37 : vector<8x4x4xf32>
    %cst_26 = arith.constant dense<0.000000e+00> : vector<8x4xf32>
    %39 = vector.multi_reduction <add>, %38, %cst_26 [2] : vector<8x4x4xf32> to vector<8x4xf32>
    %40 = vector.shape_cast %39 : vector<8x4xf32> to vector<8x4x1xf32>
    %41 = tpu.reciprocal %40 {approx = true} : vector<8x4x1xf32> -> vector<8x4x1xf32>
    %42 = vector.broadcast %41 : vector<8x4x1xf32> to vector<8x4x4xf32>
    %43 = arith.mulf %38, %42 : vector<8x4x4xf32>
    "tpu.trace_start"() <{level = 10 : i32, message = "tbc,tce->tbe"}> : () -> ()
    %cst_27 = arith.constant dense<0.000000e+00> : vector<8x4x32xf32>
    %44 = tpu.matmul %43, %32, %cst_27 {dimension_numbers = #tpu.dot_dimension_numbers<[2], [1], [1], [2], [0, 0, 0, 1, 1, 2], [0], [0]>} : vector<8x4x4xf32>, vector<8x4x32xf32>, vector<8x4x32xf32> -> vector<8x4x32xf32>
    "tpu.trace_stop"() : () -> ()
    %45 = vector.shape_cast %44 : vector<8x4x32xf32> to vector<32x32xf32>
    %c0_28 = arith.constant 0 : index
    %c0_29 = arith.constant 0 : index
    %c0_30 = arith.constant 0 : index
    %46 = vector.load %arg10[%c0_28, %c0_29, %c0_30] : memref<2x32x32xf32, #tpu.memory_space<vmem>>, vector<1x32x32xf32>
    %47 = vector.shape_cast %46 : vector<1x32x32xf32> to vector<32x32xf32>
    %cst_31 = arith.constant dense<0.000000e+00> : vector<32x32xf32>
    %48 = tpu.matmul %45, %47, %cst_31 {dimension_numbers = #tpu.dot_dimension_numbers<[1], [0], [0], [1], [0, 0, 1, 1], [], []>} : vector<32x32xf32>, vector<32x32xf32>, vector<32x32xf32> -> vector<32x32xf32>
    %49 = arith.addf %5, %48 : vector<32x32xf32>
    %c1 = arith.constant 1 : index
    %c0_32 = arith.constant 0 : index
    %c0_33 = arith.constant 0 : index
    %50 = vector.load %arg4[%c1, %c0_32, %c0_33] : memref<2x32x32xf32, #tpu.memory_space<vmem>>, vector<1x32x32xf32>
    %51 = vector.shape_cast %50 : vector<1x32x32xf32> to vector<32x32xf32>
    %cst_34 = arith.constant dense<0.000000e+00> : vector<32x32xf32>
    %52 = tpu.matmul %0, %51, %cst_34 {dimension_numbers = #tpu.dot_dimension_numbers<[1], [0], [0], [1], [0, 0, 1, 1], [], []>} : vector<32x32xf32>, vector<32x32xf32>, vector<32x32xf32> -> vector<32x32xf32>
    %c1_35 = arith.constant 1 : index
    %c0_36 = arith.constant 0 : index
    %53 = vector.load %arg5[%c1_35, %c0_36] : memref<2x32xf32, #tpu.memory_space<vmem>>, vector<1x32xf32>
    %54 = vector.shape_cast %53 : vector<1x32xf32> to vector<32xf32>
    %55 = vector.shape_cast %54 : vector<32xf32> to vector<1x32xf32>
    %56 = vector.broadcast %55 : vector<1x32xf32> to vector<32x32xf32>
    %57 = arith.addf %52, %56 : vector<32x32xf32>
    %c1_37 = arith.constant 1 : index
    %c0_38 = arith.constant 0 : index
    %c0_39 = arith.constant 0 : index
    %58 = vector.load %arg6[%c1_37, %c0_38, %c0_39] : memref<2x32x32xf32, #tpu.memory_space<vmem>>, vector<1x32x32xf32>
    %59 = vector.shape_cast %58 : vector<1x32x32xf32> to vector<32x32xf32>
    %cst_40 = arith.constant dense<0.000000e+00> : vector<32x32xf32>
    %60 = tpu.matmul %1, %59, %cst_40 {dimension_numbers = #tpu.dot_dimension_numbers<[1], [0], [0], [1], [0, 0, 1, 1], [], []>} : vector<32x32xf32>, vector<32x32xf32>, vector<32x32xf32> -> vector<32x32xf32>
    %c1_41 = arith.constant 1 : index
    %c0_42 = arith.constant 0 : index
    %61 = vector.load %arg7[%c1_41, %c0_42] : memref<2x32xf32, #tpu.memory_space<vmem>>, vector<1x32xf32>
    %62 = vector.shape_cast %61 : vector<1x32xf32> to vector<32xf32>
    %63 = vector.shape_cast %62 : vector<32xf32> to vector<1x32xf32>
    %64 = vector.broadcast %63 : vector<1x32xf32> to vector<32x32xf32>
    %65 = arith.addf %60, %64 : vector<32x32xf32>
    %c1_43 = arith.constant 1 : index
    %c0_44 = arith.constant 0 : index
    %c0_45 = arith.constant 0 : index
    %66 = vector.load %arg8[%c1_43, %c0_44, %c0_45] : memref<2x32x32xf32, #tpu.memory_space<vmem>>, vector<1x32x32xf32>
    %67 = vector.shape_cast %66 : vector<1x32x32xf32> to vector<32x32xf32>
    %cst_46 = arith.constant dense<0.000000e+00> : vector<32x32xf32>
    %68 = tpu.matmul %2, %67, %cst_46 {dimension_numbers = #tpu.dot_dimension_numbers<[1], [0], [0], [1], [0, 0, 1, 1], [], []>} : vector<32x32xf32>, vector<32x32xf32>, vector<32x32xf32> -> vector<32x32xf32>
    %c1_47 = arith.constant 1 : index
    %c0_48 = arith.constant 0 : index
    %69 = vector.load %arg9[%c1_47, %c0_48] : memref<2x32xf32, #tpu.memory_space<vmem>>, vector<1x32xf32>
    %70 = vector.shape_cast %69 : vector<1x32xf32> to vector<32xf32>
    %71 = vector.shape_cast %70 : vector<32xf32> to vector<1x32xf32>
    %72 = vector.broadcast %71 : vector<1x32xf32> to vector<32x32xf32>
    %73 = arith.addf %68, %72 : vector<32x32xf32>
    %74 = vector.shape_cast %57 : vector<32x32xf32> to vector<8x4x32xf32>
    %75 = vector.shape_cast %65 : vector<32x32xf32> to vector<8x4x32xf32>
    %76 = vector.shape_cast %73 : vector<32x32xf32> to vector<8x4x32xf32>
    "tpu.trace_start"() <{level = 10 : i32, message = "tbe,tce->tbc"}> : () -> ()
    %cst_49 = arith.constant dense<0.000000e+00> : vector<8x4x4xf32>
    %77 = tpu.matmul %74, %75, %cst_49 {dimension_numbers = #tpu.dot_dimension_numbers<[2], [2], [1], [1], [0, 0, 0, 1, 1, 1], [0], [0]>} : vector<8x4x32xf32>, vector<8x4x32xf32>, vector<8x4x4xf32> -> vector<8x4x4xf32>
    "tpu.trace_stop"() : () -> ()
    %cst_50 = arith.constant dense<0xFF800000> : vector<8x4xf32>
    %78 = vector.multi_reduction <maximumf>, %77, %cst_50 [2] : vector<8x4x4xf32> to vector<8x4xf32>
    %79 = vector.shape_cast %78 : vector<8x4xf32> to vector<8x4x1xf32>
    %80 = vector.broadcast %79 : vector<8x4x1xf32> to vector<8x4x4xf32>
    %81 = arith.subf %77, %80 : vector<8x4x4xf32>
    %82 = math.exp %81 : vector<8x4x4xf32>
    %cst_51 = arith.constant dense<0.000000e+00> : vector<8x4xf32>
    %83 = vector.multi_reduction <add>, %82, %cst_51 [2] : vector<8x4x4xf32> to vector<8x4xf32>
    %84 = vector.shape_cast %83 : vector<8x4xf32> to vector<8x4x1xf32>
    %85 = tpu.reciprocal %84 {approx = true} : vector<8x4x1xf32> -> vector<8x4x1xf32>
    %86 = vector.broadcast %85 : vector<8x4x1xf32> to vector<8x4x4xf32>
    %87 = arith.mulf %82, %86 : vector<8x4x4xf32>
    "tpu.trace_start"() <{level = 10 : i32, message = "tbc,tce->tbe"}> : () -> ()
    %cst_52 = arith.constant dense<0.000000e+00> : vector<8x4x32xf32>
    %88 = tpu.matmul %87, %76, %cst_52 {dimension_numbers = #tpu.dot_dimension_numbers<[2], [1], [1], [2], [0, 0, 0, 1, 1, 2], [0], [0]>} : vector<8x4x4xf32>, vector<8x4x32xf32>, vector<8x4x32xf32> -> vector<8x4x32xf32>
    "tpu.trace_stop"() : () -> ()
    %89 = vector.shape_cast %88 : vector<8x4x32xf32> to vector<32x32xf32>
    %c1_53 = arith.constant 1 : index
    %c0_54 = arith.constant 0 : index
    %c0_55 = arith.constant 0 : index
    %90 = vector.load %arg10[%c1_53, %c0_54, %c0_55] : memref<2x32x32xf32, #tpu.memory_space<vmem>>, vector<1x32x32xf32>
    %91 = vector.shape_cast %90 : vector<1x32x32xf32> to vector<32x32xf32>
    %cst_56 = arith.constant dense<0.000000e+00> : vector<32x32xf32>
    %92 = tpu.matmul %89, %91, %cst_56 {dimension_numbers = #tpu.dot_dimension_numbers<[1], [0], [0], [1], [0, 0, 1, 1], [], []>} : vector<32x32xf32>, vector<32x32xf32>, vector<32x32xf32> -> vector<32x32xf32>
    %93 = arith.addf %49, %92 : vector<32x32xf32>
    %c0_57 = arith.constant 0 : index
    %c0_58 = arith.constant 0 : index
    %94 = vector.load %arg12[%c0_57, %c0_58] : memref<32x32xf32, #tpu.memory_space<vmem>>, vector<32x32xf32>
    tpu.vector_store %arg12[%c0_57, %c0_58], %93 {strides = array<i32>} : memref<32x32xf32, #tpu.memory_space<vmem>>, vector<32x32xf32>,
    return
  }
  func.func @transform_0(%arg0: i32) -> (i32, i32) {
    %c0_i32 = arith.constant 0 : i32
    %c0_i32_0 = arith.constant 0 : i32
    return %arg0, %c0_i32 : i32, i32
  }
  func.func @transform_1(%arg0: i32) -> (i32, i32) {
    %c0_i32 = arith.constant 0 : i32
    %c0_i32_0 = arith.constant 0 : i32
    return %arg0, %c0_i32 : i32, i32
  }
  func.func @transform_2(%arg0: i32) -> (i32, i32) {
    %c0_i32 = arith.constant 0 : i32
    %c0_i32_0 = arith.constant 0 : i32
    return %arg0, %c0_i32 : i32, i32
  }
  func.func @transform_3(%arg0: i32) -> (i32, i32, i32) {
    %c0_i32 = arith.constant 0 : i32
    %c0_i32_0 = arith.constant 0 : i32
    %c0_i32_1 = arith.constant 0 : i32
    %c0_i32_2 = arith.constant 0 : i32
    return %c0_i32, %c0_i32_0, %c0_i32_1 : i32, i32, i32
  }
  func.func @transform_4(%arg0: i32) -> (i32, i32) {
    %c0_i32 = arith.constant 0 : i32
    %c0_i32_0 = arith.constant 0 : i32
    %c0_i32_1 = arith.constant 0 : i32
    return %c0_i32, %c0_i32_0 : i32, i32
  }
  func.func @transform_5(%arg0: i32) -> (i32, i32, i32) {
    %c0_i32 = arith.constant 0 : i32
    %c0_i32_0 = arith.constant 0 : i32
    %c0_i32_1 = arith.constant 0 : i32
    %c0_i32_2 = arith.constant 0 : i32
    return %c0_i32, %c0_i32_0, %c0_i32_1 : i32, i32, i32
  }
  func.func @transform_6(%arg0: i32) -> (i32, i32) {
    %c0_i32 = arith.constant 0 : i32
    %c0_i32_0 = arith.constant 0 : i32
    %c0_i32_1 = arith.constant 0 : i32
    return %c0_i32, %c0_i32_0 : i32, i32
  }
  func.func @transform_7(%arg0: i32) -> (i32, i32, i32) {
    %c0_i32 = arith.constant 0 : i32
    %c0_i32_0 = arith.constant 0 : i32
    %c0_i32_1 = arith.constant 0 : i32
    %c0_i32_2 = arith.constant 0 : i32
    return %c0_i32, %c0_i32_0, %c0_i32_1 : i32, i32, i32
  }
  func.func @transform_8(%arg0: i32) -> (i32, i32) {
    %c0_i32 = arith.constant 0 : i32
    %c0_i32_0 = arith.constant 0 : i32
    %c0_i32_1 = arith.constant 0 : i32
    return %c0_i32, %c0_i32_0 : i32, i32
  }
  func.func @transform_9(%arg0: i32) -> (i32, i32, i32) {
    %c0_i32 = arith.constant 0 : i32
    %c0_i32_0 = arith.constant 0 : i32
    %c0_i32_1 = arith.constant 0 : i32
    %c0_i32_2 = arith.constant 0 : i32
    return %c0_i32, %c0_i32_0, %c0_i32_1 : i32, i32, i32
  }
  func.func @transform_10(%arg0: i32) -> (i32, i32) {
    %c0_i32 = arith.constant 0 : i32
    %c0_i32_0 = arith.constant 0 : i32
    %c0_i32_1 = arith.constant 0 : i32
    return %c0_i32, %c0_i32_0 : i32, i32
  }
  func.func @transform_11(%arg0: i32) -> (i32, i32) {
    %c0_i32 = arith.constant 0 : i32
    %c0_i32_0 = arith.constant 0 : i32
    return %arg0, %c0_i32 : i32, i32
  }
}

</mosaic_0001>

<llo_original>
// kernel: tpu_custom_call.1
$region0: #{tpu_custom_call.1}
  #allocation0 [shape = 'u32[]', space=smem, size = 0x4, offset = 0x4, fixed_abs, tag = 'smem constant byte address 0x4 - core index']
  #allocation1 [shape = 'u32[144,128]{1,0:T(1,128)}', space=vmem, size = 0x12000, scoped, tag = 'internal scratch']
  %s0 = inlined_call_operand.hbm [shape: f32[32,32], index: 0, kind: input, shape index: {}]
  %s1 = inlined_call_operand.hbm [shape: f32[32,32], index: 1, kind: input, shape index: {}]
  %s2 = inlined_call_operand.hbm [shape: f32[32,32], index: 2, kind: input, shape index: {}]
  %s3 = inlined_call_operand.hbm [shape: f32[2,32,32], index: 3, kind: input, shape index: {}]
  %s4 = inlined_call_operand.vmem [shape: f32[2,32], index: 4, kind: input, shape index: {}]
  %s5 = inlined_call_operand.hbm [shape: f32[2,32,32], index: 5, kind: input, shape index: {}]
  %s6 = inlined_call_operand.vmem [shape: f32[2,32], index: 6, kind: input, shape index: {}]
  %s7 = inlined_call_operand.hbm [shape: f32[2,32,32], index: 7, kind: input, shape index: {}]
  %s8 = inlined_call_operand.vmem [shape: f32[2,32], index: 8, kind: input, shape index: {}]
  %s9 = inlined_call_operand.hbm [shape: f32[2,32,32], index: 9, kind: input, shape index: {}]
  %s10 = inlined_call_operand.vmem [shape: f32[1,32], index: 10, kind: input, shape index: {}]
  %s11 = inlined_call_operand.hbm [shape: f32[32,32], index: 11, kind: output, shape index: {}]
  %s12 = sld [smem:[#allocation0]]
  $region82: #{tpu_custom_call.1} parent=0
    _
  %s14 = ssub.s32 1, %s12
  %s15 = scalar_select 0, %s14, %s12
  $region1: #{tpu_custom_call.1} parent=0
    #allocation2 [shape = 'u8[16384]{0}', space=vmem, size = 0x4000, scoped, tag = 'input window, operand 0, single buffered']
    #allocation3 [shape = 's32[1]{0}', space=sflag, size = 0x4, scoped, tag = 'scoped memory for tpu_custom_call.1']
    #allocation4 [shape = 's32[1]{0}', space=sflag, size = 0x4, scoped, tag = 'scoped memory for tpu_custom_call.1']
    #allocation5 [shape = 'u8[16384]{0}', space=vmem, size = 0x4000, scoped, tag = 'input window, operand 1, single buffered']
    #allocation6 [shape = 's32[1]{0}', space=sflag, size = 0x4, scoped, tag = 'scoped memory for tpu_custom_call.1']
    #allocation7 [shape = 'u8[16384]{0}', space=vmem, size = 0x4000, scoped, tag = 'input window, operand 2, single buffered']
    #allocation8 [shape = 'u8[32768]{0}', space=vmem, size = 0x8000, scoped, tag = 'input window, operand 3, single buffered']
    #allocation9 [shape = 's32[1]{0}', space=sflag, size = 0x4, scoped, tag = 'scoped memory for tpu_custom_call.1']
    #allocation10 [shape = 'u8[32768]{0}', space=vmem, size = 0x8000, scoped, tag = 'input window, operand 5, single buffered']
    #allocation11 [shape = 'u8[32768]{0}', space=vmem, size = 0x8000, scoped, tag = 'input window, operand 7, single buffered']
    #allocation12 [shape = 's32[1]{0}', space=sflag, size = 0x4, scoped, tag = 'scoped memory for tpu_custom_call.1']
    #allocation13 [shape = 'u8[32768]{0}', space=vmem, size = 0x8000, scoped, tag = 'input window, operand 9, single buffered']
    #allocation14 [shape = 'u8[16384]{0}', space=vmem, size = 0x4000, scoped, tag = 'output window, operand 0, single buffered']
    %16 = vsyncpa [#allocation3], 0
    %17 = vsyncpa [#allocation6], 0
    %18 = vsyncpa [#allocation9], 0
    %19 = vsyncpa [#allocation12], 0
    %20 = vsyncpa [#allocation4], 0
    // Predicated region
    $region2: #{tpu_custom_call.1} parent=1 // pred_check
      _
    $region3: #{tpu_custom_call.1} parent=1 // pred_check_branch
      %22 = sbr.rel (0) target = $region5
    $region4: #{tpu_custom_call.1} parent=1 // pred_region
      %s24 = ssub.s32 512, 512
      %25 = vsyncadd [#allocation3], %s24
      %s26 = sshll.u32 [#allocation2], 4
      %s27 = int_to_ptr.vmem [resolvable:$true] %s26
      %32 = dma.hbm_to_vmem [thread:$0]  %s0, 512, %s27, [#allocation3], 128, 128, 8
    $region5: #{tpu_custom_call.1} parent=1 // pred_fallthru
      _
    // Predicated region
    $region6: #{tpu_custom_call.1} parent=1 // pred_check
      _
    $region7: #{tpu_custom_call.1} parent=1 // pred_check_branch
      %34 = sbr.rel (0) target = $region9
    $region8: #{tpu_custom_call.1} parent=1 // pred_region
      %s36 = ssub.s32 512, 512
      %37 = vsyncadd [#allocation6], %s36
      %s38 = sshll.u32 [#allocation5], 4
      %s39 = int_to_ptr.vmem [resolvable:$true] %s38
      %44 = dma.hbm_to_vmem [thread:$0]  %s1, 512, %s39, [#allocation6], 128, 128, 8
    $region9: #{tpu_custom_call.1} parent=1 // pred_fallthru
      _
    // Predicated region
    $region10: #{tpu_custom_call.1} parent=1 // pred_check
      _
    $region11: #{tpu_custom_call.1} parent=1 // pred_check_branch
      %46 = sbr.rel (0) target = $region13
    $region12: #{tpu_custom_call.1} parent=1 // pred_region
      %s48 = ssub.s32 512, 512
      %49 = vsyncadd [#allocation6], %s48
      %s50 = sshll.u32 [#allocation7], 4
      %s51 = int_to_ptr.vmem [resolvable:$true] %s50
      %56 = dma.hbm_to_vmem [thread:$0]  %s2, 512, %s51, [#allocation6], 128, 128, 8
    $region13: #{tpu_custom_call.1} parent=1 // pred_fallthru
      _
    // Predicated region
    $region14: #{tpu_custom_call.1} parent=1 // pred_check
      _
    $region15: #{tpu_custom_call.1} parent=1 // pred_check_branch
      %58 = sbr.rel (0) target = $region17
    $region16: #{tpu_custom_call.1} parent=1 // pred_region
      %s60 = ssub.s32 1024, 1024
      %61 = vsyncadd [#allocation9], %s60
      %s62 = sshll.u32 [#allocation8], 4
      %s63 = int_to_ptr.vmem [resolvable:$true] %s62
      %68 = dma.hbm_to_vmem [thread:$0]  %s3, 1024, %s63, [#allocation9], 128, 128, 8
    $region17: #{tpu_custom_call.1} parent=1 // pred_fallthru
      _
    // Predicated region
    $region18: #{tpu_custom_call.1} parent=1 // pred_check
      _
    $region19: #{tpu_custom_call.1} parent=1 // pred_check_branch
      %70 = sbr.rel (0) target = $region21
    $region20: #{tpu_custom_call.1} parent=1 // pred_region
      _
    $region21: #{tpu_custom_call.1} parent=1 // pred_fallthru
      _
    // Predicated region
    $region22: #{tpu_custom_call.1} parent=1 // pred_check
      _
    $region23: #{tpu_custom_call.1} parent=1 // pred_check_branch
      %72 = sbr.rel (0) target = $region25
    $region24: #{tpu_custom_call.1} parent=1 // pred_region
      %s74 = ssub.s32 1024, 1024
      %75 = vsyncadd [#allocation9], %s74
      %s76 = sshll.u32 [#allocation10], 4
      %s77 = int_to_ptr.vmem [resolvable:$true] %s76
      %82 = dma.hbm_to_vmem [thread:$0]  %s5, 1024, %s77, [#allocation9], 128, 128, 8
    $region25: #{tpu_custom_call.1} parent=1 // pred_fallthru
      _
    // Predicated region
    $region26: #{tpu_custom_call.1} parent=1 // pred_check
      _
    $region27: #{tpu_custom_call.1} parent=1 // pred_check_branch
      %84 = sbr.rel (0) target = $region29
    $region28: #{tpu_custom_call.1} parent=1 // pred_region
      _
    $region29: #{tpu_custom_call.1} parent=1 // pred_fallthru
      _
    // Predicated region
    $region30: #{tpu_custom_call.1} parent=1 // pred_check
      _
    $region31: #{tpu_custom_call.1} parent=1 // pred_check_branch
      %86 = sbr.rel (0) target = $region33
    $region32: #{tpu_custom_call.1} parent=1 // pred_region
      %s88 = ssub.s32 1024, 1024
      %89 = vsyncadd [#allocation12], %s88
      %s90 = sshll.u32 [#allocation11], 4
      %s91 = int_to_ptr.vmem [resolvable:$true] %s90
      %96 = dma.hbm_to_vmem [thread:$0]  %s7, 1024, %s91, [#allocation12], 128, 128, 8
    $region33: #{tpu_custom_call.1} parent=1 // pred_fallthru
      _
    // Predicated region
    $region34: #{tpu_custom_call.1} parent=1 // pred_check
      _
    $region35: #{tpu_custom_call.1} parent=1 // pred_check_branch
      %98 = sbr.rel (0) target = $region37
    $region36: #{tpu_custom_call.1} parent=1 // pred_region
      _
    $region37: #{tpu_custom_call.1} parent=1 // pred_fallthru
      _
    // Predicated region
    $region38: #{tpu_custom_call.1} parent=1 // pred_check
      _
    $region39: #{tpu_custom_call.1} parent=1 // pred_check_branch
      %100 = sbr.rel (0) target = $region41
    $region40: #{tpu_custom_call.1} parent=1 // pred_region
      %s102 = ssub.s32 1024, 1024
      %103 = vsyncadd [#allocation12], %s102
      %s104 = sshll.u32 [#allocation13], 4
      %s105 = int_to_ptr.vmem [resolvable:$true] %s104
      %110 = dma.hbm_to_vmem [thread:$0]  %s9, 1024, %s105, [#allocation12], 128, 128, 8
    $region41: #{tpu_custom_call.1} parent=1 // pred_fallthru
      _
    // Predicated region
    $region42: #{tpu_custom_call.1} parent=1 // pred_check
      _
    $region43: #{tpu_custom_call.1} parent=1 // pred_check_branch
      %112 = sbr.rel (0) target = $region45
    $region44: #{tpu_custom_call.1} parent=1 // pred_region
      _
    $region45: #{tpu_custom_call.1} parent=1 // pred_fallthru
      _
    // Predicated region
    $region46: #{tpu_custom_call.1} parent=1 // pred_check
      _
    $region47: #{tpu_custom_call.1} parent=1 // pred_check_branch
      %114 = sbr.rel (0) target = $region49
    $region48: #{tpu_custom_call.1} parent=1 // pred_region
      %115 = dma.done [#allocation3], 512
    $region49: #{tpu_custom_call.1} parent=1 // pred_fallthru
      _
    // Predicated region
    $region50: #{tpu_custom_call.1} parent=1 // pred_check
      _
    $region51: #{tpu_custom_call.1} parent=1 // pred_check_branch
      %117 = sbr.rel (0) target = $region53
    $region52: #{tpu_custom_call.1} parent=1 // pred_region
      %118 = dma.done [#allocation6], 512
    $region53: #{tpu_custom_call.1} parent=1 // pred_fallthru
      _
    // Predicated region
    $region54: #{tpu_custom_call.1} parent=1 // pred_check
      _
    $region55: #{tpu_custom_call.1} parent=1 // pred_check_branch
      %120 = sbr.rel (0) target = $region57
    $region56: #{tpu_custom_call.1} parent=1 // pred_region
      %121 = dma.done [#allocation6], 512
    $region57: #{tpu_custom_call.1} parent=1 // pred_fallthru
      _
    // Predicated region
    $region58: #{tpu_custom_call.1} parent=1 // pred_check
      _
    $region59: #{tpu_custom_call.1} parent=1 // pred_check_branch
      %123 = sbr.rel (0) target = $region61
    $region60: #{tpu_custom_call.1} parent=1 // pred_region
      %124 = dma.done [#allocation9], 1024
    $region61: #{tpu_custom_call.1} parent=1 // pred_fallthru
      _
    // Predicated region
    $region62: #{tpu_custom_call.1} parent=1 // pred_check
      _
    $region63: #{tpu_custom_call.1} parent=1 // pred_check_branch
      %126 = sbr.rel (0) target = $region65
    $region64: #{tpu_custom_call.1} parent=1 // pred_region
      %127 = dma.done [#allocation9], 1024
    $region65: #{tpu_custom_call.1} parent=1 // pred_fallthru
      _
    // Predicated region
    $region66: #{tpu_custom_call.1} parent=1 // pred_check
      _
    $region67: #{tpu_custom_call.1} parent=1 // pred_check_branch
      %129 = sbr.rel (0) target = $region69
    $region68: #{tpu_custom_call.1} parent=1 // pred_region
      %130 = dma.done [#allocation12], 1024
    $region69: #{tpu_custom_call.1} parent=1 // pred_fallthru
      _
    // Predicated region
    $region70: #{tpu_custom_call.1} parent=1 // pred_check
      _
    $region71: #{tpu_custom_call.1} parent=1 // pred_check_branch
      %132 = sbr.rel (0) target = $region73
    $region72: #{tpu_custom_call.1} parent=1 // pred_region
      %133 = dma.done [#allocation12], 1024
    $region73: #{tpu_custom_call.1} parent=1 // pred_fallthru
      _
    %v134 = vld [vmem:[#allocation2] sm:$0xff]
    %v135 = vld [vmem:[#allocation2 + $0x8] sm:$0xff]
    %v136 = vld [vmem:[#allocation2 + $0x10] sm:$0xff]
    %v137 = vld [vmem:[#allocation2 + $0x18] sm:$0xff]
    %v138 = vld [vmem:[#allocation5] sm:$0xff]
    %v139 = vld [vmem:[#allocation5 + $0x8] sm:$0xff]
    %v140 = vld [vmem:[#allocation5 + $0x10] sm:$0xff]
    %v141 = vld [vmem:[#allocation5 + $0x18] sm:$0xff]
    %v142 = vld [vmem:[#allocation7] sm:$0xff]
    %v143 = vld [vmem:[#allocation7 + $0x8] sm:$0xff]
    %v144 = vld [vmem:[#allocation7 + $0x10] sm:$0xff]
    %v145 = vld [vmem:[#allocation7 + $0x18] sm:$0xff]
    %v146 = vld [vmem:[%s10] sm:$0x1]
    %v148 = vlaneseq
    %v149 = vshrl.u32 %v148, 7
    %v150 = vsub.s32 0, %v149
    %v151 = vrot.slane %v146, %v150
    %v153 = vld [vmem:[#allocation8] sm:$0xff]
    %v154 = vld [vmem:[#allocation8 + $0x8] sm:$0xff]
    %v155 = vld [vmem:[#allocation8 + $0x10] sm:$0xff]
    %v156 = vld [vmem:[#allocation8 + $0x18] sm:$0xff]
    %v157 = vld [vmem:[%s4] sm:$0x1]
    %v158 = vlaneseq
    %v159 = vshrl.u32 %v158, 7
    %v160 = vsub.s32 0, %v159
    %v161 = vrot.slane %v157, %v160
    %vm162 = vcmask 261120
    %v164 = vsel %vm162, %v134, 0
    %v167 = vsel %vm162, %v135, 0
    %v170 = vsel %vm162, %v136, 0
    %v173 = vsel %vm162, %v137, 0
    %175 = vmatprep.subr.mxu0 0.0
    %176 = vmatpush1.msra.mxu0 0.0
    %177 = vmatprep.subr.mxu0 0.0
    %178 = vmatpush1.msra.mxu0 0.0
    %179 = vmatprep.subr.mxu0 0.0
    %180 = vmatpush1.msra.mxu0 0.0
    %181 = vmatprep.subr.mxu0 0.0
    %182 = vmatpush1.msra.mxu0 0.0
    %183 = vmatprep.subr.mxu0 0.0
    %184 = vmatpush1.msra.mxu0 0.0
    %185 = vmatprep.subr.mxu0 0.0
    %186 = vmatpush1.msra.mxu0 0.0
    %187 = vmatprep.subr.mxu0 0.0
    %188 = vmatpush1.msra.mxu0 0.0
    %189 = vmatprep.subr.mxu0 0.0
    %190 = vmatpush1.msra.mxu0 0.0
    %191 = vmatprep.subr.mxu0 0.0
    %192 = vmatpush1.msra.mxu0 0.0
    %193 = vmatprep.subr.mxu0 0.0
    %194 = vmatpush1.msra.mxu0 0.0
    %195 = vmatprep.subr.mxu0 0.0
    %196 = vmatpush1.msra.mxu0 0.0
    %197 = vmatprep.subr.mxu0 0.0
    %198 = vmatpush1.msra.mxu0 0.0
    %199 = vmatprep.subr.mxu0 0.0
    %200 = vmatpush1.msra.mxu0 %v156
    %201 = vmatprep.subr.mxu0 0.0
    %202 = vmatpush1.msra.mxu0 %v155
    %203 = vmatprep.subr.mxu0 0.0
    %204 = vmatpush1.msra.mxu0 %v154
    %205 = vmatprep.subr.mxu0 0.0
    %206 = vmatpush1.msra.mxu0 %v153
    %207 = vmatprep.subr.mxu0 0.0
    %208 = vmatpush2.msra.mxu0 0.0
    %209 = vmatprep.subr.mxu0 0.0
    %210 = vmatpush2.msra.mxu0 0.0
    %211 = vmatprep.subr.mxu0 0.0
    %212 = vmatpush2.msra.mxu0 0.0
    %213 = vmatprep.subr.mxu0 0.0
    %214 = vmatpush2.msra.mxu0 0.0
    %215 = vmatprep.subr.mxu0 0.0
    %216 = vmatpush2.msra.mxu0 0.0
    %217 = vmatprep.subr.mxu0 0.0
    %218 = vmatpush2.msra.mxu0 0.0
    %219 = vmatprep.subr.mxu0 0.0
    %220 = vmatpush2.msra.mxu0 0.0
    %221 = vmatprep.subr.mxu0 0.0
    %222 = vmatpush2.msra.mxu0 0.0
    %223 = vmatprep.subr.mxu0 0.0
    %224 = vmatpush2.msra.mxu0 0.0
    %225 = vmatprep.subr.mxu0 0.0
    %226 = vmatpush2.msra.mxu0 0.0
    %227 = vmatprep.subr.mxu0 0.0
    %228 = vmatpush2.msra.mxu0 0.0
    %229 = vmatprep.subr.mxu0 0.0
    %230 = vmatpush2.msra.mxu0 0.0
    %231 = vmatprep.subr.mxu0 0.0
    %232 = vmatpush2.msra.mxu0 0.0
    %233 = vmatprep.subr.mxu0 0.0
    %234 = vmatpush2.msra.mxu0 0.0
    %235 = vmatprep.subr.mxu0 0.0
    %236 = vmatpush2.msra.mxu0 0.0
    %237 = vmatprep.subr.mxu0 0.0
    %238 = vmatpush2.msra.mxu0 0.0
    %239 = vmatprep.mubr.f32.mxu0 0.0
    %240 = vmatmul.mubr.f32.gmra.mxu0 %v164
    %v241 = vpop.f32.mrf.mxu0
    %v242 = vadd.f32 %v161, %v241
    %v243 = vpop.f32.mrf.mxu0
    %244 = vmatprep.mubr.f32.mxu0 0.0
    %245 = vmatmul.mubr.f32.gmra.mxu0 %v167
    %v246 = vpop.f32.mrf.mxu0
    %v247 = vadd.f32 %v161, %v246
    %v248 = vpop.f32.mrf.mxu0
    %249 = vmatprep.mubr.f32.mxu0 0.0
    %250 = vmatmul.mubr.f32.gmra.mxu0 %v170
    %v251 = vpop.f32.mrf.mxu0
    %v252 = vadd.f32 %v161, %v251
    %v253 = vpop.f32.mrf.mxu0
    %254 = vmatprep.mubr.f32.mxu0 0.0
    %255 = vmatmul.mubr.f32.gmra.mxu0 %v173
    %v256 = vpop.f32.mrf.mxu0
    %v257 = vadd.f32 %v161, %v256
    %v258 = vpop.f32.mrf.mxu0
    %259 = vdwg.mxu0
    %v260 = vld [vmem:[#allocation10] sm:$0xff]
    %v261 = vld [vmem:[#allocation10 + $0x8] sm:$0xff]
    %v262 = vld [vmem:[#allocation10 + $0x10] sm:$0xff]
    %v263 = vld [vmem:[#allocation10 + $0x18] sm:$0xff]
    %v264 = vld [vmem:[%s6] sm:$0x1]
    %v265 = vlaneseq
    %v266 = vshrl.u32 %v265, 7
    %v267 = vsub.s32 0, %v266
    %v268 = vrot.slane %v264, %v267
    %v270 = vsel %vm162, %v138, 0
    %v273 = vsel %vm162, %v139, 0
    %v276 = vsel %vm162, %v140, 0
    %v279 = vsel %vm162, %v141, 0
    %281 = vmatprep.subr.mxu0 0.0
    %282 = vmatpush1.msra.mxu0 0.0
    %283 = vmatprep.subr.mxu0 0.0
    %284 = vmatpush1.msra.mxu0 0.0
    %285 = vmatprep.subr.mxu0 0.0
    %286 = vmatpush1.msra.mxu0 0.0
    %287 = vmatprep.subr.mxu0 0.0
    %288 = vmatpush1.msra.mxu0 0.0
    %289 = vmatprep.subr.mxu0 0.0
    %290 = vmatpush1.msra.mxu0 0.0
    %291 = vmatprep.subr.mxu0 0.0
    %292 = vmatpush1.msra.mxu0 0.0
    %293 = vmatprep.subr.mxu0 0.0
    %294 = vmatpush1.msra.mxu0 0.0
    %295 = vmatprep.subr.mxu0 0.0
    %296 = vmatpush1.msra.mxu0 0.0
    %297 = vmatprep.subr.mxu0 0.0
    %298 = vmatpush1.msra.mxu0 0.0
    %299 = vmatprep.subr.mxu0 0.0
    %300 = vmatpush1.msra.mxu0 0.0
    %301 = vmatprep.subr.mxu0 0.0
    %302 = vmatpush1.msra.mxu0 0.0
    %303 = vmatprep.subr.mxu0 0.0
    %304 = vmatpush1.msra.mxu0 0.0
    %305 = vmatprep.subr.mxu0 0.0
    %306 = vmatpush1.msra.mxu0 %v263
    %307 = vmatprep.subr.mxu0 0.0
    %308 = vmatpush1.msra.mxu0 %v262
    %309 = vmatprep.subr.mxu0 0.0
    %310 = vmatpush1.msra.mxu0 %v261
    %311 = vmatprep.subr.mxu0 0.0
    %312 = vmatpush1.msra.mxu0 %v260
    %313 = vmatprep.subr.mxu0 0.0
    %314 = vmatpush2.msra.mxu0 0.0
    %315 = vmatprep.subr.mxu0 0.0
    %316 = vmatpush2.msra.mxu0 0.0
    %317 = vmatprep.subr.mxu0 0.0
    %318 = vmatpush2.msra.mxu0 0.0
    %319 = vmatprep.subr.mxu0 0.0
    %320 = vmatpush2.msra.mxu0 0.0
    %321 = vmatprep.subr.mxu0 0.0
    %322 = vmatpush2.msra.mxu0 0.0
    %323 = vmatprep.subr.mxu0 0.0
    %324 = vmatpush2.msra.mxu0 0.0
    %325 = vmatprep.subr.mxu0 0.0
    %326 = vmatpush2.msra.mxu0 0.0
    %327 = vmatprep.subr.mxu0 0.0
    %328 = vmatpush2.msra.mxu0 0.0
    %329 = vmatprep.subr.mxu0 0.0
    %330 = vmatpush2.msra.mxu0 0.0
    %331 = vmatprep.subr.mxu0 0.0
    %332 = vmatpush2.msra.mxu0 0.0
    %333 = vmatprep.subr.mxu0 0.0
    %334 = vmatpush2.msra.mxu0 0.0
    %335 = vmatprep.subr.mxu0 0.0
    %336 = vmatpush2.msra.mxu0 0.0
    %337 = vmatprep.subr.mxu0 0.0
    %338 = vmatpush2.msra.mxu0 0.0
    %339 = vmatprep.subr.mxu0 0.0
    %340 = vmatpush2.msra.mxu0 0.0
    %341 = vmatprep.subr.mxu0 0.0
    %342 = vmatpush2.msra.mxu0 0.0
    %343 = vmatprep.subr.mxu0 0.0
    %344 = vmatpush2.msra.mxu0 0.0
    %345 = vmatprep.mubr.f32.mxu0 0.0
    %346 = vmatmul.mubr.f32.gmra.mxu0 %v270
    %v347 = vpop.f32.mrf.mxu0
    %v348 = vadd.f32 %v268, %v347
    %v349 = vpop.f32.mrf.mxu0
    %350 = vmatprep.mubr.f32.mxu0 0.0
    %351 = vmatmul.mubr.f32.gmra.mxu0 %v273
    %v352 = vpop.f32.mrf.mxu0
    %v353 = vadd.f32 %v268, %v352
    %v354 = vpop.f32.mrf.mxu0
    %355 = vmatprep.mubr.f32.mxu0 0.0
    %356 = vmatmul.mubr.f32.gmra.mxu0 %v276
    %v357 = vpop.f32.mrf.mxu0
    %v358 = vadd.f32 %v268, %v357
    %v359 = vpop.f32.mrf.mxu0
    %360 = vmatprep.mubr.f32.mxu0 0.0
    %361 = vmatmul.mubr.f32.gmra.mxu0 %v279
    %v362 = vpop.f32.mrf.mxu0
    %v363 = vadd.f32 %v268, %v362
    %v364 = vpop.f32.mrf.mxu0
    %365 = vdwg.mxu0
    %v366 = vld [vmem:[#allocation11] sm:$0xff]
    %v367 = vld [vmem:[#allocation11 + $0x8] sm:$0xff]
    %v368 = vld [vmem:[#allocation11 + $0x10] sm:$0xff]
    %v369 = vld [vmem:[#allocation11 + $0x18] sm:$0xff]
    %v370 = vld [vmem:[%s8] sm:$0x1]
    %v371 = vlaneseq
    %v372 = vshrl.u32 %v371, 7
    %v373 = vsub.s32 0, %v372
    %v374 = vrot.slane %v370, %v373
    %v376 = vsel %vm162, %v142, 0
    %v379 = vsel %vm162, %v143, 0
    %v382 = vsel %vm162, %v144, 0
    %v385 = vsel %vm162, %v145, 0
    %387 = vmatprep.subr.mxu0 0.0
    %388 = vmatpush1.msra.mxu0 0.0
    %389 = vmatprep.subr.mxu0 0.0
    %390 = vmatpush1.msra.mxu0 0.0
    %391 = vmatprep.subr.mxu0 0.0
    %392 = vmatpush1.msra.mxu0 0.0
    %393 = vmatprep.subr.mxu0 0.0
    %394 = vmatpush1.msra.mxu0 0.0
    %395 = vmatprep.subr.mxu0 0.0
    %396 = vmatpush1.msra.mxu0 0.0
    %397 = vmatprep.subr.mxu0 0.0
    %398 = vmatpush1.msra.mxu0 0.0
    %399 = vmatprep.subr.mxu0 0.0
    %400 = vmatpush1.msra.mxu0 0.0
    %401 = vmatprep.subr.mxu0 0.0
    %402 = vmatpush1.msra.mxu0 0.0
    %403 = vmatprep.subr.mxu0 0.0
    %404 = vmatpush1.msra.mxu0 0.0
    %405 = vmatprep.subr.mxu0 0.0
    %406 = vmatpush1.msra.mxu0 0.0
    %407 = vmatprep.subr.mxu0 0.0
    %408 = vmatpush1.msra.mxu0 0.0
    %409 = vmatprep.subr.mxu0 0.0
    %410 = vmatpush1.msra.mxu0 0.0
    %411 = vmatprep.subr.mxu0 0.0
    %412 = vmatpush1.msra.mxu0 %v369
    %413 = vmatprep.subr.mxu0 0.0
    %414 = vmatpush1.msra.mxu0 %v368
    %415 = vmatprep.subr.mxu0 0.0
    %416 = vmatpush1.msra.mxu0 %v367
    %417 = vmatprep.subr.mxu0 0.0
    %418 = vmatpush1.msra.mxu0 %v366
    %419 = vmatprep.subr.mxu0 0.0
    %420 = vmatpush2.msra.mxu0 0.0
    %421 = vmatprep.subr.mxu0 0.0
    %422 = vmatpush2.msra.mxu0 0.0
    %423 = vmatprep.subr.mxu0 0.0
    %424 = vmatpush2.msra.mxu0 0.0
    %425 = vmatprep.subr.mxu0 0.0
    %426 = vmatpush2.msra.mxu0 0.0
    %427 = vmatprep.subr.mxu0 0.0
    %428 = vmatpush2.msra.mxu0 0.0
    %429 = vmatprep.subr.mxu0 0.0
    %430 = vmatpush2.msra.mxu0 0.0
    %431 = vmatprep.subr.mxu0 0.0
    %432 = vmatpush2.msra.mxu0 0.0
    %433 = vmatprep.subr.mxu0 0.0
    %434 = vmatpush2.msra.mxu0 0.0
    %435 = vmatprep.subr.mxu0 0.0
    %436 = vmatpush2.msra.mxu0 0.0
    %437 = vmatprep.subr.mxu0 0.0
    %438 = vmatpush2.msra.mxu0 0.0
    %439 = vmatprep.subr.mxu0 0.0
    %440 = vmatpush2.msra.mxu0 0.0
    %441 = vmatprep.subr.mxu0 0.0
    %442 = vmatpush2.msra.mxu0 0.0
    %443 = vmatprep.subr.mxu0 0.0
    %444 = vmatpush2.msra.mxu0 0.0
    %445 = vmatprep.subr.mxu0 0.0
    %446 = vmatpush2.msra.mxu0 0.0
    %447 = vmatprep.subr.mxu0 0.0
    %448 = vmatpush2.msra.mxu0 0.0
    %449 = vmatprep.subr.mxu0 0.0
    %450 = vmatpush2.msra.mxu0 0.0
    %451 = vmatprep.mubr.f32.mxu0 0.0
    %452 = vmatmul.mubr.f32.gmra.mxu0 %v376
    %v453 = vpop.f32.mrf.mxu0
    %v454 = vadd.f32 %v374, %v453
    %v455 = vpop.f32.mrf.mxu0
    %456 = vmatprep.mubr.f32.mxu0 0.0
    %457 = vmatmul.mubr.f32.gmra.mxu0 %v379
    %v458 = vpop.f32.mrf.mxu0
    %v459 = vadd.f32 %v374, %v458
    %v460 = vpop.f32.mrf.mxu0
    %461 = vmatprep.mubr.f32.mxu0 0.0
    %462 = vmatmul.mubr.f32.gmra.mxu0 %v382
    %v463 = vpop.f32.mrf.mxu0
    %v464 = vadd.f32 %v374, %v463
    %v465 = vpop.f32.mrf.mxu0
    %466 = vmatprep.mubr.f32.mxu0 0.0
    %467 = vmatmul.mubr.f32.gmra.mxu0 %v385
    %v468 = vpop.f32.mrf.mxu0
    %v469 = vadd.f32 %v374, %v468
    %v470 = vpop.f32.mrf.mxu0
    %471 = vdwg.mxu0
    %v476 = vcombine.high %v242, %v242
    %v477 = vcombine.high %v247, %v247
    %v478 = vcombine.high %v252, %v252
    %v479 = vcombine.high %v257, %v257
    %v484 = vcombine.high %v348, %v348
    %v485 = vcombine.high %v353, %v353
    %v486 = vcombine.high %v358, %v358
    %v487 = vcombine.high %v363, %v363
    %v492 = vcombine.high %v454, %v454
    %v493 = vcombine.high %v459, %v459
    %v494 = vcombine.high %v464, %v464
    %v495 = vcombine.high %v469, %v469
    %v496 = vsel %vm162, %v242, 0
    %v498 = vsel %vm162, %v348, 0
    %500 = vmatprep.subr.mxu0 0.0
    %501 = vmatpush1.xpose.msra.mxu0 0.0
    %502 = vmatprep.subr.mxu0 0.0
    %503 = vmatpush1.xpose.msra.mxu0 0.0
    %504 = vmatprep.subr.mxu0 0.0
    %505 = vmatpush1.xpose.msra.mxu0 0.0
    %506 = vmatprep.subr.mxu0 0.0
    %507 = vmatpush1.xpose.msra.mxu0 0.0
    %508 = vmatprep.subr.mxu0 0.0
    %509 = vmatpush1.xpose.msra.mxu0 0.0
    %510 = vmatprep.subr.mxu0 0.0
    %511 = vmatpush1.xpose.msra.mxu0 0.0
    %512 = vmatprep.subr.mxu0 0.0
    %513 = vmatpush1.xpose.msra.mxu0 0.0
    %514 = vmatprep.subr.mxu0 0.0
    %515 = vmatpush1.xpose.msra.mxu0 0.0
    %516 = vmatprep.subr.mxu0 0.0
    %517 = vmatpush1.xpose.msra.mxu0 0.0
    %518 = vmatprep.subr.mxu0 0.0
    %519 = vmatpush1.xpose.msra.mxu0 0.0
    %520 = vmatprep.subr.mxu0 0.0
    %521 = vmatpush1.xpose.msra.mxu0 0.0
    %522 = vmatprep.subr.mxu0 0.0
    %523 = vmatpush1.xpose.msra.mxu0 0.0
    %524 = vmatprep.subr.mxu0 0.0
    %525 = vmatpush1.xpose.msra.mxu0 0.0
    %526 = vmatprep.subr.mxu0 0.0
    %527 = vmatpush1.xpose.msra.mxu0 0.0
    %528 = vmatprep.subr.mxu0 0.0
    %529 = vmatpush1.xpose.msra.mxu0 0.0
    %530 = vmatprep.subr.mxu0 0.0
    %531 = vmatpush1.xpose.msra.mxu0 %v498
    %532 = vmatprep.subr.mxu0 0.0
    %533 = vmatpush2.xpose.msra.mxu0 0.0
    %534 = vmatprep.subr.mxu0 0.0
    %535 = vmatpush2.xpose.msra.mxu0 0.0
    %536 = vmatprep.subr.mxu0 0.0
    %537 = vmatpush2.xpose.msra.mxu0 0.0
    %538 = vmatprep.subr.mxu0 0.0
    %539 = vmatpush2.xpose.msra.mxu0 0.0
    %540 = vmatprep.subr.mxu0 0.0
    %541 = vmatpush2.xpose.msra.mxu0 0.0
    %542 = vmatprep.subr.mxu0 0.0
    %543 = vmatpush2.xpose.msra.mxu0 0.0
    %544 = vmatprep.subr.mxu0 0.0
    %545 = vmatpush2.xpose.msra.mxu0 0.0
    %546 = vmatprep.subr.mxu0 0.0
    %547 = vmatpush2.xpose.msra.mxu0 0.0
    %548 = vmatprep.subr.mxu0 0.0
    %549 = vmatpush2.xpose.msra.mxu0 0.0
    %550 = vmatprep.subr.mxu0 0.0
    %551 = vmatpush2.xpose.msra.mxu0 0.0
    %552 = vmatprep.subr.mxu0 0.0
    %553 = vmatpush2.xpose.msra.mxu0 0.0
    %554 = vmatprep.subr.mxu0 0.0
    %555 = vmatpush2.xpose.msra.mxu0 0.0
    %556 = vmatprep.subr.mxu0 0.0
    %557 = vmatpush2.xpose.msra.mxu0 0.0
    %558 = vmatprep.subr.mxu0 0.0
    %559 = vmatpush2.xpose.msra.mxu0 0.0
    %560 = vmatprep.subr.mxu0 0.0
    %561 = vmatpush2.xpose.msra.mxu0 0.0
    %562 = vmatprep.subr.mxu0 0.0
    %563 = vmatpush2.xpose.msra.mxu0 0.0
    %564 = vmatprep.mubr.f32.mxu0 0.0
    %565 = vmatmul.mubr.f32.gmra.mxu0 %v496
    %v566 = vpop.f32.mrf.mxu0
    %v567 = vadd.f32 0.0, %v566
    %v568 = vpop.f32.mrf.mxu0
    %569 = vdwg.mxu0
    %v570 = vsel %vm162, %v476, 0
    %v572 = vsel %vm162, %v484, 0
    %574 = vmatprep.subr.mxu0 0.0
    %575 = vmatpush1.xpose.msra.mxu0 0.0
    %576 = vmatprep.subr.mxu0 0.0
    %577 = vmatpush1.xpose.msra.mxu0 0.0
    %578 = vmatprep.subr.mxu0 0.0
    %579 = vmatpush1.xpose.msra.mxu0 0.0
    %580 = vmatprep.subr.mxu0 0.0
    %581 = vmatpush1.xpose.msra.mxu0 0.0
    %582 = vmatprep.subr.mxu0 0.0
    %583 = vmatpush1.xpose.msra.mxu0 0.0
    %584 = vmatprep.subr.mxu0 0.0
    %585 = vmatpush1.xpose.msra.mxu0 0.0
    %586 = vmatprep.subr.mxu0 0.0
    %587 = vmatpush1.xpose.msra.mxu0 0.0
    %588 = vmatprep.subr.mxu0 0.0
    %589 = vmatpush1.xpose.msra.mxu0 0.0
    %590 = vmatprep.subr.mxu0 0.0
    %591 = vmatpush1.xpose.msra.mxu0 0.0
    %592 = vmatprep.subr.mxu0 0.0
    %593 = vmatpush1.xpose.msra.mxu0 0.0
    %594 = vmatprep.subr.mxu0 0.0
    %595 = vmatpush1.xpose.msra.mxu0 0.0
    %596 = vmatprep.subr.mxu0 0.0
    %597 = vmatpush1.xpose.msra.mxu0 0.0
    %598 = vmatprep.subr.mxu0 0.0
    %599 = vmatpush1.xpose.msra.mxu0 0.0
    %600 = vmatprep.subr.mxu0 0.0
    %601 = vmatpush1.xpose.msra.mxu0 0.0
    %602 = vmatprep.subr.mxu0 0.0
    %603 = vmatpush1.xpose.msra.mxu0 0.0
    %604 = vmatprep.subr.mxu0 0.0
    %605 = vmatpush1.xpose.msra.mxu0 %v572
    %606 = vmatprep.subr.mxu0 0.0
    %607 = vmatpush2.xpose.msra.mxu0 0.0
    %608 = vmatprep.subr.mxu0 0.0
    %609 = vmatpush2.xpose.msra.mxu0 0.0
    %610 = vmatprep.subr.mxu0 0.0
    %611 = vmatpush2.xpose.msra.mxu0 0.0
    %612 = vmatprep.subr.mxu0 0.0
    %613 = vmatpush2.xpose.msra.mxu0 0.0
    %614 = vmatprep.subr.mxu0 0.0
    %615 = vmatpush2.xpose.msra.mxu0 0.0
    %616 = vmatprep.subr.mxu0 0.0
    %617 = vmatpush2.xpose.msra.mxu0 0.0
    %618 = vmatprep.subr.mxu0 0.0
    %619 = vmatpush2.xpose.msra.mxu0 0.0
    %620 = vmatprep.subr.mxu0 0.0
    %621 = vmatpush2.xpose.msra.mxu0 0.0
    %622 = vmatprep.subr.mxu0 0.0
    %623 = vmatpush2.xpose.msra.mxu0 0.0
    %624 = vmatprep.subr.mxu0 0.0
    %625 = vmatpush2.xpose.msra.mxu0 0.0
    %626 = vmatprep.subr.mxu0 0.0
    %627 = vmatpush2.xpose.msra.mxu0 0.0
    %628 = vmatprep.subr.mxu0 0.0
    %629 = vmatpush2.xpose.msra.mxu0 0.0
    %630 = vmatprep.subr.mxu0 0.0
    %631 = vmatpush2.xpose.msra.mxu0 0.0
    %632 = vmatprep.subr.mxu0 0.0
    %633 = vmatpush2.xpose.msra.mxu0 0.0
    %634 = vmatprep.subr.mxu0 0.0
    %635 = vmatpush2.xpose.msra.mxu0 0.0
    %636 = vmatprep.subr.mxu0 0.0
    %637 = vmatpush2.xpose.msra.mxu0 0.0
    %638 = vmatprep.mubr.f32.mxu0 0.0
    %639 = vmatmul.mubr.f32.gmra.mxu0 %v570
    %v640 = vpop.f32.mrf.mxu0
    %v641 = vadd.f32 0.0, %v640
    %v642 = vpop.f32.mrf.mxu0
    %643 = vdwg.mxu0
    %v644 = vsel %vm162, %v247, 0
    %v646 = vsel %vm162, %v353, 0
    %648 = vmatprep.subr.mxu0 0.0
    %649 = vmatpush1.xpose.msra.mxu0 0.0
    %650 = vmatprep.subr.mxu0 0.0
    %651 = vmatpush1.xpose.msra.mxu0 0.0
    %652 = vmatprep.subr.mxu0 0.0
    %653 = vmatpush1.xpose.msra.mxu0 0.0
    %654 = vmatprep.subr.mxu0 0.0
    %655 = vmatpush1.xpose.msra.mxu0 0.0
    %656 = vmatprep.subr.mxu0 0.0
    %657 = vmatpush1.xpose.msra.mxu0 0.0
    %658 = vmatprep.subr.mxu0 0.0
    %659 = vmatpush1.xpose.msra.mxu0 0.0
    %660 = vmatprep.subr.mxu0 0.0
    %661 = vmatpush1.xpose.msra.mxu0 0.0
    %662 = vmatprep.subr.mxu0 0.0
    %663 = vmatpush1.xpose.msra.mxu0 0.0
    %664 = vmatprep.subr.mxu0 0.0
    %665 = vmatpush1.xpose.msra.mxu0 0.0
    %666 = vmatprep.subr.mxu0 0.0
    %667 = vmatpush1.xpose.msra.mxu0 0.0
    %668 = vmatprep.subr.mxu0 0.0
    %669 = vmatpush1.xpose.msra.mxu0 0.0
    %670 = vmatprep.subr.mxu0 0.0
    %671 = vmatpush1.xpose.msra.mxu0 0.0
    %672 = vmatprep.subr.mxu0 0.0
    %673 = vmatpush1.xpose.msra.mxu0 0.0
    %674 = vmatprep.subr.mxu0 0.0
    %675 = vmatpush1.xpose.msra.mxu0 0.0
    %676 = vmatprep.subr.mxu0 0.0
    %677 = vmatpush1.xpose.msra.mxu0 0.0
    %678 = vmatprep.subr.mxu0 0.0
    %679 = vmatpush1.xpose.msra.mxu0 %v646
    %680 = vmatprep.subr.mxu0 0.0
    %681 = vmatpush2.xpose.msra.mxu0 0.0
    %682 = vmatprep.subr.mxu0 0.0
    %683 = vmatpush2.xpose.msra.mxu0 0.0
    %684 = vmatprep.subr.mxu0 0.0
    %685 = vmatpush2.xpose.msra.mxu0 0.0
    %686 = vmatprep.subr.mxu0 0.0
    %687 = vmatpush2.xpose.msra.mxu0 0.0
    %688 = vmatprep.subr.mxu0 0.0
    %689 = vmatpush2.xpose.msra.mxu0 0.0
    %690 = vmatprep.subr.mxu0 0.0
    %691 = vmatpush2.xpose.msra.mxu0 0.0
    %692 = vmatprep.subr.mxu0 0.0
    %693 = vmatpush2.xpose.msra.mxu0 0.0
    %694 = vmatprep.subr.mxu0 0.0
    %695 = vmatpush2.xpose.msra.mxu0 0.0
    %696 = vmatprep.subr.mxu0 0.0
    %697 = vmatpush2.xpose.msra.mxu0 0.0
    %698 = vmatprep.subr.mxu0 0.0
    %699 = vmatpush2.xpose.msra.mxu0 0.0
    %700 = vmatprep.subr.mxu0 0.0
    %701 = vmatpush2.xpose.msra.mxu0 0.0
    %702 = vmatprep.subr.mxu0 0.0
    %703 = vmatpush2.xpose.msra.mxu0 0.0
    %704 = vmatprep.subr.mxu0 0.0
    %705 = vmatpush2.xpose.msra.mxu0 0.0
    %706 = vmatprep.subr.mxu0 0.0
    %707 = vmatpush2.xpose.msra.mxu0 0.0
    %708 = vmatprep.subr.mxu0 0.0
    %709 = vmatpush2.xpose.msra.mxu0 0.0
    %710 = vmatprep.subr.mxu0 0.0
    %711 = vmatpush2.xpose.msra.mxu0 0.0
    %712 = vmatprep.mubr.f32.mxu0 0.0
    %713 = vmatmul.mubr.f32.gmra.mxu0 %v644
    %v714 = vpop.f32.mrf.mxu0
    %v715 = vadd.f32 0.0, %v714
    %v716 = vpop.f32.mrf.mxu0
    %717 = vdwg.mxu0
    %v718 = vsel %vm162, %v477, 0
    %v720 = vsel %vm162, %v485, 0
    %722 = vmatprep.subr.mxu0 0.0
    %723 = vmatpush1.xpose.msra.mxu0 0.0
    %724 = vmatprep.subr.mxu0 0.0
    %725 = vmatpush1.xpose.msra.mxu0 0.0
    %726 = vmatprep.subr.mxu0 0.0
    %727 = vmatpush1.xpose.msra.mxu0 0.0
    %728 = vmatprep.subr.mxu0 0.0
    %729 = vmatpush1.xpose.msra.mxu0 0.0
    %730 = vmatprep.subr.mxu0 0.0
    %731 = vmatpush1.xpose.msra.mxu0 0.0
    %732 = vmatprep.subr.mxu0 0.0
    %733 = vmatpush1.xpose.msra.mxu0 0.0
    %734 = vmatprep.subr.mxu0 0.0
    %735 = vmatpush1.xpose.msra.mxu0 0.0
    %736 = vmatprep.subr.mxu0 0.0
    %737 = vmatpush1.xpose.msra.mxu0 0.0
    %738 = vmatprep.subr.mxu0 0.0
    %739 = vmatpush1.xpose.msra.mxu0 0.0
    %740 = vmatprep.subr.mxu0 0.0
    %741 = vmatpush1.xpose.msra.mxu0 0.0
    %742 = vmatprep.subr.mxu0 0.0
    %743 = vmatpush1.xpose.msra.mxu0 0.0
    %744 = vmatprep.subr.mxu0 0.0
    %745 = vmatpush1.xpose.msra.mxu0 0.0
    %746 = vmatprep.subr.mxu0 0.0
    %747 = vmatpush1.xpose.msra.mxu0 0.0
    %748 = vmatprep.subr.mxu0 0.0
    %749 = vmatpush1.xpose.msra.mxu0 0.0
    %750 = vmatprep.subr.mxu0 0.0
    %751 = vmatpush1.xpose.msra.mxu0 0.0
    %752 = vmatprep.subr.mxu0 0.0
    %753 = vmatpush1.xpose.msra.mxu0 %v720
    %754 = vmatprep.subr.mxu0 0.0
    %755 = vmatpush2.xpose.msra.mxu0 0.0
    %756 = vmatprep.subr.mxu0 0.0
    %757 = vmatpush2.xpose.msra.mxu0 0.0
    %758 = vmatprep.subr.mxu0 0.0
    %759 = vmatpush2.xpose.msra.mxu0 0.0
    %760 = vmatprep.subr.mxu0 0.0
    %761 = vmatpush2.xpose.msra.mxu0 0.0
    %762 = vmatprep.subr.mxu0 0.0
    %763 = vmatpush2.xpose.msra.mxu0 0.0
    %764 = vmatprep.subr.mxu0 0.0
    %765 = vmatpush2.xpose.msra.mxu0 0.0
    %766 = vmatprep.subr.mxu0 0.0
    %767 = vmatpush2.xpose.msra.mxu0 0.0
    %768 = vmatprep.subr.mxu0 0.0
    %769 = vmatpush2.xpose.msra.mxu0 0.0
    %770 = vmatprep.subr.mxu0 0.0
    %771 = vmatpush2.xpose.msra.mxu0 0.0
    %772 = vmatprep.subr.mxu0 0.0
    %773 = vmatpush2.xpose.msra.mxu0 0.0
    %774 = vmatprep.subr.mxu0 0.0
    %775 = vmatpush2.xpose.msra.mxu0 0.0
    %776 = vmatprep.subr.mxu0 0.0
    %777 = vmatpush2.xpose.msra.mxu0 0.0
    %778 = vmatprep.subr.mxu0 0.0
    %779 = vmatpush2.xpose.msra.mxu0 0.0
    %780 = vmatprep.subr.mxu0 0.0
    %781 = vmatpush2.xpose.msra.mxu0 0.0
    %782 = vmatprep.subr.mxu0 0.0
    %783 = vmatpush2.xpose.msra.mxu0 0.0
    %784 = vmatprep.subr.mxu0 0.0
    %785 = vmatpush2.xpose.msra.mxu0 0.0
    %786 = vmatprep.mubr.f32.mxu0 0.0
    %787 = vmatmul.mubr.f32.gmra.mxu0 %v718
    %v788 = vpop.f32.mrf.mxu0
    %v789 = vadd.f32 0.0, %v788
    %v790 = vpop.f32.mrf.mxu0
    %791 = vdwg.mxu0
    %v792 = vsel %vm162, %v252, 0
    %v794 = vsel %vm162, %v358, 0
    %796 = vmatprep.subr.mxu0 0.0
    %797 = vmatpush1.xpose.msra.mxu0 0.0
    %798 = vmatprep.subr.mxu0 0.0
    %799 = vmatpush1.xpose.msra.mxu0 0.0
    %800 = vmatprep.subr.mxu0 0.0
    %801 = vmatpush1.xpose.msra.mxu0 0.0
    %802 = vmatprep.subr.mxu0 0.0
    %803 = vmatpush1.xpose.msra.mxu0 0.0
    %804 = vmatprep.subr.mxu0 0.0
    %805 = vmatpush1.xpose.msra.mxu0 0.0
    %806 = vmatprep.subr.mxu0 0.0
    %807 = vmatpush1.xpose.msra.mxu0 0.0
    %808 = vmatprep.subr.mxu0 0.0
    %809 = vmatpush1.xpose.msra.mxu0 0.0
    %810 = vmatprep.subr.mxu0 0.0
    %811 = vmatpush1.xpose.msra.mxu0 0.0
    %812 = vmatprep.subr.mxu0 0.0
    %813 = vmatpush1.xpose.msra.mxu0 0.0
    %814 = vmatprep.subr.mxu0 0.0
    %815 = vmatpush1.xpose.msra.mxu0 0.0
    %816 = vmatprep.subr.mxu0 0.0
    %817 = vmatpush1.xpose.msra.mxu0 0.0
    %818 = vmatprep.subr.mxu0 0.0
    %819 = vmatpush1.xpose.msra.mxu0 0.0
    %820 = vmatprep.subr.mxu0 0.0
    %821 = vmatpush1.xpose.msra.mxu0 0.0
    %822 = vmatprep.subr.mxu0 0.0
    %823 = vmatpush1.xpose.msra.mxu0 0.0
    %824 = vmatprep.subr.mxu0 0.0
    %825 = vmatpush1.xpose.msra.mxu0 0.0
    %826 = vmatprep.subr.mxu0 0.0
    %827 = vmatpush1.xpose.msra.mxu0 %v794
    %828 = vmatprep.subr.mxu0 0.0
    %829 = vmatpush2.xpose.msra.mxu0 0.0
    %830 = vmatprep.subr.mxu0 0.0
    %831 = vmatpush2.xpose.msra.mxu0 0.0
    %832 = vmatprep.subr.mxu0 0.0
    %833 = vmatpush2.xpose.msra.mxu0 0.0
    %834 = vmatprep.subr.mxu0 0.0
    %835 = vmatpush2.xpose.msra.mxu0 0.0
    %836 = vmatprep.subr.mxu0 0.0
    %837 = vmatpush2.xpose.msra.mxu0 0.0
    %838 = vmatprep.subr.mxu0 0.0
    %839 = vmatpush2.xpose.msra.mxu0 0.0
    %840 = vmatprep.subr.mxu0 0.0
    %841 = vmatpush2.xpose.msra.mxu0 0.0
    %842 = vmatprep.subr.mxu0 0.0
    %843 = vmatpush2.xpose.msra.mxu0 0.0
    %844 = vmatprep.subr.mxu0 0.0
    %845 = vmatpush2.xpose.msra.mxu0 0.0
    %846 = vmatprep.subr.mxu0 0.0
    %847 = vmatpush2.xpose.msra.mxu0 0.0
    %848 = vmatprep.subr.mxu0 0.0
    %849 = vmatpush2.xpose.msra.mxu0 0.0
    %850 = vmatprep.subr.mxu0 0.0
    %851 = vmatpush2.xpose.msra.mxu0 0.0
    %852 = vmatprep.subr.mxu0 0.0
    %853 = vmatpush2.xpose.msra.mxu0 0.0
    %854 = vmatprep.subr.mxu0 0.0
    %855 = vmatpush2.xpose.msra.mxu0 0.0
    %856 = vmatprep.subr.mxu0 0.0
    %857 = vmatpush2.xpose.msra.mxu0 0.0
    %858 = vmatprep.subr.mxu0 0.0
    %859 = vmatpush2.xpose.msra.mxu0 0.0
    %860 = vmatprep.mubr.f32.mxu0 0.0
    %861 = vmatmul.mubr.f32.gmra.mxu0 %v792
    %v862 = vpop.f32.mrf.mxu0
    %v863 = vadd.f32 0.0, %v862
    %v864 = vpop.f32.mrf.mxu0
    %865 = vdwg.mxu0
    %v866 = vsel %vm162, %v478, 0
    %v868 = vsel %vm162, %v486, 0
    %870 = vmatprep.subr.mxu0 0.0
    %871 = vmatpush1.xpose.msra.mxu0 0.0
    %872 = vmatprep.subr.mxu0 0.0
    %873 = vmatpush1.xpose.msra.mxu0 0.0
    %874 = vmatprep.subr.mxu0 0.0
    %875 = vmatpush1.xpose.msra.mxu0 0.0
    %876 = vmatprep.subr.mxu0 0.0
    %877 = vmatpush1.xpose.msra.mxu0 0.0
    %878 = vmatprep.subr.mxu0 0.0
    %879 = vmatpush1.xpose.msra.mxu0 0.0
    %880 = vmatprep.subr.mxu0 0.0
    %881 = vmatpush1.xpose.msra.mxu0 0.0
    %882 = vmatprep.subr.mxu0 0.0
    %883 = vmatpush1.xpose.msra.mxu0 0.0
    %884 = vmatprep.subr.mxu0 0.0
    %885 = vmatpush1.xpose.msra.mxu0 0.0
    %886 = vmatprep.subr.mxu0 0.0
    %887 = vmatpush1.xpose.msra.mxu0 0.0
    %888 = vmatprep.subr.mxu0 0.0
    %889 = vmatpush1.xpose.msra.mxu0 0.0
    %890 = vmatprep.subr.mxu0 0.0
    %891 = vmatpush1.xpose.msra.mxu0 0.0
    %892 = vmatprep.subr.mxu0 0.0
    %893 = vmatpush1.xpose.msra.mxu0 0.0
    %894 = vmatprep.subr.mxu0 0.0
    %895 = vmatpush1.xpose.msra.mxu0 0.0
    %896 = vmatprep.subr.mxu0 0.0
    %897 = vmatpush1.xpose.msra.mxu0 0.0
    %898 = vmatprep.subr.mxu0 0.0
    %899 = vmatpush1.xpose.msra.mxu0 0.0
    %900 = vmatprep.subr.mxu0 0.0
    %901 = vmatpush1.xpose.msra.mxu0 %v868
    %902 = vmatprep.subr.mxu0 0.0
    %903 = vmatpush2.xpose.msra.mxu0 0.0
    %904 = vmatprep.subr.mxu0 0.0
    %905 = vmatpush2.xpose.msra.mxu0 0.0
    %906 = vmatprep.subr.mxu0 0.0
    %907 = vmatpush2.xpose.msra.mxu0 0.0
    %908 = vmatprep.subr.mxu0 0.0
    %909 = vmatpush2.xpose.msra.mxu0 0.0
    %910 = vmatprep.subr.mxu0 0.0
    %911 = vmatpush2.xpose.msra.mxu0 0.0
    %912 = vmatprep.subr.mxu0 0.0
    %913 = vmatpush2.xpose.msra.mxu0 0.0
    %914 = vmatprep.subr.mxu0 0.0
    %915 = vmatpush2.xpose.msra.mxu0 0.0
    %916 = vmatprep.subr.mxu0 0.0
    %917 = vmatpush2.xpose.msra.mxu0 0.0
    %918 = vmatprep.subr.mxu0 0.0
    %919 = vmatpush2.xpose.msra.mxu0 0.0
    %920 = vmatprep.subr.mxu0 0.0
    %921 = vmatpush2.xpose.msra.mxu0 0.0
    %922 = vmatprep.subr.mxu0 0.0
    %923 = vmatpush2.xpose.msra.mxu0 0.0
    %924 = vmatprep.subr.mxu0 0.0
    %925 = vmatpush2.xpose.msra.mxu0 0.0
    %926 = vmatprep.subr.mxu0 0.0
    %927 = vmatpush2.xpose.msra.mxu0 0.0
    %928 = vmatprep.subr.mxu0 0.0
    %929 = vmatpush2.xpose.msra.mxu0 0.0
    %930 = vmatprep.subr.mxu0 0.0
    %931 = vmatpush2.xpose.msra.mxu0 0.0
    %932 = vmatprep.subr.mxu0 0.0
    %933 = vmatpush2.xpose.msra.mxu0 0.0
    %934 = vmatprep.mubr.f32.mxu0 0.0
    %935 = vmatmul.mubr.f32.gmra.mxu0 %v866
    %v936 = vpop.f32.mrf.mxu0
    %v937 = vadd.f32 0.0, %v936
    %v938 = vpop.f32.mrf.mxu0
    %939 = vdwg.mxu0
    %v940 = vsel %vm162, %v257, 0
    %v942 = vsel %vm162, %v363, 0
    %944 = vmatprep.subr.mxu0 0.0
    %945 = vmatpush1.xpose.msra.mxu0 0.0
    %946 = vmatprep.subr.mxu0 0.0
    %947 = vmatpush1.xpose.msra.mxu0 0.0
    %948 = vmatprep.subr.mxu0 0.0
    %949 = vmatpush1.xpose.msra.mxu0 0.0
    %950 = vmatprep.subr.mxu0 0.0
    %951 = vmatpush1.xpose.msra.mxu0 0.0
    %952 = vmatprep.subr.mxu0 0.0
    %953 = vmatpush1.xpose.msra.mxu0 0.0
    %954 = vmatprep.subr.mxu0 0.0
    %955 = vmatpush1.xpose.msra.mxu0 0.0
    %956 = vmatprep.subr.mxu0 0.0
    %957 = vmatpush1.xpose.msra.mxu0 0.0
    %958 = vmatprep.subr.mxu0 0.0
    %959 = vmatpush1.xpose.msra.mxu0 0.0
    %960 = vmatprep.subr.mxu0 0.0
    %961 = vmatpush1.xpose.msra.mxu0 0.0
    %962 = vmatprep.subr.mxu0 0.0
    %963 = vmatpush1.xpose.msra.mxu0 0.0
    %964 = vmatprep.subr.mxu0 0.0
    %965 = vmatpush1.xpose.msra.mxu0 0.0
    %966 = vmatprep.subr.mxu0 0.0
    %967 = vmatpush1.xpose.msra.mxu0 0.0
    %968 = vmatprep.subr.mxu0 0.0
    %969 = vmatpush1.xpose.msra.mxu0 0.0
    %970 = vmatprep.subr.mxu0 0.0
    %971 = vmatpush1.xpose.msra.mxu0 0.0
    %972 = vmatprep.subr.mxu0 0.0
    %973 = vmatpush1.xpose.msra.mxu0 0.0
    %974 = vmatprep.subr.mxu0 0.0
    %975 = vmatpush1.xpose.msra.mxu0 %v942
    %976 = vmatprep.subr.mxu0 0.0
    %977 = vmatpush2.xpose.msra.mxu0 0.0
    %978 = vmatprep.subr.mxu0 0.0
    %979 = vmatpush2.xpose.msra.mxu0 0.0
    %980 = vmatprep.subr.mxu0 0.0
    %981 = vmatpush2.xpose.msra.mxu0 0.0
    %982 = vmatprep.subr.mxu0 0.0
    %983 = vmatpush2.xpose.msra.mxu0 0.0
    %984 = vmatprep.subr.mxu0 0.0
    %985 = vmatpush2.xpose.msra.mxu0 0.0
    %986 = vmatprep.subr.mxu0 0.0
    %987 = vmatpush2.xpose.msra.mxu0 0.0
    %988 = vmatprep.subr.mxu0 0.0
    %989 = vmatpush2.xpose.msra.mxu0 0.0
    %990 = vmatprep.subr.mxu0 0.0
    %991 = vmatpush2.xpose.msra.mxu0 0.0
    %992 = vmatprep.subr.mxu0 0.0
    %993 = vmatpush2.xpose.msra.mxu0 0.0
    %994 = vmatprep.subr.mxu0 0.0
    %995 = vmatpush2.xpose.msra.mxu0 0.0
    %996 = vmatprep.subr.mxu0 0.0
    %997 = vmatpush2.xpose.msra.mxu0 0.0
    %998 = vmatprep.subr.mxu0 0.0
    %999 = vmatpush2.xpose.msra.mxu0 0.0
    %1000 = vmatprep.subr.mxu0 0.0
    %1001 = vmatpush2.xpose.msra.mxu0 0.0
    %1002 = vmatprep.subr.mxu0 0.0
    %1003 = vmatpush2.xpose.msra.mxu0 0.0
    %1004 = vmatprep.subr.mxu0 0.0
    %1005 = vmatpush2.xpose.msra.mxu0 0.0
    %1006 = vmatprep.subr.mxu0 0.0
    %1007 = vmatpush2.xpose.msra.mxu0 0.0
    %1008 = vmatprep.mubr.f32.mxu0 0.0
    %1009 = vmatmul.mubr.f32.gmra.mxu0 %v940
    %v1010 = vpop.f32.mrf.mxu0
    %v1011 = vadd.f32 0.0, %v1010
    %v1012 = vpop.f32.mrf.mxu0
    %1013 = vdwg.mxu0
    %v1014 = vsel %vm162, %v479, 0
    %v1016 = vsel %vm162, %v487, 0
    %1018 = vmatprep.subr.mxu0 0.0
    %1019 = vmatpush1.xpose.msra.mxu0 0.0
    %1020 = vmatprep.subr.mxu0 0.0
    %1021 = vmatpush1.xpose.msra.mxu0 0.0
    %1022 = vmatprep.subr.mxu0 0.0
    %1023 = vmatpush1.xpose.msra.mxu0 0.0
    %1024 = vmatprep.subr.mxu0 0.0
    %1025 = vmatpush1.xpose.msra.mxu0 0.0
    %1026 = vmatprep.subr.mxu0 0.0
    %1027 = vmatpush1.xpose.msra.mxu0 0.0
    %1028 = vmatprep.subr.mxu0 0.0
    %1029 = vmatpush1.xpose.msra.mxu0 0.0
    %1030 = vmatprep.subr.mxu0 0.0
    %1031 = vmatpush1.xpose.msra.mxu0 0.0
    %1032 = vmatprep.subr.mxu0 0.0
    %1033 = vmatpush1.xpose.msra.mxu0 0.0
    %1034 = vmatprep.subr.mxu0 0.0
    %1035 = vmatpush1.xpose.msra.mxu0 0.0
    %1036 = vmatprep.subr.mxu0 0.0
    %1037 = vmatpush1.xpose.msra.mxu0 0.0
    %1038 = vmatprep.subr.mxu0 0.0
    %1039 = vmatpush1.xpose.msra.mxu0 0.0
    %1040 = vmatprep.subr.mxu0 0.0
    %1041 = vmatpush1.xpose.msra.mxu0 0.0
    %1042 = vmatprep.subr.mxu0 0.0
    %1043 = vmatpush1.xpose.msra.mxu0 0.0
    %1044 = vmatprep.subr.mxu0 0.0
    %1045 = vmatpush1.xpose.msra.mxu0 0.0
    %1046 = vmatprep.subr.mxu0 0.0
    %1047 = vmatpush1.xpose.msra.mxu0 0.0
    %1048 = vmatprep.subr.mxu0 0.0
    %1049 = vmatpush1.xpose.msra.mxu0 %v1016
    %1050 = vmatprep.subr.mxu0 0.0
    %1051 = vmatpush2.xpose.msra.mxu0 0.0
    %1052 = vmatprep.subr.mxu0 0.0
    %1053 = vmatpush2.xpose.msra.mxu0 0.0
    %1054 = vmatprep.subr.mxu0 0.0
    %1055 = vmatpush2.xpose.msra.mxu0 0.0
    %1056 = vmatprep.subr.mxu0 0.0
    %1057 = vmatpush2.xpose.msra.mxu0 0.0
    %1058 = vmatprep.subr.mxu0 0.0
    %1059 = vmatpush2.xpose.msra.mxu0 0.0
    %1060 = vmatprep.subr.mxu0 0.0
    %1061 = vmatpush2.xpose.msra.mxu0 0.0
    %1062 = vmatprep.subr.mxu0 0.0
    %1063 = vmatpush2.xpose.msra.mxu0 0.0
    %1064 = vmatprep.subr.mxu0 0.0
    %1065 = vmatpush2.xpose.msra.mxu0 0.0
    %1066 = vmatprep.subr.mxu0 0.0
    %1067 = vmatpush2.xpose.msra.mxu0 0.0
    %1068 = vmatprep.subr.mxu0 0.0
    %1069 = vmatpush2.xpose.msra.mxu0 0.0
    %1070 = vmatprep.subr.mxu0 0.0
    %1071 = vmatpush2.xpose.msra.mxu0 0.0
    %1072 = vmatprep.subr.mxu0 0.0
    %1073 = vmatpush2.xpose.msra.mxu0 0.0
    %1074 = vmatprep.subr.mxu0 0.0
    %1075 = vmatpush2.xpose.msra.mxu0 0.0
    %1076 = vmatprep.subr.mxu0 0.0
    %1077 = vmatpush2.xpose.msra.mxu0 0.0
    %1078 = vmatprep.subr.mxu0 0.0
    %1079 = vmatpush2.xpose.msra.mxu0 0.0
    %1080 = vmatprep.subr.mxu0 0.0
    %1081 = vmatpush2.xpose.msra.mxu0 0.0
    %1082 = vmatprep.mubr.f32.mxu0 0.0
    %1083 = vmatmul.mubr.f32.gmra.mxu0 %v1014
    %v1084 = vpop.f32.mrf.mxu0
    %v1085 = vadd.f32 0.0, %v1084
    %v1086 = vpop.f32.mrf.mxu0
    %1087 = vdwg.mxu0
    %vm1088 = vcmask 27648
    %v1089 = vsel %vm1088, %v567, -inf
    %1090 = vmax.xlane.f32.xlu0 %v1089
    %v1091 = vpop.xlane.xlu0 %1090
    %v1092 = vsel %vm1088, %v641, -inf
    %1093 = vmax.xlane.f32.xlu0 %v1092
    %v1094 = vpop.xlane.xlu0 %1093
    %v1095 = vsel %vm1088, %v715, -inf
    %1096 = vmax.xlane.f32.xlu0 %v1095
    %v1097 = vpop.xlane.xlu0 %1096
    %v1098 = vsel %vm1088, %v789, -inf
    %1099 = vmax.xlane.f32.xlu0 %v1098
    %v1100 = vpop.xlane.xlu0 %1099
    %v1101 = vsel %vm1088, %v863, -inf
    %1102 = vmax.xlane.f32.xlu0 %v1101
    %v1103 = vpop.xlane.xlu0 %1102
    %v1104 = vsel %vm1088, %v937, -inf
    %1105 = vmax.xlane.f32.xlu0 %v1104
    %v1106 = vpop.xlane.xlu0 %1105
    %v1107 = vsel %vm1088, %v1011, -inf
    %1108 = vmax.xlane.f32.xlu0 %v1107
    %v1109 = vpop.xlane.xlu0 %1108
    %v1110 = vsel %vm1088, %v1085, -inf
    %1111 = vmax.xlane.f32.xlu0 %v1110
    %v1112 = vpop.xlane.xlu0 %1111
    %v1113 = vsub.f32 %v567, %v1091
    %v1114 = vsub.f32 %v641, %v1094
    %v1115 = vsub.f32 %v715, %v1097
    %v1116 = vsub.f32 %v789, %v1100
    %v1117 = vsub.f32 %v863, %v1103
    %v1118 = vsub.f32 %v937, %v1106
    %v1119 = vsub.f32 %v1011, %v1109
    %v1120 = vsub.f32 %v1085, %v1112
    %v1121 = vmul.f32 %v1113, 1.442695
    %v1122 = vpow.pop %v1121
    %v1123 = vmul.f32 %v1114, 1.442695
    %v1124 = vpow.pop %v1123
    %v1125 = vmul.f32 %v1115, 1.442695
    %v1126 = vpow.pop %v1125
    %v1127 = vmul.f32 %v1116, 1.442695
    %v1128 = vpow.pop %v1127
    %v1129 = vmul.f32 %v1117, 1.442695
    %v1130 = vpow.pop %v1129
    %v1131 = vmul.f32 %v1118, 1.442695
    %v1132 = vpow.pop %v1131
    %v1133 = vmul.f32 %v1119, 1.442695
    %v1134 = vpow.pop %v1133
    %v1135 = vmul.f32 %v1120, 1.442695
    %v1136 = vpow.pop %v1135
    %v1137 = vsel %vm1088, %v1122, 0.0
    %1138 = vadd.xlane.f32.xlu0 %v1137
    %v1139 = vpop.xlane.xlu0 %1138
    %v1140 = vsel %vm1088, %v1124, 0.0
    %1141 = vadd.xlane.f32.xlu0 %v1140
    %v1142 = vpop.xlane.xlu0 %1141
    %v1143 = vsel %vm1088, %v1126, 0.0
    %1144 = vadd.xlane.f32.xlu0 %v1143
    %v1145 = vpop.xlane.xlu0 %1144
    %v1146 = vsel %vm1088, %v1128, 0.0
    %1147 = vadd.xlane.f32.xlu0 %v1146
    %v1148 = vpop.xlane.xlu0 %1147
    %v1149 = vsel %vm1088, %v1130, 0.0
    %1150 = vadd.xlane.f32.xlu0 %v1149
    %v1151 = vpop.xlane.xlu0 %1150
    %v1152 = vsel %vm1088, %v1132, 0.0
    %1153 = vadd.xlane.f32.xlu0 %v1152
    %v1154 = vpop.xlane.xlu0 %1153
    %v1155 = vsel %vm1088, %v1134, 0.0
    %1156 = vadd.xlane.f32.xlu0 %v1155
    %v1157 = vpop.xlane.xlu0 %1156
    %v1158 = vsel %vm1088, %v1136, 0.0
    %1159 = vadd.xlane.f32.xlu0 %v1158
    %v1160 = vpop.xlane.xlu0 %1159
    %v1161 = vrcp.pop %v1139
    %v1162 = vrcp.pop %v1142
    %v1163 = vrcp.pop %v1145
    %v1164 = vrcp.pop %v1148
    %v1165 = vrcp.pop %v1151
    %v1166 = vrcp.pop %v1154
    %v1167 = vrcp.pop %v1157
    %v1168 = vrcp.pop %v1160
    %v1169 = vmul.f32 %v1122, %v1161
    %v1170 = vmul.f32 %v1124, %v1162
    %v1171 = vmul.f32 %v1126, %v1163
    %v1172 = vmul.f32 %v1128, %v1164
    %v1173 = vmul.f32 %v1130, %v1165
    %v1174 = vmul.f32 %v1132, %v1166
    %v1175 = vmul.f32 %v1134, %v1167
    %v1176 = vmul.f32 %v1136, %v1168
    %vm1177 = vcmask 31744
    %v1179 = vsel %vm1177, %v1169, 0
    %vm1181 = vcmask 1043456
    %v1182 = vsel %vm1181, %v454, 0
    %1184 = vmatprep.subr.mxu0 0.0
    %1185 = vmatpush1.msra.mxu0 0.0
    %1186 = vmatprep.subr.mxu0 0.0
    %1187 = vmatpush1.msra.mxu0 0.0
    %1188 = vmatprep.subr.mxu0 0.0
    %1189 = vmatpush1.msra.mxu0 0.0
    %1190 = vmatprep.subr.mxu0 0.0
    %1191 = vmatpush1.msra.mxu0 0.0
    %1192 = vmatprep.subr.mxu0 0.0
    %1193 = vmatpush1.msra.mxu0 0.0
    %1194 = vmatprep.subr.mxu0 0.0
    %1195 = vmatpush1.msra.mxu0 0.0
    %1196 = vmatprep.subr.mxu0 0.0
    %1197 = vmatpush1.msra.mxu0 0.0
    %1198 = vmatprep.subr.mxu0 0.0
    %1199 = vmatpush1.msra.mxu0 0.0
    %1200 = vmatprep.subr.mxu0 0.0
    %1201 = vmatpush1.msra.mxu0 0.0
    %1202 = vmatprep.subr.mxu0 0.0
    %1203 = vmatpush1.msra.mxu0 0.0
    %1204 = vmatprep.subr.mxu0 0.0
    %1205 = vmatpush1.msra.mxu0 0.0
    %1206 = vmatprep.subr.mxu0 0.0
    %1207 = vmatpush1.msra.mxu0 0.0
    %1208 = vmatprep.subr.mxu0 0.0
    %1209 = vmatpush1.msra.mxu0 0.0
    %1210 = vmatprep.subr.mxu0 0.0
    %1211 = vmatpush1.msra.mxu0 0.0
    %1212 = vmatprep.subr.mxu0 0.0
    %1213 = vmatpush1.msra.mxu0 0.0
    %1214 = vmatprep.subr.mxu0 0.0
    %1215 = vmatpush1.msra.mxu0 %v1182
    %1216 = vmatprep.subr.mxu0 0.0
    %1217 = vmatpush2.msra.mxu0 0.0
    %1218 = vmatprep.subr.mxu0 0.0
    %1219 = vmatpush2.msra.mxu0 0.0
    %1220 = vmatprep.subr.mxu0 0.0
    %1221 = vmatpush2.msra.mxu0 0.0
    %1222 = vmatprep.subr.mxu0 0.0
    %1223 = vmatpush2.msra.mxu0 0.0
    %1224 = vmatprep.subr.mxu0 0.0
    %1225 = vmatpush2.msra.mxu0 0.0
    %1226 = vmatprep.subr.mxu0 0.0
    %1227 = vmatpush2.msra.mxu0 0.0
    %1228 = vmatprep.subr.mxu0 0.0
    %1229 = vmatpush2.msra.mxu0 0.0
    %1230 = vmatprep.subr.mxu0 0.0
    %1231 = vmatpush2.msra.mxu0 0.0
    %1232 = vmatprep.subr.mxu0 0.0
    %1233 = vmatpush2.msra.mxu0 0.0
    %1234 = vmatprep.subr.mxu0 0.0
    %1235 = vmatpush2.msra.mxu0 0.0
    %1236 = vmatprep.subr.mxu0 0.0
    %1237 = vmatpush2.msra.mxu0 0.0
    %1238 = vmatprep.subr.mxu0 0.0
    %1239 = vmatpush2.msra.mxu0 0.0
    %1240 = vmatprep.subr.mxu0 0.0
    %1241 = vmatpush2.msra.mxu0 0.0
    %1242 = vmatprep.subr.mxu0 0.0
    %1243 = vmatpush2.msra.mxu0 0.0
    %1244 = vmatprep.subr.mxu0 0.0
    %1245 = vmatpush2.msra.mxu0 0.0
    %1246 = vmatprep.subr.mxu0 0.0
    %1247 = vmatpush2.msra.mxu0 0.0
    %1248 = vmatprep.mubr.f32.mxu0 0.0
    %1249 = vmatmul.mubr.f32.gmra.mxu0 %v1179
    %v1250 = vpop.f32.mrf.mxu0
    %v1251 = vadd.f32 0.0, %v1250
    %v1252 = vpop.f32.mrf.mxu0
    %1253 = vdwg.mxu0
    %v1255 = vsel %vm1177, %v1170, 0
    %v1257 = vsel %vm1181, %v492, 0
    %1259 = vmatprep.subr.mxu0 0.0
    %1260 = vmatpush1.msra.mxu0 0.0
    %1261 = vmatprep.subr.mxu0 0.0
    %1262 = vmatpush1.msra.mxu0 0.0
    %1263 = vmatprep.subr.mxu0 0.0
    %1264 = vmatpush1.msra.mxu0 0.0
    %1265 = vmatprep.subr.mxu0 0.0
    %1266 = vmatpush1.msra.mxu0 0.0
    %1267 = vmatprep.subr.mxu0 0.0
    %1268 = vmatpush1.msra.mxu0 0.0
    %1269 = vmatprep.subr.mxu0 0.0
    %1270 = vmatpush1.msra.mxu0 0.0
    %1271 = vmatprep.subr.mxu0 0.0
    %1272 = vmatpush1.msra.mxu0 0.0
    %1273 = vmatprep.subr.mxu0 0.0
    %1274 = vmatpush1.msra.mxu0 0.0
    %1275 = vmatprep.subr.mxu0 0.0
    %1276 = vmatpush1.msra.mxu0 0.0
    %1277 = vmatprep.subr.mxu0 0.0
    %1278 = vmatpush1.msra.mxu0 0.0
    %1279 = vmatprep.subr.mxu0 0.0
    %1280 = vmatpush1.msra.mxu0 0.0
    %1281 = vmatprep.subr.mxu0 0.0
    %1282 = vmatpush1.msra.mxu0 0.0
    %1283 = vmatprep.subr.mxu0 0.0
    %1284 = vmatpush1.msra.mxu0 0.0
    %1285 = vmatprep.subr.mxu0 0.0
    %1286 = vmatpush1.msra.mxu0 0.0
    %1287 = vmatprep.subr.mxu0 0.0
    %1288 = vmatpush1.msra.mxu0 0.0
    %1289 = vmatprep.subr.mxu0 0.0
    %1290 = vmatpush1.msra.mxu0 %v1257
    %1291 = vmatprep.subr.mxu0 0.0
    %1292 = vmatpush2.msra.mxu0 0.0
    %1293 = vmatprep.subr.mxu0 0.0
    %1294 = vmatpush2.msra.mxu0 0.0
    %1295 = vmatprep.subr.mxu0 0.0
    %1296 = vmatpush2.msra.mxu0 0.0
    %1297 = vmatprep.subr.mxu0 0.0
    %1298 = vmatpush2.msra.mxu0 0.0
    %1299 = vmatprep.subr.mxu0 0.0
    %1300 = vmatpush2.msra.mxu0 0.0
    %1301 = vmatprep.subr.mxu0 0.0
    %1302 = vmatpush2.msra.mxu0 0.0
    %1303 = vmatprep.subr.mxu0 0.0
    %1304 = vmatpush2.msra.mxu0 0.0
    %1305 = vmatprep.subr.mxu0 0.0
    %1306 = vmatpush2.msra.mxu0 0.0
    %1307 = vmatprep.subr.mxu0 0.0
    %1308 = vmatpush2.msra.mxu0 0.0
    %1309 = vmatprep.subr.mxu0 0.0
    %1310 = vmatpush2.msra.mxu0 0.0
    %1311 = vmatprep.subr.mxu0 0.0
    %1312 = vmatpush2.msra.mxu0 0.0
    %1313 = vmatprep.subr.mxu0 0.0
    %1314 = vmatpush2.msra.mxu0 0.0
    %1315 = vmatprep.subr.mxu0 0.0
    %1316 = vmatpush2.msra.mxu0 0.0
    %1317 = vmatprep.subr.mxu0 0.0
    %1318 = vmatpush2.msra.mxu0 0.0
    %1319 = vmatprep.subr.mxu0 0.0
    %1320 = vmatpush2.msra.mxu0 0.0
    %1321 = vmatprep.subr.mxu0 0.0
    %1322 = vmatpush2.msra.mxu0 0.0
    %1323 = vmatprep.mubr.f32.mxu0 0.0
    %1324 = vmatmul.mubr.f32.gmra.mxu0 %v1255
    %v1325 = vpop.f32.mrf.mxu0
    %v1326 = vadd.f32 0.0, %v1325
    %v1327 = vpop.f32.mrf.mxu0
    %1328 = vdwg.mxu0
    %v1330 = vsel %vm1177, %v1171, 0
    %v1332 = vsel %vm1181, %v459, 0
    %1334 = vmatprep.subr.mxu0 0.0
    %1335 = vmatpush1.msra.mxu0 0.0
    %1336 = vmatprep.subr.mxu0 0.0
    %1337 = vmatpush1.msra.mxu0 0.0
    %1338 = vmatprep.subr.mxu0 0.0
    %1339 = vmatpush1.msra.mxu0 0.0
    %1340 = vmatprep.subr.mxu0 0.0
    %1341 = vmatpush1.msra.mxu0 0.0
    %1342 = vmatprep.subr.mxu0 0.0
    %1343 = vmatpush1.msra.mxu0 0.0
    %1344 = vmatprep.subr.mxu0 0.0
    %1345 = vmatpush1.msra.mxu0 0.0
    %1346 = vmatprep.subr.mxu0 0.0
    %1347 = vmatpush1.msra.mxu0 0.0
    %1348 = vmatprep.subr.mxu0 0.0
    %1349 = vmatpush1.msra.mxu0 0.0
    %1350 = vmatprep.subr.mxu0 0.0
    %1351 = vmatpush1.msra.mxu0 0.0
    %1352 = vmatprep.subr.mxu0 0.0
    %1353 = vmatpush1.msra.mxu0 0.0
    %1354 = vmatprep.subr.mxu0 0.0
    %1355 = vmatpush1.msra.mxu0 0.0
    %1356 = vmatprep.subr.mxu0 0.0
    %1357 = vmatpush1.msra.mxu0 0.0
    %1358 = vmatprep.subr.mxu0 0.0
    %1359 = vmatpush1.msra.mxu0 0.0
    %1360 = vmatprep.subr.mxu0 0.0
    %1361 = vmatpush1.msra.mxu0 0.0
    %1362 = vmatprep.subr.mxu0 0.0
    %1363 = vmatpush1.msra.mxu0 0.0
    %1364 = vmatprep.subr.mxu0 0.0
    %1365 = vmatpush1.msra.mxu0 %v1332
    %1366 = vmatprep.subr.mxu0 0.0
    %1367 = vmatpush2.msra.mxu0 0.0
    %1368 = vmatprep.subr.mxu0 0.0
    %1369 = vmatpush2.msra.mxu0 0.0
    %1370 = vmatprep.subr.mxu0 0.0
    %1371 = vmatpush2.msra.mxu0 0.0
    %1372 = vmatprep.subr.mxu0 0.0
    %1373 = vmatpush2.msra.mxu0 0.0
    %1374 = vmatprep.subr.mxu0 0.0
    %1375 = vmatpush2.msra.mxu0 0.0
    %1376 = vmatprep.subr.mxu0 0.0
    %1377 = vmatpush2.msra.mxu0 0.0
    %1378 = vmatprep.subr.mxu0 0.0
    %1379 = vmatpush2.msra.mxu0 0.0
    %1380 = vmatprep.subr.mxu0 0.0
    %1381 = vmatpush2.msra.mxu0 0.0
    %1382 = vmatprep.subr.mxu0 0.0
    %1383 = vmatpush2.msra.mxu0 0.0
    %1384 = vmatprep.subr.mxu0 0.0
    %1385 = vmatpush2.msra.mxu0 0.0
    %1386 = vmatprep.subr.mxu0 0.0
    %1387 = vmatpush2.msra.mxu0 0.0
    %1388 = vmatprep.subr.mxu0 0.0
    %1389 = vmatpush2.msra.mxu0 0.0
    %1390 = vmatprep.subr.mxu0 0.0
    %1391 = vmatpush2.msra.mxu0 0.0
    %1392 = vmatprep.subr.mxu0 0.0
    %1393 = vmatpush2.msra.mxu0 0.0
    %1394 = vmatprep.subr.mxu0 0.0
    %1395 = vmatpush2.msra.mxu0 0.0
    %1396 = vmatprep.subr.mxu0 0.0
    %1397 = vmatpush2.msra.mxu0 0.0
    %1398 = vmatprep.mubr.f32.mxu0 0.0
    %1399 = vmatmul.mubr.f32.gmra.mxu0 %v1330
    %v1400 = vpop.f32.mrf.mxu0
    %v1401 = vadd.f32 0.0, %v1400
    %v1402 = vpop.f32.mrf.mxu0
    %1403 = vdwg.mxu0
    %v1405 = vsel %vm1177, %v1172, 0
    %v1407 = vsel %vm1181, %v493, 0
    %1409 = vmatprep.subr.mxu0 0.0
    %1410 = vmatpush1.msra.mxu0 0.0
    %1411 = vmatprep.subr.mxu0 0.0
    %1412 = vmatpush1.msra.mxu0 0.0
    %1413 = vmatprep.subr.mxu0 0.0
    %1414 = vmatpush1.msra.mxu0 0.0
    %1415 = vmatprep.subr.mxu0 0.0
    %1416 = vmatpush1.msra.mxu0 0.0
    %1417 = vmatprep.subr.mxu0 0.0
    %1418 = vmatpush1.msra.mxu0 0.0
    %1419 = vmatprep.subr.mxu0 0.0
    %1420 = vmatpush1.msra.mxu0 0.0
    %1421 = vmatprep.subr.mxu0 0.0
    %1422 = vmatpush1.msra.mxu0 0.0
    %1423 = vmatprep.subr.mxu0 0.0
    %1424 = vmatpush1.msra.mxu0 0.0
    %1425 = vmatprep.subr.mxu0 0.0
    %1426 = vmatpush1.msra.mxu0 0.0
    %1427 = vmatprep.subr.mxu0 0.0
    %1428 = vmatpush1.msra.mxu0 0.0
    %1429 = vmatprep.subr.mxu0 0.0
    %1430 = vmatpush1.msra.mxu0 0.0
    %1431 = vmatprep.subr.mxu0 0.0
    %1432 = vmatpush1.msra.mxu0 0.0
    %1433 = vmatprep.subr.mxu0 0.0
    %1434 = vmatpush1.msra.mxu0 0.0
    %1435 = vmatprep.subr.mxu0 0.0
    %1436 = vmatpush1.msra.mxu0 0.0
    %1437 = vmatprep.subr.mxu0 0.0
    %1438 = vmatpush1.msra.mxu0 0.0
    %1439 = vmatprep.subr.mxu0 0.0
    %1440 = vmatpush1.msra.mxu0 %v1407
    %1441 = vmatprep.subr.mxu0 0.0
    %1442 = vmatpush2.msra.mxu0 0.0
    %1443 = vmatprep.subr.mxu0 0.0
    %1444 = vmatpush2.msra.mxu0 0.0
    %1445 = vmatprep.subr.mxu0 0.0
    %1446 = vmatpush2.msra.mxu0 0.0
    %1447 = vmatprep.subr.mxu0 0.0
    %1448 = vmatpush2.msra.mxu0 0.0
    %1449 = vmatprep.subr.mxu0 0.0
    %1450 = vmatpush2.msra.mxu0 0.0
    %1451 = vmatprep.subr.mxu0 0.0
    %1452 = vmatpush2.msra.mxu0 0.0
    %1453 = vmatprep.subr.mxu0 0.0
    %1454 = vmatpush2.msra.mxu0 0.0
    %1455 = vmatprep.subr.mxu0 0.0
    %1456 = vmatpush2.msra.mxu0 0.0
    %1457 = vmatprep.subr.mxu0 0.0
    %1458 = vmatpush2.msra.mxu0 0.0
    %1459 = vmatprep.subr.mxu0 0.0
    %1460 = vmatpush2.msra.mxu0 0.0
    %1461 = vmatprep.subr.mxu0 0.0
    %1462 = vmatpush2.msra.mxu0 0.0
    %1463 = vmatprep.subr.mxu0 0.0
    %1464 = vmatpush2.msra.mxu0 0.0
    %1465 = vmatprep.subr.mxu0 0.0
    %1466 = vmatpush2.msra.mxu0 0.0
    %1467 = vmatprep.subr.mxu0 0.0
    %1468 = vmatpush2.msra.mxu0 0.0
    %1469 = vmatprep.subr.mxu0 0.0
    %1470 = vmatpush2.msra.mxu0 0.0
    %1471 = vmatprep.subr.mxu0 0.0
    %1472 = vmatpush2.msra.mxu0 0.0
    %1473 = vmatprep.mubr.f32.mxu0 0.0
    %1474 = vmatmul.mubr.f32.gmra.mxu0 %v1405
    %v1475 = vpop.f32.mrf.mxu0
    %v1476 = vadd.f32 0.0, %v1475
    %v1477 = vpop.f32.mrf.mxu0
    %1478 = vdwg.mxu0
    %v1480 = vsel %vm1177, %v1173, 0
    %v1482 = vsel %vm1181, %v464, 0
    %1484 = vmatprep.subr.mxu0 0.0
    %1485 = vmatpush1.msra.mxu0 0.0
    %1486 = vmatprep.subr.mxu0 0.0
    %1487 = vmatpush1.msra.mxu0 0.0
    %1488 = vmatprep.subr.mxu0 0.0
    %1489 = vmatpush1.msra.mxu0 0.0
    %1490 = vmatprep.subr.mxu0 0.0
    %1491 = vmatpush1.msra.mxu0 0.0
    %1492 = vmatprep.subr.mxu0 0.0
    %1493 = vmatpush1.msra.mxu0 0.0
    %1494 = vmatprep.subr.mxu0 0.0
    %1495 = vmatpush1.msra.mxu0 0.0
    %1496 = vmatprep.subr.mxu0 0.0
    %1497 = vmatpush1.msra.mxu0 0.0
    %1498 = vmatprep.subr.mxu0 0.0
    %1499 = vmatpush1.msra.mxu0 0.0
    %1500 = vmatprep.subr.mxu0 0.0
    %1501 = vmatpush1.msra.mxu0 0.0
    %1502 = vmatprep.subr.mxu0 0.0
    %1503 = vmatpush1.msra.mxu0 0.0
    %1504 = vmatprep.subr.mxu0 0.0
    %1505 = vmatpush1.msra.mxu0 0.0
    %1506 = vmatprep.subr.mxu0 0.0
    %1507 = vmatpush1.msra.mxu0 0.0
    %1508 = vmatprep.subr.mxu0 0.0
    %1509 = vmatpush1.msra.mxu0 0.0
    %1510 = vmatprep.subr.mxu0 0.0
    %1511 = vmatpush1.msra.mxu0 0.0
    %1512 = vmatprep.subr.mxu0 0.0
    %1513 = vmatpush1.msra.mxu0 0.0
    %1514 = vmatprep.subr.mxu0 0.0
    %1515 = vmatpush1.msra.mxu0 %v1482
    %1516 = vmatprep.subr.mxu0 0.0
    %1517 = vmatpush2.msra.mxu0 0.0
    %1518 = vmatprep.subr.mxu0 0.0
    %1519 = vmatpush2.msra.mxu0 0.0
    %1520 = vmatprep.subr.mxu0 0.0
    %1521 = vmatpush2.msra.mxu0 0.0
    %1522 = vmatprep.subr.mxu0 0.0
    %1523 = vmatpush2.msra.mxu0 0.0
    %1524 = vmatprep.subr.mxu0 0.0
    %1525 = vmatpush2.msra.mxu0 0.0
    %1526 = vmatprep.subr.mxu0 0.0
    %1527 = vmatpush2.msra.mxu0 0.0
    %1528 = vmatprep.subr.mxu0 0.0
    %1529 = vmatpush2.msra.mxu0 0.0
    %1530 = vmatprep.subr.mxu0 0.0
    %1531 = vmatpush2.msra.mxu0 0.0
    %1532 = vmatprep.subr.mxu0 0.0
    %1533 = vmatpush2.msra.mxu0 0.0
    %1534 = vmatprep.subr.mxu0 0.0
    %1535 = vmatpush2.msra.mxu0 0.0
    %1536 = vmatprep.subr.mxu0 0.0
    %1537 = vmatpush2.msra.mxu0 0.0
    %1538 = vmatprep.subr.mxu0 0.0
    %1539 = vmatpush2.msra.mxu0 0.0
    %1540 = vmatprep.subr.mxu0 0.0
    %1541 = vmatpush2.msra.mxu0 0.0
    %1542 = vmatprep.subr.mxu0 0.0
    %1543 = vmatpush2.msra.mxu0 0.0
    %1544 = vmatprep.subr.mxu0 0.0
    %1545 = vmatpush2.msra.mxu0 0.0
    %1546 = vmatprep.subr.mxu0 0.0
    %1547 = vmatpush2.msra.mxu0 0.0
    %1548 = vmatprep.mubr.f32.mxu0 0.0
    %1549 = vmatmul.mubr.f32.gmra.mxu0 %v1480
    %v1550 = vpop.f32.mrf.mxu0
    %v1551 = vadd.f32 0.0, %v1550
    %v1552 = vpop.f32.mrf.mxu0
    %1553 = vdwg.mxu0
    %v1555 = vsel %vm1177, %v1174, 0
    %v1557 = vsel %vm1181, %v494, 0
    %1559 = vmatprep.subr.mxu0 0.0
    %1560 = vmatpush1.msra.mxu0 0.0
    %1561 = vmatprep.subr.mxu0 0.0
    %1562 = vmatpush1.msra.mxu0 0.0
    %1563 = vmatprep.subr.mxu0 0.0
    %1564 = vmatpush1.msra.mxu0 0.0
    %1565 = vmatprep.subr.mxu0 0.0
    %1566 = vmatpush1.msra.mxu0 0.0
    %1567 = vmatprep.subr.mxu0 0.0
    %1568 = vmatpush1.msra.mxu0 0.0
    %1569 = vmatprep.subr.mxu0 0.0
    %1570 = vmatpush1.msra.mxu0 0.0
    %1571 = vmatprep.subr.mxu0 0.0
    %1572 = vmatpush1.msra.mxu0 0.0
    %1573 = vmatprep.subr.mxu0 0.0
    %1574 = vmatpush1.msra.mxu0 0.0
    %1575 = vmatprep.subr.mxu0 0.0
    %1576 = vmatpush1.msra.mxu0 0.0
    %1577 = vmatprep.subr.mxu0 0.0
    %1578 = vmatpush1.msra.mxu0 0.0
    %1579 = vmatprep.subr.mxu0 0.0
    %1580 = vmatpush1.msra.mxu0 0.0
    %1581 = vmatprep.subr.mxu0 0.0
    %1582 = vmatpush1.msra.mxu0 0.0
    %1583 = vmatprep.subr.mxu0 0.0
    %1584 = vmatpush1.msra.mxu0 0.0
    %1585 = vmatprep.subr.mxu0 0.0
    %1586 = vmatpush1.msra.mxu0 0.0
    %1587 = vmatprep.subr.mxu0 0.0
    %1588 = vmatpush1.msra.mxu0 0.0
    %1589 = vmatprep.subr.mxu0 0.0
    %1590 = vmatpush1.msra.mxu0 %v1557
    %1591 = vmatprep.subr.mxu0 0.0
    %1592 = vmatpush2.msra.mxu0 0.0
    %1593 = vmatprep.subr.mxu0 0.0
    %1594 = vmatpush2.msra.mxu0 0.0
    %1595 = vmatprep.subr.mxu0 0.0
    %1596 = vmatpush2.msra.mxu0 0.0
    %1597 = vmatprep.subr.mxu0 0.0
    %1598 = vmatpush2.msra.mxu0 0.0
    %1599 = vmatprep.subr.mxu0 0.0
    %1600 = vmatpush2.msra.mxu0 0.0
    %1601 = vmatprep.subr.mxu0 0.0
    %1602 = vmatpush2.msra.mxu0 0.0
    %1603 = vmatprep.subr.mxu0 0.0
    %1604 = vmatpush2.msra.mxu0 0.0
    %1605 = vmatprep.subr.mxu0 0.0
    %1606 = vmatpush2.msra.mxu0 0.0
    %1607 = vmatprep.subr.mxu0 0.0
    %1608 = vmatpush2.msra.mxu0 0.0
    %1609 = vmatprep.subr.mxu0 0.0
    %1610 = vmatpush2.msra.mxu0 0.0
    %1611 = vmatprep.subr.mxu0 0.0
    %1612 = vmatpush2.msra.mxu0 0.0
    %1613 = vmatprep.subr.mxu0 0.0
    %1614 = vmatpush2.msra.mxu0 0.0
    %1615 = vmatprep.subr.mxu0 0.0
    %1616 = vmatpush2.msra.mxu0 0.0
    %1617 = vmatprep.subr.mxu0 0.0
    %1618 = vmatpush2.msra.mxu0 0.0
    %1619 = vmatprep.subr.mxu0 0.0
    %1620 = vmatpush2.msra.mxu0 0.0
    %1621 = vmatprep.subr.mxu0 0.0
    %1622 = vmatpush2.msra.mxu0 0.0
    %1623 = vmatprep.mubr.f32.mxu0 0.0
    %1624 = vmatmul.mubr.f32.gmra.mxu0 %v1555
    %v1625 = vpop.f32.mrf.mxu0
    %v1626 = vadd.f32 0.0, %v1625
    %v1627 = vpop.f32.mrf.mxu0
    %1628 = vdwg.mxu0
    %v1630 = vsel %vm1177, %v1175, 0
    %v1632 = vsel %vm1181, %v469, 0
    %1634 = vmatprep.subr.mxu0 0.0
    %1635 = vmatpush1.msra.mxu0 0.0
    %1636 = vmatprep.subr.mxu0 0.0
    %1637 = vmatpush1.msra.mxu0 0.0
    %1638 = vmatprep.subr.mxu0 0.0
    %1639 = vmatpush1.msra.mxu0 0.0
    %1640 = vmatprep.subr.mxu0 0.0
    %1641 = vmatpush1.msra.mxu0 0.0
    %1642 = vmatprep.subr.mxu0 0.0
    %1643 = vmatpush1.msra.mxu0 0.0
    %1644 = vmatprep.subr.mxu0 0.0
    %1645 = vmatpush1.msra.mxu0 0.0
    %1646 = vmatprep.subr.mxu0 0.0
    %1647 = vmatpush1.msra.mxu0 0.0
    %1648 = vmatprep.subr.mxu0 0.0
    %1649 = vmatpush1.msra.mxu0 0.0
    %1650 = vmatprep.subr.mxu0 0.0
    %1651 = vmatpush1.msra.mxu0 0.0
    %1652 = vmatprep.subr.mxu0 0.0
    %1653 = vmatpush1.msra.mxu0 0.0
    %1654 = vmatprep.subr.mxu0 0.0
    %1655 = vmatpush1.msra.mxu0 0.0
    %1656 = vmatprep.subr.mxu0 0.0
    %1657 = vmatpush1.msra.mxu0 0.0
    %1658 = vmatprep.subr.mxu0 0.0
    %1659 = vmatpush1.msra.mxu0 0.0
    %1660 = vmatprep.subr.mxu0 0.0
    %1661 = vmatpush1.msra.mxu0 0.0
    %1662 = vmatprep.subr.mxu0 0.0
    %1663 = vmatpush1.msra.mxu0 0.0
    %1664 = vmatprep.subr.mxu0 0.0
    %1665 = vmatpush1.msra.mxu0 %v1632
    %1666 = vmatprep.subr.mxu0 0.0
    %1667 = vmatpush2.msra.mxu0 0.0
    %1668 = vmatprep.subr.mxu0 0.0
    %1669 = vmatpush2.msra.mxu0 0.0
    %1670 = vmatprep.subr.mxu0 0.0
    %1671 = vmatpush2.msra.mxu0 0.0
    %1672 = vmatprep.subr.mxu0 0.0
    %1673 = vmatpush2.msra.mxu0 0.0
    %1674 = vmatprep.subr.mxu0 0.0
    %1675 = vmatpush2.msra.mxu0 0.0
    %1676 = vmatprep.subr.mxu0 0.0
    %1677 = vmatpush2.msra.mxu0 0.0
    %1678 = vmatprep.subr.mxu0 0.0
    %1679 = vmatpush2.msra.mxu0 0.0
    %1680 = vmatprep.subr.mxu0 0.0
    %1681 = vmatpush2.msra.mxu0 0.0
    %1682 = vmatprep.subr.mxu0 0.0
    %1683 = vmatpush2.msra.mxu0 0.0
    %1684 = vmatprep.subr.mxu0 0.0
    %1685 = vmatpush2.msra.mxu0 0.0
    %1686 = vmatprep.subr.mxu0 0.0
    %1687 = vmatpush2.msra.mxu0 0.0
    %1688 = vmatprep.subr.mxu0 0.0
    %1689 = vmatpush2.msra.mxu0 0.0
    %1690 = vmatprep.subr.mxu0 0.0
    %1691 = vmatpush2.msra.mxu0 0.0
    %1692 = vmatprep.subr.mxu0 0.0
    %1693 = vmatpush2.msra.mxu0 0.0
    %1694 = vmatprep.subr.mxu0 0.0
    %1695 = vmatpush2.msra.mxu0 0.0
    %1696 = vmatprep.subr.mxu0 0.0
    %1697 = vmatpush2.msra.mxu0 0.0
    %1698 = vmatprep.mubr.f32.mxu0 0.0
    %1699 = vmatmul.mubr.f32.gmra.mxu0 %v1630
    %v1700 = vpop.f32.mrf.mxu0
    %v1701 = vadd.f32 0.0, %v1700
    %v1702 = vpop.f32.mrf.mxu0
    %1703 = vdwg.mxu0
    %v1705 = vsel %vm1177, %v1176, 0
    %v1707 = vsel %vm1181, %v495, 0
    %1709 = vmatprep.subr.mxu0 0.0
    %1710 = vmatpush1.msra.mxu0 0.0
    %1711 = vmatprep.subr.mxu0 0.0
    %1712 = vmatpush1.msra.mxu0 0.0
    %1713 = vmatprep.subr.mxu0 0.0
    %1714 = vmatpush1.msra.mxu0 0.0
    %1715 = vmatprep.subr.mxu0 0.0
    %1716 = vmatpush1.msra.mxu0 0.0
    %1717 = vmatprep.subr.mxu0 0.0
    %1718 = vmatpush1.msra.mxu0 0.0
    %1719 = vmatprep.subr.mxu0 0.0
    %1720 = vmatpush1.msra.mxu0 0.0
    %1721 = vmatprep.subr.mxu0 0.0
    %1722 = vmatpush1.msra.mxu0 0.0
    %1723 = vmatprep.subr.mxu0 0.0
    %1724 = vmatpush1.msra.mxu0 0.0
    %1725 = vmatprep.subr.mxu0 0.0
    %1726 = vmatpush1.msra.mxu0 0.0
    %1727 = vmatprep.subr.mxu0 0.0
    %1728 = vmatpush1.msra.mxu0 0.0
    %1729 = vmatprep.subr.mxu0 0.0
    %1730 = vmatpush1.msra.mxu0 0.0
    %1731 = vmatprep.subr.mxu0 0.0
    %1732 = vmatpush1.msra.mxu0 0.0
    %1733 = vmatprep.subr.mxu0 0.0
    %1734 = vmatpush1.msra.mxu0 0.0
    %1735 = vmatprep.subr.mxu0 0.0
    %1736 = vmatpush1.msra.mxu0 0.0
    %1737 = vmatprep.subr.mxu0 0.0
    %1738 = vmatpush1.msra.mxu0 0.0
    %1739 = vmatprep.subr.mxu0 0.0
    %1740 = vmatpush1.msra.mxu0 %v1707
    %1741 = vmatprep.subr.mxu0 0.0
    %1742 = vmatpush2.msra.mxu0 0.0
    %1743 = vmatprep.subr.mxu0 0.0
    %1744 = vmatpush2.msra.mxu0 0.0
    %1745 = vmatprep.subr.mxu0 0.0
    %1746 = vmatpush2.msra.mxu0 0.0
    %1747 = vmatprep.subr.mxu0 0.0
    %1748 = vmatpush2.msra.mxu0 0.0
    %1749 = vmatprep.subr.mxu0 0.0
    %1750 = vmatpush2.msra.mxu0 0.0
    %1751 = vmatprep.subr.mxu0 0.0
    %1752 = vmatpush2.msra.mxu0 0.0
    %1753 = vmatprep.subr.mxu0 0.0
    %1754 = vmatpush2.msra.mxu0 0.0
    %1755 = vmatprep.subr.mxu0 0.0
    %1756 = vmatpush2.msra.mxu0 0.0
    %1757 = vmatprep.subr.mxu0 0.0
    %1758 = vmatpush2.msra.mxu0 0.0
    %1759 = vmatprep.subr.mxu0 0.0
    %1760 = vmatpush2.msra.mxu0 0.0
    %1761 = vmatprep.subr.mxu0 0.0
    %1762 = vmatpush2.msra.mxu0 0.0
    %1763 = vmatprep.subr.mxu0 0.0
    %1764 = vmatpush2.msra.mxu0 0.0
    %1765 = vmatprep.subr.mxu0 0.0
    %1766 = vmatpush2.msra.mxu0 0.0
    %1767 = vmatprep.subr.mxu0 0.0
    %1768 = vmatpush2.msra.mxu0 0.0
    %1769 = vmatprep.subr.mxu0 0.0
    %1770 = vmatpush2.msra.mxu0 0.0
    %1771 = vmatprep.subr.mxu0 0.0
    %1772 = vmatpush2.msra.mxu0 0.0
    %1773 = vmatprep.mubr.f32.mxu0 0.0
    %1774 = vmatmul.mubr.f32.gmra.mxu0 %v1705
    %v1775 = vpop.f32.mrf.mxu0
    %v1776 = vadd.f32 0.0, %v1775
    %v1777 = vpop.f32.mrf.mxu0
    %1778 = vdwg.mxu0
    %v1779 = vld [vmem:[#allocation13] sm:$0xff]
    %v1780 = vld [vmem:[#allocation13 + $0x8] sm:$0xff]
    %v1781 = vld [vmem:[#allocation13 + $0x10] sm:$0xff]
    %v1782 = vld [vmem:[#allocation13 + $0x18] sm:$0xff]
    %v1791 = vcombine.low %v1251, %v1326
    %v1792 = vcombine.low %v1401, %v1476
    %v1793 = vcombine.low %v1551, %v1626
    %v1794 = vcombine.low %v1701, %v1776
    %v1795 = vsel %vm162, %v1791, 0
    %v1797 = vsel %vm162, %v1792, 0
    %v1799 = vsel %vm162, %v1793, 0
    %v1801 = vsel %vm162, %v1794, 0
    %1803 = vmatprep.subr.mxu0 0.0
    %1804 = vmatpush1.msra.mxu0 0.0
    %1805 = vmatprep.subr.mxu0 0.0
    %1806 = vmatpush1.msra.mxu0 0.0
    %1807 = vmatprep.subr.mxu0 0.0
    %1808 = vmatpush1.msra.mxu0 0.0
    %1809 = vmatprep.subr.mxu0 0.0
    %1810 = vmatpush1.msra.mxu0 0.0
    %1811 = vmatprep.subr.mxu0 0.0
    %1812 = vmatpush1.msra.mxu0 0.0
    %1813 = vmatprep.subr.mxu0 0.0
    %1814 = vmatpush1.msra.mxu0 0.0
    %1815 = vmatprep.subr.mxu0 0.0
    %1816 = vmatpush1.msra.mxu0 0.0
    %1817 = vmatprep.subr.mxu0 0.0
    %1818 = vmatpush1.msra.mxu0 0.0
    %1819 = vmatprep.subr.mxu0 0.0
    %1820 = vmatpush1.msra.mxu0 0.0
    %1821 = vmatprep.subr.mxu0 0.0
    %1822 = vmatpush1.msra.mxu0 0.0
    %1823 = vmatprep.subr.mxu0 0.0
    %1824 = vmatpush1.msra.mxu0 0.0
    %1825 = vmatprep.subr.mxu0 0.0
    %1826 = vmatpush1.msra.mxu0 0.0
    %1827 = vmatprep.subr.mxu0 0.0
    %1828 = vmatpush1.msra.mxu0 %v1782
    %1829 = vmatprep.subr.mxu0 0.0
    %1830 = vmatpush1.msra.mxu0 %v1781
    %1831 = vmatprep.subr.mxu0 0.0
    %1832 = vmatpush1.msra.mxu0 %v1780
    %1833 = vmatprep.subr.mxu0 0.0
    %1834 = vmatpush1.msra.mxu0 %v1779
    %1835 = vmatprep.subr.mxu0 0.0
    %1836 = vmatpush2.msra.mxu0 0.0
    %1837 = vmatprep.subr.mxu0 0.0
    %1838 = vmatpush2.msra.mxu0 0.0
    %1839 = vmatprep.subr.mxu0 0.0
    %1840 = vmatpush2.msra.mxu0 0.0
    %1841 = vmatprep.subr.mxu0 0.0
    %1842 = vmatpush2.msra.mxu0 0.0
    %1843 = vmatprep.subr.mxu0 0.0
    %1844 = vmatpush2.msra.mxu0 0.0
    %1845 = vmatprep.subr.mxu0 0.0
    %1846 = vmatpush2.msra.mxu0 0.0
    %1847 = vmatprep.subr.mxu0 0.0
    %1848 = vmatpush2.msra.mxu0 0.0
    %1849 = vmatprep.subr.mxu0 0.0
    %1850 = vmatpush2.msra.mxu0 0.0
    %1851 = vmatprep.subr.mxu0 0.0
    %1852 = vmatpush2.msra.mxu0 0.0
    %1853 = vmatprep.subr.mxu0 0.0
    %1854 = vmatpush2.msra.mxu0 0.0
    %1855 = vmatprep.subr.mxu0 0.0
    %1856 = vmatpush2.msra.mxu0 0.0
    %1857 = vmatprep.subr.mxu0 0.0
    %1858 = vmatpush2.msra.mxu0 0.0
    %1859 = vmatprep.subr.mxu0 0.0
    %1860 = vmatpush2.msra.mxu0 0.0
    %1861 = vmatprep.subr.mxu0 0.0
    %1862 = vmatpush2.msra.mxu0 0.0
    %1863 = vmatprep.subr.mxu0 0.0
    %1864 = vmatpush2.msra.mxu0 0.0
    %1865 = vmatprep.subr.mxu0 0.0
    %1866 = vmatpush2.msra.mxu0 0.0
    %1867 = vmatprep.mubr.f32.mxu0 0.0
    %1868 = vmatmul.mubr.f32.gmra.mxu0 %v1795
    %v1869 = vpop.f32.mrf.mxu0
    %v1870 = vadd.f32 0.0, %v1869
    %v1871 = vpop.f32.mrf.mxu0
    %1872 = vmatprep.mubr.f32.mxu0 0.0
    %1873 = vmatmul.mubr.f32.gmra.mxu0 %v1797
    %v1874 = vpop.f32.mrf.mxu0
    %v1875 = vadd.f32 0.0, %v1874
    %v1876 = vpop.f32.mrf.mxu0
    %1877 = vmatprep.mubr.f32.mxu0 0.0
    %1878 = vmatmul.mubr.f32.gmra.mxu0 %v1799
    %v1879 = vpop.f32.mrf.mxu0
    %v1880 = vadd.f32 0.0, %v1879
    %v1881 = vpop.f32.mrf.mxu0
    %1882 = vmatprep.mubr.f32.mxu0 0.0
    %1883 = vmatmul.mubr.f32.gmra.mxu0 %v1801
    %v1884 = vpop.f32.mrf.mxu0
    %v1885 = vadd.f32 0.0, %v1884
    %v1886 = vpop.f32.mrf.mxu0
    %1887 = vdwg.mxu0
    %v1888 = vadd.f32 %v151, %v1870
    %v1889 = vadd.f32 %v151, %v1875
    %v1890 = vadd.f32 %v151, %v1880
    %v1891 = vadd.f32 %v151, %v1885
    %s1892 = scalar_lea.vmem [#allocation8], 32
    %v1893 = vld [vmem:[%s1892] sm:$0xff]
    %v1894 = vld [vmem:[%s1892 + $0x8] sm:$0xff]
    %v1895 = vld [vmem:[%s1892 + $0x10] sm:$0xff]
    %v1896 = vld [vmem:[%s1892 + $0x18] sm:$0xff]
    %v1897 = vld [vmem:[%s4 + $0x1] sm:$0x1]
    %v1898 = vlaneseq
    %v1899 = vshrl.u32 %v1898, 7
    %v1900 = vsub.s32 0, %v1899
    %v1901 = vrot.slane %v1897, %v1900
    %1902 = vmatprep.subr.mxu0 0.0
    %1903 = vmatpush1.msra.mxu0 0.0
    %1904 = vmatprep.subr.mxu0 0.0
    %1905 = vmatpush1.msra.mxu0 0.0
    %1906 = vmatprep.subr.mxu0 0.0
    %1907 = vmatpush1.msra.mxu0 0.0
    %1908 = vmatprep.subr.mxu0 0.0
    %1909 = vmatpush1.msra.mxu0 0.0
    %1910 = vmatprep.subr.mxu0 0.0
    %1911 = vmatpush1.msra.mxu0 0.0
    %1912 = vmatprep.subr.mxu0 0.0
    %1913 = vmatpush1.msra.mxu0 0.0
    %1914 = vmatprep.subr.mxu0 0.0
    %1915 = vmatpush1.msra.mxu0 0.0
    %1916 = vmatprep.subr.mxu0 0.0
    %1917 = vmatpush1.msra.mxu0 0.0
    %1918 = vmatprep.subr.mxu0 0.0
    %1919 = vmatpush1.msra.mxu0 0.0
    %1920 = vmatprep.subr.mxu0 0.0
    %1921 = vmatpush1.msra.mxu0 0.0
    %1922 = vmatprep.subr.mxu0 0.0
    %1923 = vmatpush1.msra.mxu0 0.0
    %1924 = vmatprep.subr.mxu0 0.0
    %1925 = vmatpush1.msra.mxu0 0.0
    %1926 = vmatprep.subr.mxu0 0.0
    %1927 = vmatpush1.msra.mxu0 %v1896
    %1928 = vmatprep.subr.mxu0 0.0
    %1929 = vmatpush1.msra.mxu0 %v1895
    %1930 = vmatprep.subr.mxu0 0.0
    %1931 = vmatpush1.msra.mxu0 %v1894
    %1932 = vmatprep.subr.mxu0 0.0
    %1933 = vmatpush1.msra.mxu0 %v1893
    %1934 = vmatprep.subr.mxu0 0.0
    %1935 = vmatpush2.msra.mxu0 0.0
    %1936 = vmatprep.subr.mxu0 0.0
    %1937 = vmatpush2.msra.mxu0 0.0
    %1938 = vmatprep.subr.mxu0 0.0
    %1939 = vmatpush2.msra.mxu0 0.0
    %1940 = vmatprep.subr.mxu0 0.0
    %1941 = vmatpush2.msra.mxu0 0.0
    %1942 = vmatprep.subr.mxu0 0.0
    %1943 = vmatpush2.msra.mxu0 0.0
    %1944 = vmatprep.subr.mxu0 0.0
    %1945 = vmatpush2.msra.mxu0 0.0
    %1946 = vmatprep.subr.mxu0 0.0
    %1947 = vmatpush2.msra.mxu0 0.0
    %1948 = vmatprep.subr.mxu0 0.0
    %1949 = vmatpush2.msra.mxu0 0.0
    %1950 = vmatprep.subr.mxu0 0.0
    %1951 = vmatpush2.msra.mxu0 0.0
    %1952 = vmatprep.subr.mxu0 0.0
    %1953 = vmatpush2.msra.mxu0 0.0
    %1954 = vmatprep.subr.mxu0 0.0
    %1955 = vmatpush2.msra.mxu0 0.0
    %1956 = vmatprep.subr.mxu0 0.0
    %1957 = vmatpush2.msra.mxu0 0.0
    %1958 = vmatprep.subr.mxu0 0.0
    %1959 = vmatpush2.msra.mxu0 0.0
    %1960 = vmatprep.subr.mxu0 0.0
    %1961 = vmatpush2.msra.mxu0 0.0
    %1962 = vmatprep.subr.mxu0 0.0
    %1963 = vmatpush2.msra.mxu0 0.0
    %1964 = vmatprep.subr.mxu0 0.0
    %1965 = vmatpush2.msra.mxu0 0.0
    %1966 = vmatprep.mubr.f32.mxu0 0.0
    %1967 = vmatmul.mubr.f32.gmra.mxu0 %v164
    %v1968 = vpop.f32.mrf.mxu0
    %v1969 = vadd.f32 %v1901, %v1968
    %v1970 = vpop.f32.mrf.mxu0
    %1971 = vmatprep.mubr.f32.mxu0 0.0
    %1972 = vmatmul.mubr.f32.gmra.mxu0 %v167
    %v1973 = vpop.f32.mrf.mxu0
    %v1974 = vadd.f32 %v1901, %v1973
    %v1975 = vpop.f32.mrf.mxu0
    %1976 = vmatprep.mubr.f32.mxu0 0.0
    %1977 = vmatmul.mubr.f32.gmra.mxu0 %v170
    %v1978 = vpop.f32.mrf.mxu0
    %v1979 = vadd.f32 %v1901, %v1978
    %v1980 = vpop.f32.mrf.mxu0
    %1981 = vmatprep.mubr.f32.mxu0 0.0
    %1982 = vmatmul.mubr.f32.gmra.mxu0 %v173
    %v1983 = vpop.f32.mrf.mxu0
    %v1984 = vadd.f32 %v1901, %v1983
    %v1985 = vpop.f32.mrf.mxu0
    %1986 = vdwg.mxu0
    %s1987 = scalar_lea.vmem [#allocation10], 32
    %v1988 = vld [vmem:[%s1987] sm:$0xff]
    %v1989 = vld [vmem:[%s1987 + $0x8] sm:$0xff]
    %v1990 = vld [vmem:[%s1987 + $0x10] sm:$0xff]
    %v1991 = vld [vmem:[%s1987 + $0x18] sm:$0xff]
    %v1992 = vld [vmem:[%s6 + $0x1] sm:$0x1]
    %v1993 = vlaneseq
    %v1994 = vshrl.u32 %v1993, 7
    %v1995 = vsub.s32 0, %v1994
    %v1996 = vrot.slane %v1992, %v1995
    %1997 = vmatprep.subr.mxu0 0.0
    %1998 = vmatpush1.msra.mxu0 0.0
    %1999 = vmatprep.subr.mxu0 0.0
    %2000 = vmatpush1.msra.mxu0 0.0
    %2001 = vmatprep.subr.mxu0 0.0
    %2002 = vmatpush1.msra.mxu0 0.0
    %2003 = vmatprep.subr.mxu0 0.0
    %2004 = vmatpush1.msra.mxu0 0.0
    %2005 = vmatprep.subr.mxu0 0.0
    %2006 = vmatpush1.msra.mxu0 0.0
    %2007 = vmatprep.subr.mxu0 0.0
    %2008 = vmatpush1.msra.mxu0 0.0
    %2009 = vmatprep.subr.mxu0 0.0
    %2010 = vmatpush1.msra.mxu0 0.0
    %2011 = vmatprep.subr.mxu0 0.0
    %2012 = vmatpush1.msra.mxu0 0.0
    %2013 = vmatprep.subr.mxu0 0.0
    %2014 = vmatpush1.msra.mxu0 0.0
    %2015 = vmatprep.subr.mxu0 0.0
    %2016 = vmatpush1.msra.mxu0 0.0
    %2017 = vmatprep.subr.mxu0 0.0
    %2018 = vmatpush1.msra.mxu0 0.0
    %2019 = vmatprep.subr.mxu0 0.0
    %2020 = vmatpush1.msra.mxu0 0.0
    %2021 = vmatprep.subr.mxu0 0.0
    %2022 = vmatpush1.msra.mxu0 %v1991
    %2023 = vmatprep.subr.mxu0 0.0
    %2024 = vmatpush1.msra.mxu0 %v1990
    %2025 = vmatprep.subr.mxu0 0.0
    %2026 = vmatpush1.msra.mxu0 %v1989
    %2027 = vmatprep.subr.mxu0 0.0
    %2028 = vmatpush1.msra.mxu0 %v1988
    %2029 = vmatprep.subr.mxu0 0.0
    %2030 = vmatpush2.msra.mxu0 0.0
    %2031 = vmatprep.subr.mxu0 0.0
    %2032 = vmatpush2.msra.mxu0 0.0
    %2033 = vmatprep.subr.mxu0 0.0
    %2034 = vmatpush2.msra.mxu0 0.0
    %2035 = vmatprep.subr.mxu0 0.0
    %2036 = vmatpush2.msra.mxu0 0.0
    %2037 = vmatprep.subr.mxu0 0.0
    %2038 = vmatpush2.msra.mxu0 0.0
    %2039 = vmatprep.subr.mxu0 0.0
    %2040 = vmatpush2.msra.mxu0 0.0
    %2041 = vmatprep.subr.mxu0 0.0
    %2042 = vmatpush2.msra.mxu0 0.0
    %2043 = vmatprep.subr.mxu0 0.0
    %2044 = vmatpush2.msra.mxu0 0.0
    %2045 = vmatprep.subr.mxu0 0.0
    %2046 = vmatpush2.msra.mxu0 0.0
    %2047 = vmatprep.subr.mxu0 0.0
    %2048 = vmatpush2.msra.mxu0 0.0
    %2049 = vmatprep.subr.mxu0 0.0
    %2050 = vmatpush2.msra.mxu0 0.0
    %2051 = vmatprep.subr.mxu0 0.0
    %2052 = vmatpush2.msra.mxu0 0.0
    %2053 = vmatprep.subr.mxu0 0.0
    %2054 = vmatpush2.msra.mxu0 0.0
    %2055 = vmatprep.subr.mxu0 0.0
    %2056 = vmatpush2.msra.mxu0 0.0
    %2057 = vmatprep.subr.mxu0 0.0
    %2058 = vmatpush2.msra.mxu0 0.0
    %2059 = vmatprep.subr.mxu0 0.0
    %2060 = vmatpush2.msra.mxu0 0.0
    %2061 = vmatprep.mubr.f32.mxu0 0.0
    %2062 = vmatmul.mubr.f32.gmra.mxu0 %v270
    %v2063 = vpop.f32.mrf.mxu0
    %v2064 = vadd.f32 %v1996, %v2063
    %v2065 = vpop.f32.mrf.mxu0
    %2066 = vmatprep.mubr.f32.mxu0 0.0
    %2067 = vmatmul.mubr.f32.gmra.mxu0 %v273
    %v2068 = vpop.f32.mrf.mxu0
    %v2069 = vadd.f32 %v1996, %v2068
    %v2070 = vpop.f32.mrf.mxu0
    %2071 = vmatprep.mubr.f32.mxu0 0.0
    %2072 = vmatmul.mubr.f32.gmra.mxu0 %v276
    %v2073 = vpop.f32.mrf.mxu0
    %v2074 = vadd.f32 %v1996, %v2073
    %v2075 = vpop.f32.mrf.mxu0
    %2076 = vmatprep.mubr.f32.mxu0 0.0
    %2077 = vmatmul.mubr.f32.gmra.mxu0 %v279
    %v2078 = vpop.f32.mrf.mxu0
    %v2079 = vadd.f32 %v1996, %v2078
    %v2080 = vpop.f32.mrf.mxu0
    %2081 = vdwg.mxu0
    %s2082 = scalar_lea.vmem [#allocation11], 32
    %v2083 = vld [vmem:[%s2082] sm:$0xff]
    %v2084 = vld [vmem:[%s2082 + $0x8] sm:$0xff]
    %v2085 = vld [vmem:[%s2082 + $0x10] sm:$0xff]
    %v2086 = vld [vmem:[%s2082 + $0x18] sm:$0xff]
    %v2087 = vld [vmem:[%s8 + $0x1] sm:$0x1]
    %v2088 = vlaneseq
    %v2089 = vshrl.u32 %v2088, 7
    %v2090 = vsub.s32 0, %v2089
    %v2091 = vrot.slane %v2087, %v2090
    %2092 = vmatprep.subr.mxu0 0.0
    %2093 = vmatpush1.msra.mxu0 0.0
    %2094 = vmatprep.subr.mxu0 0.0
    %2095 = vmatpush1.msra.mxu0 0.0
    %2096 = vmatprep.subr.mxu0 0.0
    %2097 = vmatpush1.msra.mxu0 0.0
    %2098 = vmatprep.subr.mxu0 0.0
    %2099 = vmatpush1.msra.mxu0 0.0
    %2100 = vmatprep.subr.mxu0 0.0
    %2101 = vmatpush1.msra.mxu0 0.0
    %2102 = vmatprep.subr.mxu0 0.0
    %2103 = vmatpush1.msra.mxu0 0.0
    %2104 = vmatprep.subr.mxu0 0.0
    %2105 = vmatpush1.msra.mxu0 0.0
    %2106 = vmatprep.subr.mxu0 0.0
    %2107 = vmatpush1.msra.mxu0 0.0
    %2108 = vmatprep.subr.mxu0 0.0
    %2109 = vmatpush1.msra.mxu0 0.0
    %2110 = vmatprep.subr.mxu0 0.0
    %2111 = vmatpush1.msra.mxu0 0.0
    %2112 = vmatprep.subr.mxu0 0.0
    %2113 = vmatpush1.msra.mxu0 0.0
    %2114 = vmatprep.subr.mxu0 0.0
    %2115 = vmatpush1.msra.mxu0 0.0
    %2116 = vmatprep.subr.mxu0 0.0
    %2117 = vmatpush1.msra.mxu0 %v2086
    %2118 = vmatprep.subr.mxu0 0.0
    %2119 = vmatpush1.msra.mxu0 %v2085
    %2120 = vmatprep.subr.mxu0 0.0
    %2121 = vmatpush1.msra.mxu0 %v2084
    %2122 = vmatprep.subr.mxu0 0.0
    %2123 = vmatpush1.msra.mxu0 %v2083
    %2124 = vmatprep.subr.mxu0 0.0
    %2125 = vmatpush2.msra.mxu0 0.0
    %2126 = vmatprep.subr.mxu0 0.0
    %2127 = vmatpush2.msra.mxu0 0.0
    %2128 = vmatprep.subr.mxu0 0.0
    %2129 = vmatpush2.msra.mxu0 0.0
    %2130 = vmatprep.subr.mxu0 0.0
    %2131 = vmatpush2.msra.mxu0 0.0
    %2132 = vmatprep.subr.mxu0 0.0
    %2133 = vmatpush2.msra.mxu0 0.0
    %2134 = vmatprep.subr.mxu0 0.0
    %2135 = vmatpush2.msra.mxu0 0.0
    %2136 = vmatprep.subr.mxu0 0.0
    %2137 = vmatpush2.msra.mxu0 0.0
    %2138 = vmatprep.subr.mxu0 0.0
    %2139 = vmatpush2.msra.mxu0 0.0
    %2140 = vmatprep.subr.mxu0 0.0
    %2141 = vmatpush2.msra.mxu0 0.0
    %2142 = vmatprep.subr.mxu0 0.0
    %2143 = vmatpush2.msra.mxu0 0.0
    %2144 = vmatprep.subr.mxu0 0.0
    %2145 = vmatpush2.msra.mxu0 0.0
    %2146 = vmatprep.subr.mxu0 0.0
    %2147 = vmatpush2.msra.mxu0 0.0
    %2148 = vmatprep.subr.mxu0 0.0
    %2149 = vmatpush2.msra.mxu0 0.0
    %2150 = vmatprep.subr.mxu0 0.0
    %2151 = vmatpush2.msra.mxu0 0.0
    %2152 = vmatprep.subr.mxu0 0.0
    %2153 = vmatpush2.msra.mxu0 0.0
    %2154 = vmatprep.subr.mxu0 0.0
    %2155 = vmatpush2.msra.mxu0 0.0
    %2156 = vmatprep.mubr.f32.mxu0 0.0
    %2157 = vmatmul.mubr.f32.gmra.mxu0 %v376
    %v2158 = vpop.f32.mrf.mxu0
    %v2159 = vadd.f32 %v2091, %v2158
    %v2160 = vpop.f32.mrf.mxu0
    %2161 = vmatprep.mubr.f32.mxu0 0.0
    %2162 = vmatmul.mubr.f32.gmra.mxu0 %v379
    %v2163 = vpop.f32.mrf.mxu0
    %v2164 = vadd.f32 %v2091, %v2163
    %v2165 = vpop.f32.mrf.mxu0
    %2166 = vmatprep.mubr.f32.mxu0 0.0
    %2167 = vmatmul.mubr.f32.gmra.mxu0 %v382
    %v2168 = vpop.f32.mrf.mxu0
    %v2169 = vadd.f32 %v2091, %v2168
    %v2170 = vpop.f32.mrf.mxu0
    %2171 = vmatprep.mubr.f32.mxu0 0.0
    %2172 = vmatmul.mubr.f32.gmra.mxu0 %v385
    %v2173 = vpop.f32.mrf.mxu0
    %v2174 = vadd.f32 %v2091, %v2173
    %v2175 = vpop.f32.mrf.mxu0
    %2176 = vdwg.mxu0
    %v2181 = vcombine.high %v1969, %v1969
    %v2182 = vcombine.high %v1974, %v1974
    %v2183 = vcombine.high %v1979, %v1979
    %v2184 = vcombine.high %v1984, %v1984
    %v2189 = vcombine.high %v2064, %v2064
    %v2190 = vcombine.high %v2069, %v2069
    %v2191 = vcombine.high %v2074, %v2074
    %v2192 = vcombine.high %v2079, %v2079
    %v2197 = vcombine.high %v2159, %v2159
    %v2198 = vcombine.high %v2164, %v2164
    %v2199 = vcombine.high %v2169, %v2169
    %v2200 = vcombine.high %v2174, %v2174
    %v2201 = vsel %vm162, %v1969, 0
    %v2203 = vsel %vm162, %v2064, 0
    %2205 = vmatprep.subr.mxu0 0.0
    %2206 = vmatpush1.xpose.msra.mxu0 0.0
    %2207 = vmatprep.subr.mxu0 0.0
    %2208 = vmatpush1.xpose.msra.mxu0 0.0
    %2209 = vmatprep.subr.mxu0 0.0
    %2210 = vmatpush1.xpose.msra.mxu0 0.0
    %2211 = vmatprep.subr.mxu0 0.0
    %2212 = vmatpush1.xpose.msra.mxu0 0.0
    %2213 = vmatprep.subr.mxu0 0.0
    %2214 = vmatpush1.xpose.msra.mxu0 0.0
    %2215 = vmatprep.subr.mxu0 0.0
    %2216 = vmatpush1.xpose.msra.mxu0 0.0
    %2217 = vmatprep.subr.mxu0 0.0
    %2218 = vmatpush1.xpose.msra.mxu0 0.0
    %2219 = vmatprep.subr.mxu0 0.0
    %2220 = vmatpush1.xpose.msra.mxu0 0.0
    %2221 = vmatprep.subr.mxu0 0.0
    %2222 = vmatpush1.xpose.msra.mxu0 0.0
    %2223 = vmatprep.subr.mxu0 0.0
    %2224 = vmatpush1.xpose.msra.mxu0 0.0
    %2225 = vmatprep.subr.mxu0 0.0
    %2226 = vmatpush1.xpose.msra.mxu0 0.0
    %2227 = vmatprep.subr.mxu0 0.0
    %2228 = vmatpush1.xpose.msra.mxu0 0.0
    %2229 = vmatprep.subr.mxu0 0.0
    %2230 = vmatpush1.xpose.msra.mxu0 0.0
    %2231 = vmatprep.subr.mxu0 0.0
    %2232 = vmatpush1.xpose.msra.mxu0 0.0
    %2233 = vmatprep.subr.mxu0 0.0
    %2234 = vmatpush1.xpose.msra.mxu0 0.0
    %2235 = vmatprep.subr.mxu0 0.0
    %2236 = vmatpush1.xpose.msra.mxu0 %v2203
    %2237 = vmatprep.subr.mxu0 0.0
    %2238 = vmatpush2.xpose.msra.mxu0 0.0
    %2239 = vmatprep.subr.mxu0 0.0
    %2240 = vmatpush2.xpose.msra.mxu0 0.0
    %2241 = vmatprep.subr.mxu0 0.0
    %2242 = vmatpush2.xpose.msra.mxu0 0.0
    %2243 = vmatprep.subr.mxu0 0.0
    %2244 = vmatpush2.xpose.msra.mxu0 0.0
    %2245 = vmatprep.subr.mxu0 0.0
    %2246 = vmatpush2.xpose.msra.mxu0 0.0
    %2247 = vmatprep.subr.mxu0 0.0
    %2248 = vmatpush2.xpose.msra.mxu0 0.0
    %2249 = vmatprep.subr.mxu0 0.0
    %2250 = vmatpush2.xpose.msra.mxu0 0.0
    %2251 = vmatprep.subr.mxu0 0.0
    %2252 = vmatpush2.xpose.msra.mxu0 0.0
    %2253 = vmatprep.subr.mxu0 0.0
    %2254 = vmatpush2.xpose.msra.mxu0 0.0
    %2255 = vmatprep.subr.mxu0 0.0
    %2256 = vmatpush2.xpose.msra.mxu0 0.0
    %2257 = vmatprep.subr.mxu0 0.0
    %2258 = vmatpush2.xpose.msra.mxu0 0.0
    %2259 = vmatprep.subr.mxu0 0.0
    %2260 = vmatpush2.xpose.msra.mxu0 0.0
    %2261 = vmatprep.subr.mxu0 0.0
    %2262 = vmatpush2.xpose.msra.mxu0 0.0
    %2263 = vmatprep.subr.mxu0 0.0
    %2264 = vmatpush2.xpose.msra.mxu0 0.0
    %2265 = vmatprep.subr.mxu0 0.0
    %2266 = vmatpush2.xpose.msra.mxu0 0.0
    %2267 = vmatprep.subr.mxu0 0.0
    %2268 = vmatpush2.xpose.msra.mxu0 0.0
    %2269 = vmatprep.mubr.f32.mxu0 0.0
    %2270 = vmatmul.mubr.f32.gmra.mxu0 %v2201
    %v2271 = vpop.f32.mrf.mxu0
    %v2272 = vadd.f32 0.0, %v2271
    %v2273 = vpop.f32.mrf.mxu0
    %2274 = vdwg.mxu0
    %v2275 = vsel %vm162, %v2181, 0
    %v2277 = vsel %vm162, %v2189, 0
    %2279 = vmatprep.subr.mxu0 0.0
    %2280 = vmatpush1.xpose.msra.mxu0 0.0
    %2281 = vmatprep.subr.mxu0 0.0
    %2282 = vmatpush1.xpose.msra.mxu0 0.0
    %2283 = vmatprep.subr.mxu0 0.0
    %2284 = vmatpush1.xpose.msra.mxu0 0.0
    %2285 = vmatprep.subr.mxu0 0.0
    %2286 = vmatpush1.xpose.msra.mxu0 0.0
    %2287 = vmatprep.subr.mxu0 0.0
    %2288 = vmatpush1.xpose.msra.mxu0 0.0
    %2289 = vmatprep.subr.mxu0 0.0
    %2290 = vmatpush1.xpose.msra.mxu0 0.0
    %2291 = vmatprep.subr.mxu0 0.0
    %2292 = vmatpush1.xpose.msra.mxu0 0.0
    %2293 = vmatprep.subr.mxu0 0.0
    %2294 = vmatpush1.xpose.msra.mxu0 0.0
    %2295 = vmatprep.subr.mxu0 0.0
    %2296 = vmatpush1.xpose.msra.mxu0 0.0
    %2297 = vmatprep.subr.mxu0 0.0
    %2298 = vmatpush1.xpose.msra.mxu0 0.0
    %2299 = vmatprep.subr.mxu0 0.0
    %2300 = vmatpush1.xpose.msra.mxu0 0.0
    %2301 = vmatprep.subr.mxu0 0.0
    %2302 = vmatpush1.xpose.msra.mxu0 0.0
    %2303 = vmatprep.subr.mxu0 0.0
    %2304 = vmatpush1.xpose.msra.mxu0 0.0
    %2305 = vmatprep.subr.mxu0 0.0
    %2306 = vmatpush1.xpose.msra.mxu0 0.0
    %2307 = vmatprep.subr.mxu0 0.0
    %2308 = vmatpush1.xpose.msra.mxu0 0.0
    %2309 = vmatprep.subr.mxu0 0.0
    %2310 = vmatpush1.xpose.msra.mxu0 %v2277
    %2311 = vmatprep.subr.mxu0 0.0
    %2312 = vmatpush2.xpose.msra.mxu0 0.0
    %2313 = vmatprep.subr.mxu0 0.0
    %2314 = vmatpush2.xpose.msra.mxu0 0.0
    %2315 = vmatprep.subr.mxu0 0.0
    %2316 = vmatpush2.xpose.msra.mxu0 0.0
    %2317 = vmatprep.subr.mxu0 0.0
    %2318 = vmatpush2.xpose.msra.mxu0 0.0
    %2319 = vmatprep.subr.mxu0 0.0
    %2320 = vmatpush2.xpose.msra.mxu0 0.0
    %2321 = vmatprep.subr.mxu0 0.0
    %2322 = vmatpush2.xpose.msra.mxu0 0.0
    %2323 = vmatprep.subr.mxu0 0.0
    %2324 = vmatpush2.xpose.msra.mxu0 0.0
    %2325 = vmatprep.subr.mxu0 0.0
    %2326 = vmatpush2.xpose.msra.mxu0 0.0
    %2327 = vmatprep.subr.mxu0 0.0
    %2328 = vmatpush2.xpose.msra.mxu0 0.0
    %2329 = vmatprep.subr.mxu0 0.0
    %2330 = vmatpush2.xpose.msra.mxu0 0.0
    %2331 = vmatprep.subr.mxu0 0.0
    %2332 = vmatpush2.xpose.msra.mxu0 0.0
    %2333 = vmatprep.subr.mxu0 0.0
    %2334 = vmatpush2.xpose.msra.mxu0 0.0
    %2335 = vmatprep.subr.mxu0 0.0
    %2336 = vmatpush2.xpose.msra.mxu0 0.0
    %2337 = vmatprep.subr.mxu0 0.0
    %2338 = vmatpush2.xpose.msra.mxu0 0.0
    %2339 = vmatprep.subr.mxu0 0.0
    %2340 = vmatpush2.xpose.msra.mxu0 0.0
    %2341 = vmatprep.subr.mxu0 0.0
    %2342 = vmatpush2.xpose.msra.mxu0 0.0
    %2343 = vmatprep.mubr.f32.mxu0 0.0
    %2344 = vmatmul.mubr.f32.gmra.mxu0 %v2275
    %v2345 = vpop.f32.mrf.mxu0
    %v2346 = vadd.f32 0.0, %v2345
    %v2347 = vpop.f32.mrf.mxu0
    %2348 = vdwg.mxu0
    %v2349 = vsel %vm162, %v1974, 0
    %v2351 = vsel %vm162, %v2069, 0
    %2353 = vmatprep.subr.mxu0 0.0
    %2354 = vmatpush1.xpose.msra.mxu0 0.0
    %2355 = vmatprep.subr.mxu0 0.0
    %2356 = vmatpush1.xpose.msra.mxu0 0.0
    %2357 = vmatprep.subr.mxu0 0.0
    %2358 = vmatpush1.xpose.msra.mxu0 0.0
    %2359 = vmatprep.subr.mxu0 0.0
    %2360 = vmatpush1.xpose.msra.mxu0 0.0
    %2361 = vmatprep.subr.mxu0 0.0
    %2362 = vmatpush1.xpose.msra.mxu0 0.0
    %2363 = vmatprep.subr.mxu0 0.0
    %2364 = vmatpush1.xpose.msra.mxu0 0.0
    %2365 = vmatprep.subr.mxu0 0.0
    %2366 = vmatpush1.xpose.msra.mxu0 0.0
    %2367 = vmatprep.subr.mxu0 0.0
    %2368 = vmatpush1.xpose.msra.mxu0 0.0
    %2369 = vmatprep.subr.mxu0 0.0
    %2370 = vmatpush1.xpose.msra.mxu0 0.0
    %2371 = vmatprep.subr.mxu0 0.0
    %2372 = vmatpush1.xpose.msra.mxu0 0.0
    %2373 = vmatprep.subr.mxu0 0.0
    %2374 = vmatpush1.xpose.msra.mxu0 0.0
    %2375 = vmatprep.subr.mxu0 0.0
    %2376 = vmatpush1.xpose.msra.mxu0 0.0
    %2377 = vmatprep.subr.mxu0 0.0
    %2378 = vmatpush1.xpose.msra.mxu0 0.0
    %2379 = vmatprep.subr.mxu0 0.0
    %2380 = vmatpush1.xpose.msra.mxu0 0.0
    %2381 = vmatprep.subr.mxu0 0.0
    %2382 = vmatpush1.xpose.msra.mxu0 0.0
    %2383 = vmatprep.subr.mxu0 0.0
    %2384 = vmatpush1.xpose.msra.mxu0 %v2351
    %2385 = vmatprep.subr.mxu0 0.0
    %2386 = vmatpush2.xpose.msra.mxu0 0.0
    %2387 = vmatprep.subr.mxu0 0.0
    %2388 = vmatpush2.xpose.msra.mxu0 0.0
    %2389 = vmatprep.subr.mxu0 0.0
    %2390 = vmatpush2.xpose.msra.mxu0 0.0
    %2391 = vmatprep.subr.mxu0 0.0
    %2392 = vmatpush2.xpose.msra.mxu0 0.0
    %2393 = vmatprep.subr.mxu0 0.0
    %2394 = vmatpush2.xpose.msra.mxu0 0.0
    %2395 = vmatprep.subr.mxu0 0.0
    %2396 = vmatpush2.xpose.msra.mxu0 0.0
    %2397 = vmatprep.subr.mxu0 0.0
    %2398 = vmatpush2.xpose.msra.mxu0 0.0
    %2399 = vmatprep.subr.mxu0 0.0
    %2400 = vmatpush2.xpose.msra.mxu0 0.0
    %2401 = vmatprep.subr.mxu0 0.0
    %2402 = vmatpush2.xpose.msra.mxu0 0.0
    %2403 = vmatprep.subr.mxu0 0.0
    %2404 = vmatpush2.xpose.msra.mxu0 0.0
    %2405 = vmatprep.subr.mxu0 0.0
    %2406 = vmatpush2.xpose.msra.mxu0 0.0
    %2407 = vmatprep.subr.mxu0 0.0
    %2408 = vmatpush2.xpose.msra.mxu0 0.0
    %2409 = vmatprep.subr.mxu0 0.0
    %2410 = vmatpush2.xpose.msra.mxu0 0.0
    %2411 = vmatprep.subr.mxu0 0.0
    %2412 = vmatpush2.xpose.msra.mxu0 0.0
    %2413 = vmatprep.subr.mxu0 0.0
    %2414 = vmatpush2.xpose.msra.mxu0 0.0
    %2415 = vmatprep.subr.mxu0 0.0
    %2416 = vmatpush2.xpose.msra.mxu0 0.0
    %2417 = vmatprep.mubr.f32.mxu0 0.0
    %2418 = vmatmul.mubr.f32.gmra.mxu0 %v2349
    %v2419 = vpop.f32.mrf.mxu0
    %v2420 = vadd.f32 0.0, %v2419
    %v2421 = vpop.f32.mrf.mxu0
    %2422 = vdwg.mxu0
    %v2423 = vsel %vm162, %v2182, 0
    %v2425 = vsel %vm162, %v2190, 0
    %2427 = vmatprep.subr.mxu0 0.0
    %2428 = vmatpush1.xpose.msra.mxu0 0.0
    %2429 = vmatprep.subr.mxu0 0.0
    %2430 = vmatpush1.xpose.msra.mxu0 0.0
    %2431 = vmatprep.subr.mxu0 0.0
    %2432 = vmatpush1.xpose.msra.mxu0 0.0
    %2433 = vmatprep.subr.mxu0 0.0
    %2434 = vmatpush1.xpose.msra.mxu0 0.0
    %2435 = vmatprep.subr.mxu0 0.0
    %2436 = vmatpush1.xpose.msra.mxu0 0.0
    %2437 = vmatprep.subr.mxu0 0.0
    %2438 = vmatpush1.xpose.msra.mxu0 0.0
    %2439 = vmatprep.subr.mxu0 0.0
    %2440 = vmatpush1.xpose.msra.mxu0 0.0
    %2441 = vmatprep.subr.mxu0 0.0
    %2442 = vmatpush1.xpose.msra.mxu0 0.0
    %2443 = vmatprep.subr.mxu0 0.0
    %2444 = vmatpush1.xpose.msra.mxu0 0.0
    %2445 = vmatprep.subr.mxu0 0.0
    %2446 = vmatpush1.xpose.msra.mxu0 0.0
    %2447 = vmatprep.subr.mxu0 0.0
    %2448 = vmatpush1.xpose.msra.mxu0 0.0
    %2449 = vmatprep.subr.mxu0 0.0
    %2450 = vmatpush1.xpose.msra.mxu0 0.0
    %2451 = vmatprep.subr.mxu0 0.0
    %2452 = vmatpush1.xpose.msra.mxu0 0.0
    %2453 = vmatprep.subr.mxu0 0.0
    %2454 = vmatpush1.xpose.msra.mxu0 0.0
    %2455 = vmatprep.subr.mxu0 0.0
    %2456 = vmatpush1.xpose.msra.mxu0 0.0
    %2457 = vmatprep.subr.mxu0 0.0
    %2458 = vmatpush1.xpose.msra.mxu0 %v2425
    %2459 = vmatprep.subr.mxu0 0.0
    %2460 = vmatpush2.xpose.msra.mxu0 0.0
    %2461 = vmatprep.subr.mxu0 0.0
    %2462 = vmatpush2.xpose.msra.mxu0 0.0
    %2463 = vmatprep.subr.mxu0 0.0
    %2464 = vmatpush2.xpose.msra.mxu0 0.0
    %2465 = vmatprep.subr.mxu0 0.0
    %2466 = vmatpush2.xpose.msra.mxu0 0.0
    %2467 = vmatprep.subr.mxu0 0.0
    %2468 = vmatpush2.xpose.msra.mxu0 0.0
    %2469 = vmatprep.subr.mxu0 0.0
    %2470 = vmatpush2.xpose.msra.mxu0 0.0
    %2471 = vmatprep.subr.mxu0 0.0
    %2472 = vmatpush2.xpose.msra.mxu0 0.0
    %2473 = vmatprep.subr.mxu0 0.0
    %2474 = vmatpush2.xpose.msra.mxu0 0.0
    %2475 = vmatprep.subr.mxu0 0.0
    %2476 = vmatpush2.xpose.msra.mxu0 0.0
    %2477 = vmatprep.subr.mxu0 0.0
    %2478 = vmatpush2.xpose.msra.mxu0 0.0
    %2479 = vmatprep.subr.mxu0 0.0
    %2480 = vmatpush2.xpose.msra.mxu0 0.0
    %2481 = vmatprep.subr.mxu0 0.0
    %2482 = vmatpush2.xpose.msra.mxu0 0.0
    %2483 = vmatprep.subr.mxu0 0.0
    %2484 = vmatpush2.xpose.msra.mxu0 0.0
    %2485 = vmatprep.subr.mxu0 0.0
    %2486 = vmatpush2.xpose.msra.mxu0 0.0
    %2487 = vmatprep.subr.mxu0 0.0
    %2488 = vmatpush2.xpose.msra.mxu0 0.0
    %2489 = vmatprep.subr.mxu0 0.0
    %2490 = vmatpush2.xpose.msra.mxu0 0.0
    %2491 = vmatprep.mubr.f32.mxu0 0.0
    %2492 = vmatmul.mubr.f32.gmra.mxu0 %v2423
    %v2493 = vpop.f32.mrf.mxu0
    %v2494 = vadd.f32 0.0, %v2493
    %v2495 = vpop.f32.mrf.mxu0
    %2496 = vdwg.mxu0
    %v2497 = vsel %vm162, %v1979, 0
    %v2499 = vsel %vm162, %v2074, 0
    %2501 = vmatprep.subr.mxu0 0.0
    %2502 = vmatpush1.xpose.msra.mxu0 0.0
    %2503 = vmatprep.subr.mxu0 0.0
    %2504 = vmatpush1.xpose.msra.mxu0 0.0
    %2505 = vmatprep.subr.mxu0 0.0
    %2506 = vmatpush1.xpose.msra.mxu0 0.0
    %2507 = vmatprep.subr.mxu0 0.0
    %2508 = vmatpush1.xpose.msra.mxu0 0.0
    %2509 = vmatprep.subr.mxu0 0.0
    %2510 = vmatpush1.xpose.msra.mxu0 0.0
    %2511 = vmatprep.subr.mxu0 0.0
    %2512 = vmatpush1.xpose.msra.mxu0 0.0
    %2513 = vmatprep.subr.mxu0 0.0
    %2514 = vmatpush1.xpose.msra.mxu0 0.0
    %2515 = vmatprep.subr.mxu0 0.0
    %2516 = vmatpush1.xpose.msra.mxu0 0.0
    %2517 = vmatprep.subr.mxu0 0.0
    %2518 = vmatpush1.xpose.msra.mxu0 0.0
    %2519 = vmatprep.subr.mxu0 0.0
    %2520 = vmatpush1.xpose.msra.mxu0 0.0
    %2521 = vmatprep.subr.mxu0 0.0
    %2522 = vmatpush1.xpose.msra.mxu0 0.0
    %2523 = vmatprep.subr.mxu0 0.0
    %2524 = vmatpush1.xpose.msra.mxu0 0.0
    %2525 = vmatprep.subr.mxu0 0.0
    %2526 = vmatpush1.xpose.msra.mxu0 0.0
    %2527 = vmatprep.subr.mxu0 0.0
    %2528 = vmatpush1.xpose.msra.mxu0 0.0
    %2529 = vmatprep.subr.mxu0 0.0
    %2530 = vmatpush1.xpose.msra.mxu0 0.0
    %2531 = vmatprep.subr.mxu0 0.0
    %2532 = vmatpush1.xpose.msra.mxu0 %v2499
    %2533 = vmatprep.subr.mxu0 0.0
    %2534 = vmatpush2.xpose.msra.mxu0 0.0
    %2535 = vmatprep.subr.mxu0 0.0
    %2536 = vmatpush2.xpose.msra.mxu0 0.0
    %2537 = vmatprep.subr.mxu0 0.0
    %2538 = vmatpush2.xpose.msra.mxu0 0.0
    %2539 = vmatprep.subr.mxu0 0.0
    %2540 = vmatpush2.xpose.msra.mxu0 0.0
    %2541 = vmatprep.subr.mxu0 0.0
    %2542 = vmatpush2.xpose.msra.mxu0 0.0
    %2543 = vmatprep.subr.mxu0 0.0
    %2544 = vmatpush2.xpose.msra.mxu0 0.0
    %2545 = vmatprep.subr.mxu0 0.0
    %2546 = vmatpush2.xpose.msra.mxu0 0.0
    %2547 = vmatprep.subr.mxu0 0.0
    %2548 = vmatpush2.xpose.msra.mxu0 0.0
    %2549 = vmatprep.subr.mxu0 0.0
    %2550 = vmatpush2.xpose.msra.mxu0 0.0
    %2551 = vmatprep.subr.mxu0 0.0
    %2552 = vmatpush2.xpose.msra.mxu0 0.0
    %2553 = vmatprep.subr.mxu0 0.0
    %2554 = vmatpush2.xpose.msra.mxu0 0.0
    %2555 = vmatprep.subr.mxu0 0.0
    %2556 = vmatpush2.xpose.msra.mxu0 0.0
    %2557 = vmatprep.subr.mxu0 0.0
    %2558 = vmatpush2.xpose.msra.mxu0 0.0
    %2559 = vmatprep.subr.mxu0 0.0
    %2560 = vmatpush2.xpose.msra.mxu0 0.0
    %2561 = vmatprep.subr.mxu0 0.0
    %2562 = vmatpush2.xpose.msra.mxu0 0.0
    %2563 = vmatprep.subr.mxu0 0.0
    %2564 = vmatpush2.xpose.msra.mxu0 0.0
    %2565 = vmatprep.mubr.f32.mxu0 0.0
    %2566 = vmatmul.mubr.f32.gmra.mxu0 %v2497
    %v2567 = vpop.f32.mrf.mxu0
    %v2568 = vadd.f32 0.0, %v2567
    %v2569 = vpop.f32.mrf.mxu0
    %2570 = vdwg.mxu0
    %v2571 = vsel %vm162, %v2183, 0
    %v2573 = vsel %vm162, %v2191, 0
    %2575 = vmatprep.subr.mxu0 0.0
    %2576 = vmatpush1.xpose.msra.mxu0 0.0
    %2577 = vmatprep.subr.mxu0 0.0
    %2578 = vmatpush1.xpose.msra.mxu0 0.0
    %2579 = vmatprep.subr.mxu0 0.0
    %2580 = vmatpush1.xpose.msra.mxu0 0.0
    %2581 = vmatprep.subr.mxu0 0.0
    %2582 = vmatpush1.xpose.msra.mxu0 0.0
    %2583 = vmatprep.subr.mxu0 0.0
    %2584 = vmatpush1.xpose.msra.mxu0 0.0
    %2585 = vmatprep.subr.mxu0 0.0
    %2586 = vmatpush1.xpose.msra.mxu0 0.0
    %2587 = vmatprep.subr.mxu0 0.0
    %2588 = vmatpush1.xpose.msra.mxu0 0.0
    %2589 = vmatprep.subr.mxu0 0.0
    %2590 = vmatpush1.xpose.msra.mxu0 0.0
    %2591 = vmatprep.subr.mxu0 0.0
    %2592 = vmatpush1.xpose.msra.mxu0 0.0
    %2593 = vmatprep.subr.mxu0 0.0
    %2594 = vmatpush1.xpose.msra.mxu0 0.0
    %2595 = vmatprep.subr.mxu0 0.0
    %2596 = vmatpush1.xpose.msra.mxu0 0.0
    %2597 = vmatprep.subr.mxu0 0.0
    %2598 = vmatpush1.xpose.msra.mxu0 0.0
    %2599 = vmatprep.subr.mxu0 0.0
    %2600 = vmatpush1.xpose.msra.mxu0 0.0
    %2601 = vmatprep.subr.mxu0 0.0
    %2602 = vmatpush1.xpose.msra.mxu0 0.0
    %2603 = vmatprep.subr.mxu0 0.0
    %2604 = vmatpush1.xpose.msra.mxu0 0.0
    %2605 = vmatprep.subr.mxu0 0.0
    %2606 = vmatpush1.xpose.msra.mxu0 %v2573
    %2607 = vmatprep.subr.mxu0 0.0
    %2608 = vmatpush2.xpose.msra.mxu0 0.0
    %2609 = vmatprep.subr.mxu0 0.0
    %2610 = vmatpush2.xpose.msra.mxu0 0.0
    %2611 = vmatprep.subr.mxu0 0.0
    %2612 = vmatpush2.xpose.msra.mxu0 0.0
    %2613 = vmatprep.subr.mxu0 0.0
    %2614 = vmatpush2.xpose.msra.mxu0 0.0
    %2615 = vmatprep.subr.mxu0 0.0
    %2616 = vmatpush2.xpose.msra.mxu0 0.0
    %2617 = vmatprep.subr.mxu0 0.0
    %2618 = vmatpush2.xpose.msra.mxu0 0.0
    %2619 = vmatprep.subr.mxu0 0.0
    %2620 = vmatpush2.xpose.msra.mxu0 0.0
    %2621 = vmatprep.subr.mxu0 0.0
    %2622 = vmatpush2.xpose.msra.mxu0 0.0
    %2623 = vmatprep.subr.mxu0 0.0
    %2624 = vmatpush2.xpose.msra.mxu0 0.0
    %2625 = vmatprep.subr.mxu0 0.0
    %2626 = vmatpush2.xpose.msra.mxu0 0.0
    %2627 = vmatprep.subr.mxu0 0.0
    %2628 = vmatpush2.xpose.msra.mxu0 0.0
    %2629 = vmatprep.subr.mxu0 0.0
    %2630 = vmatpush2.xpose.msra.mxu0 0.0
    %2631 = vmatprep.subr.mxu0 0.0
    %2632 = vmatpush2.xpose.msra.mxu0 0.0
    %2633 = vmatprep.subr.mxu0 0.0
    %2634 = vmatpush2.xpose.msra.mxu0 0.0
    %2635 = vmatprep.subr.mxu0 0.0
    %2636 = vmatpush2.xpose.msra.mxu0 0.0
    %2637 = vmatprep.subr.mxu0 0.0
    %2638 = vmatpush2.xpose.msra.mxu0 0.0
    %2639 = vmatprep.mubr.f32.mxu0 0.0
    %2640 = vmatmul.mubr.f32.gmra.mxu0 %v2571
    %v2641 = vpop.f32.mrf.mxu0
    %v2642 = vadd.f32 0.0, %v2641
    %v2643 = vpop.f32.mrf.mxu0
    %2644 = vdwg.mxu0
    %v2645 = vsel %vm162, %v1984, 0
    %v2647 = vsel %vm162, %v2079, 0
    %2649 = vmatprep.subr.mxu0 0.0
    %2650 = vmatpush1.xpose.msra.mxu0 0.0
    %2651 = vmatprep.subr.mxu0 0.0
    %2652 = vmatpush1.xpose.msra.mxu0 0.0
    %2653 = vmatprep.subr.mxu0 0.0
    %2654 = vmatpush1.xpose.msra.mxu0 0.0
    %2655 = vmatprep.subr.mxu0 0.0
    %2656 = vmatpush1.xpose.msra.mxu0 0.0
    %2657 = vmatprep.subr.mxu0 0.0
    %2658 = vmatpush1.xpose.msra.mxu0 0.0
    %2659 = vmatprep.subr.mxu0 0.0
    %2660 = vmatpush1.xpose.msra.mxu0 0.0
    %2661 = vmatprep.subr.mxu0 0.0
    %2662 = vmatpush1.xpose.msra.mxu0 0.0
    %2663 = vmatprep.subr.mxu0 0.0
    %2664 = vmatpush1.xpose.msra.mxu0 0.0
    %2665 = vmatprep.subr.mxu0 0.0
    %2666 = vmatpush1.xpose.msra.mxu0 0.0
    %2667 = vmatprep.subr.mxu0 0.0
    %2668 = vmatpush1.xpose.msra.mxu0 0.0
    %2669 = vmatprep.subr.mxu0 0.0
    %2670 = vmatpush1.xpose.msra.mxu0 0.0
    %2671 = vmatprep.subr.mxu0 0.0
    %2672 = vmatpush1.xpose.msra.mxu0 0.0
    %2673 = vmatprep.subr.mxu0 0.0
    %2674 = vmatpush1.xpose.msra.mxu0 0.0
    %2675 = vmatprep.subr.mxu0 0.0
    %2676 = vmatpush1.xpose.msra.mxu0 0.0
    %2677 = vmatprep.subr.mxu0 0.0
    %2678 = vmatpush1.xpose.msra.mxu0 0.0
    %2679 = vmatprep.subr.mxu0 0.0
    %2680 = vmatpush1.xpose.msra.mxu0 %v2647
    %2681 = vmatprep.subr.mxu0 0.0
    %2682 = vmatpush2.xpose.msra.mxu0 0.0
    %2683 = vmatprep.subr.mxu0 0.0
    %2684 = vmatpush2.xpose.msra.mxu0 0.0
    %2685 = vmatprep.subr.mxu0 0.0
    %2686 = vmatpush2.xpose.msra.mxu0 0.0
    %2687 = vmatprep.subr.mxu0 0.0
    %2688 = vmatpush2.xpose.msra.mxu0 0.0
    %2689 = vmatprep.subr.mxu0 0.0
    %2690 = vmatpush2.xpose.msra.mxu0 0.0
    %2691 = vmatprep.subr.mxu0 0.0
    %2692 = vmatpush2.xpose.msra.mxu0 0.0
    %2693 = vmatprep.subr.mxu0 0.0
    %2694 = vmatpush2.xpose.msra.mxu0 0.0
    %2695 = vmatprep.subr.mxu0 0.0
    %2696 = vmatpush2.xpose.msra.mxu0 0.0
    %2697 = vmatprep.subr.mxu0 0.0
    %2698 = vmatpush2.xpose.msra.mxu0 0.0
    %2699 = vmatprep.subr.mxu0 0.0
    %2700 = vmatpush2.xpose.msra.mxu0 0.0
    %2701 = vmatprep.subr.mxu0 0.0
    %2702 = vmatpush2.xpose.msra.mxu0 0.0
    %2703 = vmatprep.subr.mxu0 0.0
    %2704 = vmatpush2.xpose.msra.mxu0 0.0
    %2705 = vmatprep.subr.mxu0 0.0
    %2706 = vmatpush2.xpose.msra.mxu0 0.0
    %2707 = vmatprep.subr.mxu0 0.0
    %2708 = vmatpush2.xpose.msra.mxu0 0.0
    %2709 = vmatprep.subr.mxu0 0.0
    %2710 = vmatpush2.xpose.msra.mxu0 0.0
    %2711 = vmatprep.subr.mxu0 0.0
    %2712 = vmatpush2.xpose.msra.mxu0 0.0
    %2713 = vmatprep.mubr.f32.mxu0 0.0
    %2714 = vmatmul.mubr.f32.gmra.mxu0 %v2645
    %v2715 = vpop.f32.mrf.mxu0
    %v2716 = vadd.f32 0.0, %v2715
    %v2717 = vpop.f32.mrf.mxu0
    %2718 = vdwg.mxu0
    %v2719 = vsel %vm162, %v2184, 0
    %v2721 = vsel %vm162, %v2192, 0
    %2723 = vmatprep.subr.mxu0 0.0
    %2724 = vmatpush1.xpose.msra.mxu0 0.0
    %2725 = vmatprep.subr.mxu0 0.0
    %2726 = vmatpush1.xpose.msra.mxu0 0.0
    %2727 = vmatprep.subr.mxu0 0.0
    %2728 = vmatpush1.xpose.msra.mxu0 0.0
    %2729 = vmatprep.subr.mxu0 0.0
    %2730 = vmatpush1.xpose.msra.mxu0 0.0
    %2731 = vmatprep.subr.mxu0 0.0
    %2732 = vmatpush1.xpose.msra.mxu0 0.0
    %2733 = vmatprep.subr.mxu0 0.0
    %2734 = vmatpush1.xpose.msra.mxu0 0.0
    %2735 = vmatprep.subr.mxu0 0.0
    %2736 = vmatpush1.xpose.msra.mxu0 0.0
    %2737 = vmatprep.subr.mxu0 0.0
    %2738 = vmatpush1.xpose.msra.mxu0 0.0
    %2739 = vmatprep.subr.mxu0 0.0
    %2740 = vmatpush1.xpose.msra.mxu0 0.0
    %2741 = vmatprep.subr.mxu0 0.0
    %2742 = vmatpush1.xpose.msra.mxu0 0.0
    %2743 = vmatprep.subr.mxu0 0.0
    %2744 = vmatpush1.xpose.msra.mxu0 0.0
    %2745 = vmatprep.subr.mxu0 0.0
    %2746 = vmatpush1.xpose.msra.mxu0 0.0
    %2747 = vmatprep.subr.mxu0 0.0
    %2748 = vmatpush1.xpose.msra.mxu0 0.0
    %2749 = vmatprep.subr.mxu0 0.0
    %2750 = vmatpush1.xpose.msra.mxu0 0.0
    %2751 = vmatprep.subr.mxu0 0.0
    %2752 = vmatpush1.xpose.msra.mxu0 0.0
    %2753 = vmatprep.subr.mxu0 0.0
    %2754 = vmatpush1.xpose.msra.mxu0 %v2721
    %2755 = vmatprep.subr.mxu0 0.0
    %2756 = vmatpush2.xpose.msra.mxu0 0.0
    %2757 = vmatprep.subr.mxu0 0.0
    %2758 = vmatpush2.xpose.msra.mxu0 0.0
    %2759 = vmatprep.subr.mxu0 0.0
    %2760 = vmatpush2.xpose.msra.mxu0 0.0
    %2761 = vmatprep.subr.mxu0 0.0
    %2762 = vmatpush2.xpose.msra.mxu0 0.0
    %2763 = vmatprep.subr.mxu0 0.0
    %2764 = vmatpush2.xpose.msra.mxu0 0.0
    %2765 = vmatprep.subr.mxu0 0.0
    %2766 = vmatpush2.xpose.msra.mxu0 0.0
    %2767 = vmatprep.subr.mxu0 0.0
    %2768 = vmatpush2.xpose.msra.mxu0 0.0
    %2769 = vmatprep.subr.mxu0 0.0
    %2770 = vmatpush2.xpose.msra.mxu0 0.0
    %2771 = vmatprep.subr.mxu0 0.0
    %2772 = vmatpush2.xpose.msra.mxu0 0.0
    %2773 = vmatprep.subr.mxu0 0.0
    %2774 = vmatpush2.xpose.msra.mxu0 0.0
    %2775 = vmatprep.subr.mxu0 0.0
    %2776 = vmatpush2.xpose.msra.mxu0 0.0
    %2777 = vmatprep.subr.mxu0 0.0
    %2778 = vmatpush2.xpose.msra.mxu0 0.0
    %2779 = vmatprep.subr.mxu0 0.0
    %2780 = vmatpush2.xpose.msra.mxu0 0.0
    %2781 = vmatprep.subr.mxu0 0.0
    %2782 = vmatpush2.xpose.msra.mxu0 0.0
    %2783 = vmatprep.subr.mxu0 0.0
    %2784 = vmatpush2.xpose.msra.mxu0 0.0
    %2785 = vmatprep.subr.mxu0 0.0
    %2786 = vmatpush2.xpose.msra.mxu0 0.0
    %2787 = vmatprep.mubr.f32.mxu0 0.0
    %2788 = vmatmul.mubr.f32.gmra.mxu0 %v2719
    %v2789 = vpop.f32.mrf.mxu0
    %v2790 = vadd.f32 0.0, %v2789
    %v2791 = vpop.f32.mrf.mxu0
    %2792 = vdwg.mxu0
    %v2793 = vsel %vm1088, %v2272, -inf
    %2794 = vmax.xlane.f32.xlu0 %v2793
    %v2795 = vpop.xlane.xlu0 %2794
    %v2796 = vsel %vm1088, %v2346, -inf
    %2797 = vmax.xlane.f32.xlu0 %v2796
    %v2798 = vpop.xlane.xlu0 %2797
    %v2799 = vsel %vm1088, %v2420, -inf
    %2800 = vmax.xlane.f32.xlu0 %v2799
    %v2801 = vpop.xlane.xlu0 %2800
    %v2802 = vsel %vm1088, %v2494, -inf
    %2803 = vmax.xlane.f32.xlu0 %v2802
    %v2804 = vpop.xlane.xlu0 %2803
    %v2805 = vsel %vm1088, %v2568, -inf
    %2806 = vmax.xlane.f32.xlu0 %v2805
    %v2807 = vpop.xlane.xlu0 %2806
    %v2808 = vsel %vm1088, %v2642, -inf
    %2809 = vmax.xlane.f32.xlu0 %v2808
    %v2810 = vpop.xlane.xlu0 %2809
    %v2811 = vsel %vm1088, %v2716, -inf
    %2812 = vmax.xlane.f32.xlu0 %v2811
    %v2813 = vpop.xlane.xlu0 %2812
    %v2814 = vsel %vm1088, %v2790, -inf
    %2815 = vmax.xlane.f32.xlu0 %v2814
    %v2816 = vpop.xlane.xlu0 %2815
    %v2817 = vsub.f32 %v2272, %v2795
    %v2818 = vsub.f32 %v2346, %v2798
    %v2819 = vsub.f32 %v2420, %v2801
    %v2820 = vsub.f32 %v2494, %v2804
    %v2821 = vsub.f32 %v2568, %v2807
    %v2822 = vsub.f32 %v2642, %v2810
    %v2823 = vsub.f32 %v2716, %v2813
    %v2824 = vsub.f32 %v2790, %v2816
    %v2825 = vmul.f32 %v2817, 1.442695
    %v2826 = vpow.pop %v2825
    %v2827 = vmul.f32 %v2818, 1.442695
    %v2828 = vpow.pop %v2827
    %v2829 = vmul.f32 %v2819, 1.442695
    %v2830 = vpow.pop %v2829
    %v2831 = vmul.f32 %v2820, 1.442695
    %v2832 = vpow.pop %v2831
    %v2833 = vmul.f32 %v2821, 1.442695
    %v2834 = vpow.pop %v2833
    %v2835 = vmul.f32 %v2822, 1.442695
    %v2836 = vpow.pop %v2835
    %v2837 = vmul.f32 %v2823, 1.442695
    %v2838 = vpow.pop %v2837
    %v2839 = vmul.f32 %v2824, 1.442695
    %v2840 = vpow.pop %v2839
    %v2841 = vsel %vm1088, %v2826, 0.0
    %2842 = vadd.xlane.f32.xlu0 %v2841
    %v2843 = vpop.xlane.xlu0 %2842
    %v2844 = vsel %vm1088, %v2828, 0.0
    %2845 = vadd.xlane.f32.xlu0 %v2844
    %v2846 = vpop.xlane.xlu0 %2845
    %v2847 = vsel %vm1088, %v2830, 0.0
    %2848 = vadd.xlane.f32.xlu0 %v2847
    %v2849 = vpop.xlane.xlu0 %2848
    %v2850 = vsel %vm1088, %v2832, 0.0
    %2851 = vadd.xlane.f32.xlu0 %v2850
    %v2852 = vpop.xlane.xlu0 %2851
    %v2853 = vsel %vm1088, %v2834, 0.0
    %2854 = vadd.xlane.f32.xlu0 %v2853
    %v2855 = vpop.xlane.xlu0 %2854
    %v2856 = vsel %vm1088, %v2836, 0.0
    %2857 = vadd.xlane.f32.xlu0 %v2856
    %v2858 = vpop.xlane.xlu0 %2857
    %v2859 = vsel %vm1088, %v2838, 0.0
    %2860 = vadd.xlane.f32.xlu0 %v2859
    %v2861 = vpop.xlane.xlu0 %2860
    %v2862 = vsel %vm1088, %v2840, 0.0
    %2863 = vadd.xlane.f32.xlu0 %v2862
    %v2864 = vpop.xlane.xlu0 %2863
    %v2865 = vrcp.pop %v2843
    %v2866 = vrcp.pop %v2846
    %v2867 = vrcp.pop %v2849
    %v2868 = vrcp.pop %v2852
    %v2869 = vrcp.pop %v2855
    %v2870 = vrcp.pop %v2858
    %v2871 = vrcp.pop %v2861
    %v2872 = vrcp.pop %v2864
    %v2873 = vmul.f32 %v2826, %v2865
    %v2874 = vmul.f32 %v2828, %v2866
    %v2875 = vmul.f32 %v2830, %v2867
    %v2876 = vmul.f32 %v2832, %v2868
    %v2877 = vmul.f32 %v2834, %v2869
    %v2878 = vmul.f32 %v2836, %v2870
    %v2879 = vmul.f32 %v2838, %v2871
    %v2880 = vmul.f32 %v2840, %v2872
    %v2882 = vsel %vm1177, %v2873, 0
    %v2884 = vsel %vm1181, %v2159, 0
    %2886 = vmatprep.subr.mxu0 0.0
    %2887 = vmatpush1.msra.mxu0 0.0
    %2888 = vmatprep.subr.mxu0 0.0
    %2889 = vmatpush1.msra.mxu0 0.0
    %2890 = vmatprep.subr.mxu0 0.0
    %2891 = vmatpush1.msra.mxu0 0.0
    %2892 = vmatprep.subr.mxu0 0.0
    %2893 = vmatpush1.msra.mxu0 0.0
    %2894 = vmatprep.subr.mxu0 0.0
    %2895 = vmatpush1.msra.mxu0 0.0
    %2896 = vmatprep.subr.mxu0 0.0
    %2897 = vmatpush1.msra.mxu0 0.0
    %2898 = vmatprep.subr.mxu0 0.0
    %2899 = vmatpush1.msra.mxu0 0.0
    %2900 = vmatprep.subr.mxu0 0.0
    %2901 = vmatpush1.msra.mxu0 0.0
    %2902 = vmatprep.subr.mxu0 0.0
    %2903 = vmatpush1.msra.mxu0 0.0
    %2904 = vmatprep.subr.mxu0 0.0
    %2905 = vmatpush1.msra.mxu0 0.0
    %2906 = vmatprep.subr.mxu0 0.0
    %2907 = vmatpush1.msra.mxu0 0.0
    %2908 = vmatprep.subr.mxu0 0.0
    %2909 = vmatpush1.msra.mxu0 0.0
    %2910 = vmatprep.subr.mxu0 0.0
    %2911 = vmatpush1.msra.mxu0 0.0
    %2912 = vmatprep.subr.mxu0 0.0
    %2913 = vmatpush1.msra.mxu0 0.0
    %2914 = vmatprep.subr.mxu0 0.0
    %2915 = vmatpush1.msra.mxu0 0.0
    %2916 = vmatprep.subr.mxu0 0.0
    %2917 = vmatpush1.msra.mxu0 %v2884
    %2918 = vmatprep.subr.mxu0 0.0
    %2919 = vmatpush2.msra.mxu0 0.0
    %2920 = vmatprep.subr.mxu0 0.0
    %2921 = vmatpush2.msra.mxu0 0.0
    %2922 = vmatprep.subr.mxu0 0.0
    %2923 = vmatpush2.msra.mxu0 0.0
    %2924 = vmatprep.subr.mxu0 0.0
    %2925 = vmatpush2.msra.mxu0 0.0
    %2926 = vmatprep.subr.mxu0 0.0
    %2927 = vmatpush2.msra.mxu0 0.0
    %2928 = vmatprep.subr.mxu0 0.0
    %2929 = vmatpush2.msra.mxu0 0.0
    %2930 = vmatprep.subr.mxu0 0.0
    %2931 = vmatpush2.msra.mxu0 0.0
    %2932 = vmatprep.subr.mxu0 0.0
    %2933 = vmatpush2.msra.mxu0 0.0
    %2934 = vmatprep.subr.mxu0 0.0
    %2935 = vmatpush2.msra.mxu0 0.0
    %2936 = vmatprep.subr.mxu0 0.0
    %2937 = vmatpush2.msra.mxu0 0.0
    %2938 = vmatprep.subr.mxu0 0.0
    %2939 = vmatpush2.msra.mxu0 0.0
    %2940 = vmatprep.subr.mxu0 0.0
    %2941 = vmatpush2.msra.mxu0 0.0
    %2942 = vmatprep.subr.mxu0 0.0
    %2943 = vmatpush2.msra.mxu0 0.0
    %2944 = vmatprep.subr.mxu0 0.0
    %2945 = vmatpush2.msra.mxu0 0.0
    %2946 = vmatprep.subr.mxu0 0.0
    %2947 = vmatpush2.msra.mxu0 0.0
    %2948 = vmatprep.subr.mxu0 0.0
    %2949 = vmatpush2.msra.mxu0 0.0
    %2950 = vmatprep.mubr.f32.mxu0 0.0
    %2951 = vmatmul.mubr.f32.gmra.mxu0 %v2882
    %v2952 = vpop.f32.mrf.mxu0
    %v2953 = vadd.f32 0.0, %v2952
    %v2954 = vpop.f32.mrf.mxu0
    %2955 = vdwg.mxu0
    %v2957 = vsel %vm1177, %v2874, 0
    %v2959 = vsel %vm1181, %v2197, 0
    %2961 = vmatprep.subr.mxu0 0.0
    %2962 = vmatpush1.msra.mxu0 0.0
    %2963 = vmatprep.subr.mxu0 0.0
    %2964 = vmatpush1.msra.mxu0 0.0
    %2965 = vmatprep.subr.mxu0 0.0
    %2966 = vmatpush1.msra.mxu0 0.0
    %2967 = vmatprep.subr.mxu0 0.0
    %2968 = vmatpush1.msra.mxu0 0.0
    %2969 = vmatprep.subr.mxu0 0.0
    %2970 = vmatpush1.msra.mxu0 0.0
    %2971 = vmatprep.subr.mxu0 0.0
    %2972 = vmatpush1.msra.mxu0 0.0
    %2973 = vmatprep.subr.mxu0 0.0
    %2974 = vmatpush1.msra.mxu0 0.0
    %2975 = vmatprep.subr.mxu0 0.0
    %2976 = vmatpush1.msra.mxu0 0.0
    %2977 = vmatprep.subr.mxu0 0.0
    %2978 = vmatpush1.msra.mxu0 0.0
    %2979 = vmatprep.subr.mxu0 0.0
    %2980 = vmatpush1.msra.mxu0 0.0
    %2981 = vmatprep.subr.mxu0 0.0
    %2982 = vmatpush1.msra.mxu0 0.0
    %2983 = vmatprep.subr.mxu0 0.0
    %2984 = vmatpush1.msra.mxu0 0.0
    %2985 = vmatprep.subr.mxu0 0.0
    %2986 = vmatpush1.msra.mxu0 0.0
    %2987 = vmatprep.subr.mxu0 0.0
    %2988 = vmatpush1.msra.mxu0 0.0
    %2989 = vmatprep.subr.mxu0 0.0
    %2990 = vmatpush1.msra.mxu0 0.0
    %2991 = vmatprep.subr.mxu0 0.0
    %2992 = vmatpush1.msra.mxu0 %v2959
    %2993 = vmatprep.subr.mxu0 0.0
    %2994 = vmatpush2.msra.mxu0 0.0
    %2995 = vmatprep.subr.mxu0 0.0
    %2996 = vmatpush2.msra.mxu0 0.0
    %2997 = vmatprep.subr.mxu0 0.0
    %2998 = vmatpush2.msra.mxu0 0.0
    %2999 = vmatprep.subr.mxu0 0.0
    %3000 = vmatpush2.msra.mxu0 0.0
    %3001 = vmatprep.subr.mxu0 0.0
    %3002 = vmatpush2.msra.mxu0 0.0
    %3003 = vmatprep.subr.mxu0 0.0
    %3004 = vmatpush2.msra.mxu0 0.0
    %3005 = vmatprep.subr.mxu0 0.0
    %3006 = vmatpush2.msra.mxu0 0.0
    %3007 = vmatprep.subr.mxu0 0.0
    %3008 = vmatpush2.msra.mxu0 0.0
    %3009 = vmatprep.subr.mxu0 0.0
    %3010 = vmatpush2.msra.mxu0 0.0
    %3011 = vmatprep.subr.mxu0 0.0
    %3012 = vmatpush2.msra.mxu0 0.0
    %3013 = vmatprep.subr.mxu0 0.0
    %3014 = vmatpush2.msra.mxu0 0.0
    %3015 = vmatprep.subr.mxu0 0.0
    %3016 = vmatpush2.msra.mxu0 0.0
    %3017 = vmatprep.subr.mxu0 0.0
    %3018 = vmatpush2.msra.mxu0 0.0
    %3019 = vmatprep.subr.mxu0 0.0
    %3020 = vmatpush2.msra.mxu0 0.0
    %3021 = vmatprep.subr.mxu0 0.0
    %3022 = vmatpush2.msra.mxu0 0.0
    %3023 = vmatprep.subr.mxu0 0.0
    %3024 = vmatpush2.msra.mxu0 0.0
    %3025 = vmatprep.mubr.f32.mxu0 0.0
    %3026 = vmatmul.mubr.f32.gmra.mxu0 %v2957
    %v3027 = vpop.f32.mrf.mxu0
    %v3028 = vadd.f32 0.0, %v3027
    %v3029 = vpop.f32.mrf.mxu0
    %3030 = vdwg.mxu0
    %v3032 = vsel %vm1177, %v2875, 0
    %v3034 = vsel %vm1181, %v2164, 0
    %3036 = vmatprep.subr.mxu0 0.0
    %3037 = vmatpush1.msra.mxu0 0.0
    %3038 = vmatprep.subr.mxu0 0.0
    %3039 = vmatpush1.msra.mxu0 0.0
    %3040 = vmatprep.subr.mxu0 0.0
    %3041 = vmatpush1.msra.mxu0 0.0
    %3042 = vmatprep.subr.mxu0 0.0
    %3043 = vmatpush1.msra.mxu0 0.0
    %3044 = vmatprep.subr.mxu0 0.0
    %3045 = vmatpush1.msra.mxu0 0.0
    %3046 = vmatprep.subr.mxu0 0.0
    %3047 = vmatpush1.msra.mxu0 0.0
    %3048 = vmatprep.subr.mxu0 0.0
    %3049 = vmatpush1.msra.mxu0 0.0
    %3050 = vmatprep.subr.mxu0 0.0
    %3051 = vmatpush1.msra.mxu0 0.0
    %3052 = vmatprep.subr.mxu0 0.0
    %3053 = vmatpush1.msra.mxu0 0.0
    %3054 = vmatprep.subr.mxu0 0.0
    %3055 = vmatpush1.msra.mxu0 0.0
    %3056 = vmatprep.subr.mxu0 0.0
    %3057 = vmatpush1.msra.mxu0 0.0
    %3058 = vmatprep.subr.mxu0 0.0
    %3059 = vmatpush1.msra.mxu0 0.0
    %3060 = vmatprep.subr.mxu0 0.0
    %3061 = vmatpush1.msra.mxu0 0.0
    %3062 = vmatprep.subr.mxu0 0.0
    %3063 = vmatpush1.msra.mxu0 0.0
    %3064 = vmatprep.subr.mxu0 0.0
    %3065 = vmatpush1.msra.mxu0 0.0
    %3066 = vmatprep.subr.mxu0 0.0
    %3067 = vmatpush1.msra.mxu0 %v3034
    %3068 = vmatprep.subr.mxu0 0.0
    %3069 = vmatpush2.msra.mxu0 0.0
    %3070 = vmatprep.subr.mxu0 0.0
    %3071 = vmatpush2.msra.mxu0 0.0
    %3072 = vmatprep.subr.mxu0 0.0
    %3073 = vmatpush2.msra.mxu0 0.0
    %3074 = vmatprep.subr.mxu0 0.0
    %3075 = vmatpush2.msra.mxu0 0.0
    %3076 = vmatprep.subr.mxu0 0.0
    %3077 = vmatpush2.msra.mxu0 0.0
    %3078 = vmatprep.subr.mxu0 0.0
    %3079 = vmatpush2.msra.mxu0 0.0
    %3080 = vmatprep.subr.mxu0 0.0
    %3081 = vmatpush2.msra.mxu0 0.0
    %3082 = vmatprep.subr.mxu0 0.0
    %3083 = vmatpush2.msra.mxu0 0.0
    %3084 = vmatprep.subr.mxu0 0.0
    %3085 = vmatpush2.msra.mxu0 0.0
    %3086 = vmatprep.subr.mxu0 0.0
    %3087 = vmatpush2.msra.mxu0 0.0
    %3088 = vmatprep.subr.mxu0 0.0
    %3089 = vmatpush2.msra.mxu0 0.0
    %3090 = vmatprep.subr.mxu0 0.0
    %3091 = vmatpush2.msra.mxu0 0.0
    %3092 = vmatprep.subr.mxu0 0.0
    %3093 = vmatpush2.msra.mxu0 0.0
    %3094 = vmatprep.subr.mxu0 0.0
    %3095 = vmatpush2.msra.mxu0 0.0
    %3096 = vmatprep.subr.mxu0 0.0
    %3097 = vmatpush2.msra.mxu0 0.0
    %3098 = vmatprep.subr.mxu0 0.0
    %3099 = vmatpush2.msra.mxu0 0.0
    %3100 = vmatprep.mubr.f32.mxu0 0.0
    %3101 = vmatmul.mubr.f32.gmra.mxu0 %v3032
    %v3102 = vpop.f32.mrf.mxu0
    %v3103 = vadd.f32 0.0, %v3102
    %v3104 = vpop.f32.mrf.mxu0
    %3105 = vdwg.mxu0
    %v3107 = vsel %vm1177, %v2876, 0
    %v3109 = vsel %vm1181, %v2198, 0
    %3111 = vmatprep.subr.mxu0 0.0
    %3112 = vmatpush1.msra.mxu0 0.0
    %3113 = vmatprep.subr.mxu0 0.0
    %3114 = vmatpush1.msra.mxu0 0.0
    %3115 = vmatprep.subr.mxu0 0.0
    %3116 = vmatpush1.msra.mxu0 0.0
    %3117 = vmatprep.subr.mxu0 0.0
    %3118 = vmatpush1.msra.mxu0 0.0
    %3119 = vmatprep.subr.mxu0 0.0
    %3120 = vmatpush1.msra.mxu0 0.0
    %3121 = vmatprep.subr.mxu0 0.0
    %3122 = vmatpush1.msra.mxu0 0.0
    %3123 = vmatprep.subr.mxu0 0.0
    %3124 = vmatpush1.msra.mxu0 0.0
    %3125 = vmatprep.subr.mxu0 0.0
    %3126 = vmatpush1.msra.mxu0 0.0
    %3127 = vmatprep.subr.mxu0 0.0
    %3128 = vmatpush1.msra.mxu0 0.0
    %3129 = vmatprep.subr.mxu0 0.0
    %3130 = vmatpush1.msra.mxu0 0.0
    %3131 = vmatprep.subr.mxu0 0.0
    %3132 = vmatpush1.msra.mxu0 0.0
    %3133 = vmatprep.subr.mxu0 0.0
    %3134 = vmatpush1.msra.mxu0 0.0
    %3135 = vmatprep.subr.mxu0 0.0
    %3136 = vmatpush1.msra.mxu0 0.0
    %3137 = vmatprep.subr.mxu0 0.0
    %3138 = vmatpush1.msra.mxu0 0.0
    %3139 = vmatprep.subr.mxu0 0.0
    %3140 = vmatpush1.msra.mxu0 0.0
    %3141 = vmatprep.subr.mxu0 0.0
    %3142 = vmatpush1.msra.mxu0 %v3109
    %3143 = vmatprep.subr.mxu0 0.0
    %3144 = vmatpush2.msra.mxu0 0.0
    %3145 = vmatprep.subr.mxu0 0.0
    %3146 = vmatpush2.msra.mxu0 0.0
    %3147 = vmatprep.subr.mxu0 0.0
    %3148 = vmatpush2.msra.mxu0 0.0
    %3149 = vmatprep.subr.mxu0 0.0
    %3150 = vmatpush2.msra.mxu0 0.0
    %3151 = vmatprep.subr.mxu0 0.0
    %3152 = vmatpush2.msra.mxu0 0.0
    %3153 = vmatprep.subr.mxu0 0.0
    %3154 = vmatpush2.msra.mxu0 0.0
    %3155 = vmatprep.subr.mxu0 0.0
    %3156 = vmatpush2.msra.mxu0 0.0
    %3157 = vmatprep.subr.mxu0 0.0
    %3158 = vmatpush2.msra.mxu0 0.0
    %3159 = vmatprep.subr.mxu0 0.0
    %3160 = vmatpush2.msra.mxu0 0.0
    %3161 = vmatprep.subr.mxu0 0.0
    %3162 = vmatpush2.msra.mxu0 0.0
    %3163 = vmatprep.subr.mxu0 0.0
    %3164 = vmatpush2.msra.mxu0 0.0
    %3165 = vmatprep.subr.mxu0 0.0
    %3166 = vmatpush2.msra.mxu0 0.0
    %3167 = vmatprep.subr.mxu0 0.0
    %3168 = vmatpush2.msra.mxu0 0.0
    %3169 = vmatprep.subr.mxu0 0.0
    %3170 = vmatpush2.msra.mxu0 0.0
    %3171 = vmatprep.subr.mxu0 0.0
    %3172 = vmatpush2.msra.mxu0 0.0
    %3173 = vmatprep.subr.mxu0 0.0
    %3174 = vmatpush2.msra.mxu0 0.0
    %3175 = vmatprep.mubr.f32.mxu0 0.0
    %3176 = vmatmul.mubr.f32.gmra.mxu0 %v3107
    %v3177 = vpop.f32.mrf.mxu0
    %v3178 = vadd.f32 0.0, %v3177
    %v3179 = vpop.f32.mrf.mxu0
    %3180 = vdwg.mxu0
    %v3182 = vsel %vm1177, %v2877, 0
    %v3184 = vsel %vm1181, %v2169, 0
    %3186 = vmatprep.subr.mxu0 0.0
    %3187 = vmatpush1.msra.mxu0 0.0
    %3188 = vmatprep.subr.mxu0 0.0
    %3189 = vmatpush1.msra.mxu0 0.0
    %3190 = vmatprep.subr.mxu0 0.0
    %3191 = vmatpush1.msra.mxu0 0.0
    %3192 = vmatprep.subr.mxu0 0.0
    %3193 = vmatpush1.msra.mxu0 0.0
    %3194 = vmatprep.subr.mxu0 0.0
    %3195 = vmatpush1.msra.mxu0 0.0
    %3196 = vmatprep.subr.mxu0 0.0
    %3197 = vmatpush1.msra.mxu0 0.0
    %3198 = vmatprep.subr.mxu0 0.0
    %3199 = vmatpush1.msra.mxu0 0.0
    %3200 = vmatprep.subr.mxu0 0.0
    %3201 = vmatpush1.msra.mxu0 0.0
    %3202 = vmatprep.subr.mxu0 0.0
    %3203 = vmatpush1.msra.mxu0 0.0
    %3204 = vmatprep.subr.mxu0 0.0
    %3205 = vmatpush1.msra.mxu0 0.0
    %3206 = vmatprep.subr.mxu0 0.0
    %3207 = vmatpush1.msra.mxu0 0.0
    %3208 = vmatprep.subr.mxu0 0.0
    %3209 = vmatpush1.msra.mxu0 0.0
    %3210 = vmatprep.subr.mxu0 0.0
    %3211 = vmatpush1.msra.mxu0 0.0
    %3212 = vmatprep.subr.mxu0 0.0
    %3213 = vmatpush1.msra.mxu0 0.0
    %3214 = vmatprep.subr.mxu0 0.0
    %3215 = vmatpush1.msra.mxu0 0.0
    %3216 = vmatprep.subr.mxu0 0.0
    %3217 = vmatpush1.msra.mxu0 %v3184
    %3218 = vmatprep.subr.mxu0 0.0
    %3219 = vmatpush2.msra.mxu0 0.0
    %3220 = vmatprep.subr.mxu0 0.0
    %3221 = vmatpush2.msra.mxu0 0.0
    %3222 = vmatprep.subr.mxu0 0.0
    %3223 = vmatpush2.msra.mxu0 0.0
    %3224 = vmatprep.subr.mxu0 0.0
    %3225 = vmatpush2.msra.mxu0 0.0
    %3226 = vmatprep.subr.mxu0 0.0
    %3227 = vmatpush2.msra.mxu0 0.0
    %3228 = vmatprep.subr.mxu0 0.0
    %3229 = vmatpush2.msra.mxu0 0.0
    %3230 = vmatprep.subr.mxu0 0.0
    %3231 = vmatpush2.msra.mxu0 0.0
    %3232 = vmatprep.subr.mxu0 0.0
    %3233 = vmatpush2.msra.mxu0 0.0
    %3234 = vmatprep.subr.mxu0 0.0
    %3235 = vmatpush2.msra.mxu0 0.0
    %3236 = vmatprep.subr.mxu0 0.0
    %3237 = vmatpush2.msra.mxu0 0.0
    %3238 = vmatprep.subr.mxu0 0.0
    %3239 = vmatpush2.msra.mxu0 0.0
    %3240 = vmatprep.subr.mxu0 0.0
    %3241 = vmatpush2.msra.mxu0 0.0
    %3242 = vmatprep.subr.mxu0 0.0
    %3243 = vmatpush2.msra.mxu0 0.0
    %3244 = vmatprep.subr.mxu0 0.0
    %3245 = vmatpush2.msra.mxu0 0.0
    %3246 = vmatprep.subr.mxu0 0.0
    %3247 = vmatpush2.msra.mxu0 0.0
    %3248 = vmatprep.subr.mxu0 0.0
    %3249 = vmatpush2.msra.mxu0 0.0
    %3250 = vmatprep.mubr.f32.mxu0 0.0
    %3251 = vmatmul.mubr.f32.gmra.mxu0 %v3182
    %v3252 = vpop.f32.mrf.mxu0
    %v3253 = vadd.f32 0.0, %v3252
    %v3254 = vpop.f32.mrf.mxu0
    %3255 = vdwg.mxu0
    %v3257 = vsel %vm1177, %v2878, 0
    %v3259 = vsel %vm1181, %v2199, 0
    %3261 = vmatprep.subr.mxu0 0.0
    %3262 = vmatpush1.msra.mxu0 0.0
    %3263 = vmatprep.subr.mxu0 0.0
    %3264 = vmatpush1.msra.mxu0 0.0
    %3265 = vmatprep.subr.mxu0 0.0
    %3266 = vmatpush1.msra.mxu0 0.0
    %3267 = vmatprep.subr.mxu0 0.0
    %3268 = vmatpush1.msra.mxu0 0.0
    %3269 = vmatprep.subr.mxu0 0.0
    %3270 = vmatpush1.msra.mxu0 0.0
    %3271 = vmatprep.subr.mxu0 0.0
    %3272 = vmatpush1.msra.mxu0 0.0
    %3273 = vmatprep.subr.mxu0 0.0
    %3274 = vmatpush1.msra.mxu0 0.0
    %3275 = vmatprep.subr.mxu0 0.0
    %3276 = vmatpush1.msra.mxu0 0.0
    %3277 = vmatprep.subr.mxu0 0.0
    %3278 = vmatpush1.msra.mxu0 0.0
    %3279 = vmatprep.subr.mxu0 0.0
    %3280 = vmatpush1.msra.mxu0 0.0
    %3281 = vmatprep.subr.mxu0 0.0
    %3282 = vmatpush1.msra.mxu0 0.0
    %3283 = vmatprep.subr.mxu0 0.0
    %3284 = vmatpush1.msra.mxu0 0.0
    %3285 = vmatprep.subr.mxu0 0.0
    %3286 = vmatpush1.msra.mxu0 0.0
    %3287 = vmatprep.subr.mxu0 0.0
    %3288 = vmatpush1.msra.mxu0 0.0
    %3289 = vmatprep.subr.mxu0 0.0
    %3290 = vmatpush1.msra.mxu0 0.0
    %3291 = vmatprep.subr.mxu0 0.0
    %3292 = vmatpush1.msra.mxu0 %v3259
    %3293 = vmatprep.subr.mxu0 0.0
    %3294 = vmatpush2.msra.mxu0 0.0
    %3295 = vmatprep.subr.mxu0 0.0
    %3296 = vmatpush2.msra.mxu0 0.0
    %3297 = vmatprep.subr.mxu0 0.0
    %3298 = vmatpush2.msra.mxu0 0.0
    %3299 = vmatprep.subr.mxu0 0.0
    %3300 = vmatpush2.msra.mxu0 0.0
    %3301 = vmatprep.subr.mxu0 0.0
    %3302 = vmatpush2.msra.mxu0 0.0
    %3303 = vmatprep.subr.mxu0 0.0
    %3304 = vmatpush2.msra.mxu0 0.0
    %3305 = vmatprep.subr.mxu0 0.0
    %3306 = vmatpush2.msra.mxu0 0.0
    %3307 = vmatprep.subr.mxu0 0.0
    %3308 = vmatpush2.msra.mxu0 0.0
    %3309 = vmatprep.subr.mxu0 0.0
    %3310 = vmatpush2.msra.mxu0 0.0
    %3311 = vmatprep.subr.mxu0 0.0
    %3312 = vmatpush2.msra.mxu0 0.0
    %3313 = vmatprep.subr.mxu0 0.0
    %3314 = vmatpush2.msra.mxu0 0.0
    %3315 = vmatprep.subr.mxu0 0.0
    %3316 = vmatpush2.msra.mxu0 0.0
    %3317 = vmatprep.subr.mxu0 0.0
    %3318 = vmatpush2.msra.mxu0 0.0
    %3319 = vmatprep.subr.mxu0 0.0
    %3320 = vmatpush2.msra.mxu0 0.0
    %3321 = vmatprep.subr.mxu0 0.0
    %3322 = vmatpush2.msra.mxu0 0.0
    %3323 = vmatprep.subr.mxu0 0.0
    %3324 = vmatpush2.msra.mxu0 0.0
    %3325 = vmatprep.mubr.f32.mxu0 0.0
    %3326 = vmatmul.mubr.f32.gmra.mxu0 %v3257
    %v3327 = vpop.f32.mrf.mxu0
    %v3328 = vadd.f32 0.0, %v3327
    %v3329 = vpop.f32.mrf.mxu0
    %3330 = vdwg.mxu0
    %v3332 = vsel %vm1177, %v2879, 0
    %v3334 = vsel %vm1181, %v2174, 0
    %3336 = vmatprep.subr.mxu0 0.0
    %3337 = vmatpush1.msra.mxu0 0.0
    %3338 = vmatprep.subr.mxu0 0.0
    %3339 = vmatpush1.msra.mxu0 0.0
    %3340 = vmatprep.subr.mxu0 0.0
    %3341 = vmatpush1.msra.mxu0 0.0
    %3342 = vmatprep.subr.mxu0 0.0
    %3343 = vmatpush1.msra.mxu0 0.0
    %3344 = vmatprep.subr.mxu0 0.0
    %3345 = vmatpush1.msra.mxu0 0.0
    %3346 = vmatprep.subr.mxu0 0.0
    %3347 = vmatpush1.msra.mxu0 0.0
    %3348 = vmatprep.subr.mxu0 0.0
    %3349 = vmatpush1.msra.mxu0 0.0
    %3350 = vmatprep.subr.mxu0 0.0
    %3351 = vmatpush1.msra.mxu0 0.0
    %3352 = vmatprep.subr.mxu0 0.0
    %3353 = vmatpush1.msra.mxu0 0.0
    %3354 = vmatprep.subr.mxu0 0.0
    %3355 = vmatpush1.msra.mxu0 0.0
    %3356 = vmatprep.subr.mxu0 0.0
    %3357 = vmatpush1.msra.mxu0 0.0
    %3358 = vmatprep.subr.mxu0 0.0
    %3359 = vmatpush1.msra.mxu0 0.0
    %3360 = vmatprep.subr.mxu0 0.0
    %3361 = vmatpush1.msra.mxu0 0.0
    %3362 = vmatprep.subr.mxu0 0.0
    %3363 = vmatpush1.msra.mxu0 0.0
    %3364 = vmatprep.subr.mxu0 0.0
    %3365 = vmatpush1.msra.mxu0 0.0
    %3366 = vmatprep.subr.mxu0 0.0
    %3367 = vmatpush1.msra.mxu0 %v3334
    %3368 = vmatprep.subr.mxu0 0.0
    %3369 = vmatpush2.msra.mxu0 0.0
    %3370 = vmatprep.subr.mxu0 0.0
    %3371 = vmatpush2.msra.mxu0 0.0
    %3372 = vmatprep.subr.mxu0 0.0
    %3373 = vmatpush2.msra.mxu0 0.0
    %3374 = vmatprep.subr.mxu0 0.0
    %3375 = vmatpush2.msra.mxu0 0.0
    %3376 = vmatprep.subr.mxu0 0.0
    %3377 = vmatpush2.msra.mxu0 0.0
    %3378 = vmatprep.subr.mxu0 0.0
    %3379 = vmatpush2.msra.mxu0 0.0
    %3380 = vmatprep.subr.mxu0 0.0
    %3381 = vmatpush2.msra.mxu0 0.0
    %3382 = vmatprep.subr.mxu0 0.0
    %3383 = vmatpush2.msra.mxu0 0.0
    %3384 = vmatprep.subr.mxu0 0.0
    %3385 = vmatpush2.msra.mxu0 0.0
    %3386 = vmatprep.subr.mxu0 0.0
    %3387 = vmatpush2.msra.mxu0 0.0
    %3388 = vmatprep.subr.mxu0 0.0
    %3389 = vmatpush2.msra.mxu0 0.0
    %3390 = vmatprep.subr.mxu0 0.0
    %3391 = vmatpush2.msra.mxu0 0.0
    %3392 = vmatprep.subr.mxu0 0.0
    %3393 = vmatpush2.msra.mxu0 0.0
    %3394 = vmatprep.subr.mxu0 0.0
    %3395 = vmatpush2.msra.mxu0 0.0
    %3396 = vmatprep.subr.mxu0 0.0
    %3397 = vmatpush2.msra.mxu0 0.0
    %3398 = vmatprep.subr.mxu0 0.0
    %3399 = vmatpush2.msra.mxu0 0.0
    %3400 = vmatprep.mubr.f32.mxu0 0.0
    %3401 = vmatmul.mubr.f32.gmra.mxu0 %v3332
    %v3402 = vpop.f32.mrf.mxu0
    %v3403 = vadd.f32 0.0, %v3402
    %v3404 = vpop.f32.mrf.mxu0
    %3405 = vdwg.mxu0
    %v3407 = vsel %vm1177, %v2880, 0
    %v3409 = vsel %vm1181, %v2200, 0
    %3411 = vmatprep.subr.mxu0 0.0
    %3412 = vmatpush1.msra.mxu0 0.0
    %3413 = vmatprep.subr.mxu0 0.0
    %3414 = vmatpush1.msra.mxu0 0.0
    %3415 = vmatprep.subr.mxu0 0.0
    %3416 = vmatpush1.msra.mxu0 0.0
    %3417 = vmatprep.subr.mxu0 0.0
    %3418 = vmatpush1.msra.mxu0 0.0
    %3419 = vmatprep.subr.mxu0 0.0
    %3420 = vmatpush1.msra.mxu0 0.0
    %3421 = vmatprep.subr.mxu0 0.0
    %3422 = vmatpush1.msra.mxu0 0.0
    %3423 = vmatprep.subr.mxu0 0.0
    %3424 = vmatpush1.msra.mxu0 0.0
    %3425 = vmatprep.subr.mxu0 0.0
    %3426 = vmatpush1.msra.mxu0 0.0
    %3427 = vmatprep.subr.mxu0 0.0
    %3428 = vmatpush1.msra.mxu0 0.0
    %3429 = vmatprep.subr.mxu0 0.0
    %3430 = vmatpush1.msra.mxu0 0.0
    %3431 = vmatprep.subr.mxu0 0.0
    %3432 = vmatpush1.msra.mxu0 0.0
    %3433 = vmatprep.subr.mxu0 0.0
    %3434 = vmatpush1.msra.mxu0 0.0
    %3435 = vmatprep.subr.mxu0 0.0
    %3436 = vmatpush1.msra.mxu0 0.0
    %3437 = vmatprep.subr.mxu0 0.0
    %3438 = vmatpush1.msra.mxu0 0.0
    %3439 = vmatprep.subr.mxu0 0.0
    %3440 = vmatpush1.msra.mxu0 0.0
    %3441 = vmatprep.subr.mxu0 0.0
    %3442 = vmatpush1.msra.mxu0 %v3409
    %3443 = vmatprep.subr.mxu0 0.0
    %3444 = vmatpush2.msra.mxu0 0.0
    %3445 = vmatprep.subr.mxu0 0.0
    %3446 = vmatpush2.msra.mxu0 0.0
    %3447 = vmatprep.subr.mxu0 0.0
    %3448 = vmatpush2.msra.mxu0 0.0
    %3449 = vmatprep.subr.mxu0 0.0
    %3450 = vmatpush2.msra.mxu0 0.0
    %3451 = vmatprep.subr.mxu0 0.0
    %3452 = vmatpush2.msra.mxu0 0.0
    %3453 = vmatprep.subr.mxu0 0.0
    %3454 = vmatpush2.msra.mxu0 0.0
    %3455 = vmatprep.subr.mxu0 0.0
    %3456 = vmatpush2.msra.mxu0 0.0
    %3457 = vmatprep.subr.mxu0 0.0
    %3458 = vmatpush2.msra.mxu0 0.0
    %3459 = vmatprep.subr.mxu0 0.0
    %3460 = vmatpush2.msra.mxu0 0.0
    %3461 = vmatprep.subr.mxu0 0.0
    %3462 = vmatpush2.msra.mxu0 0.0
    %3463 = vmatprep.subr.mxu0 0.0
    %3464 = vmatpush2.msra.mxu0 0.0
    %3465 = vmatprep.subr.mxu0 0.0
    %3466 = vmatpush2.msra.mxu0 0.0
    %3467 = vmatprep.subr.mxu0 0.0
    %3468 = vmatpush2.msra.mxu0 0.0
    %3469 = vmatprep.subr.mxu0 0.0
    %3470 = vmatpush2.msra.mxu0 0.0
    %3471 = vmatprep.subr.mxu0 0.0
    %3472 = vmatpush2.msra.mxu0 0.0
    %3473 = vmatprep.subr.mxu0 0.0
    %3474 = vmatpush2.msra.mxu0 0.0
    %3475 = vmatprep.mubr.f32.mxu0 0.0
    %3476 = vmatmul.mubr.f32.gmra.mxu0 %v3407
    %v3477 = vpop.f32.mrf.mxu0
    %v3478 = vadd.f32 0.0, %v3477
    %v3479 = vpop.f32.mrf.mxu0
    %3480 = vdwg.mxu0
    %s3481 = scalar_lea.vmem [#allocation13], 32
    %v3482 = vld [vmem:[%s3481] sm:$0xff]
    %v3483 = vld [vmem:[%s3481 + $0x8] sm:$0xff]
    %v3484 = vld [vmem:[%s3481 + $0x10] sm:$0xff]
    %v3485 = vld [vmem:[%s3481 + $0x18] sm:$0xff]
    %v3494 = vcombine.low %v2953, %v3028
    %v3495 = vcombine.low %v3103, %v3178
    %v3496 = vcombine.low %v3253, %v3328
    %v3497 = vcombine.low %v3403, %v3478
    %v3498 = vsel %vm162, %v3494, 0
    %v3500 = vsel %vm162, %v3495, 0
    %v3502 = vsel %vm162, %v3496, 0
    %v3504 = vsel %vm162, %v3497, 0
    %3506 = vmatprep.subr.mxu0 0.0
    %3507 = vmatpush1.msra.mxu0 0.0
    %3508 = vmatprep.subr.mxu0 0.0
    %3509 = vmatpush1.msra.mxu0 0.0
    %3510 = vmatprep.subr.mxu0 0.0
    %3511 = vmatpush1.msra.mxu0 0.0
    %3512 = vmatprep.subr.mxu0 0.0
    %3513 = vmatpush1.msra.mxu0 0.0
    %3514 = vmatprep.subr.mxu0 0.0
    %3515 = vmatpush1.msra.mxu0 0.0
    %3516 = vmatprep.subr.mxu0 0.0
    %3517 = vmatpush1.msra.mxu0 0.0
    %3518 = vmatprep.subr.mxu0 0.0
    %3519 = vmatpush1.msra.mxu0 0.0
    %3520 = vmatprep.subr.mxu0 0.0
    %3521 = vmatpush1.msra.mxu0 0.0
    %3522 = vmatprep.subr.mxu0 0.0
    %3523 = vmatpush1.msra.mxu0 0.0
    %3524 = vmatprep.subr.mxu0 0.0
    %3525 = vmatpush1.msra.mxu0 0.0
    %3526 = vmatprep.subr.mxu0 0.0
    %3527 = vmatpush1.msra.mxu0 0.0
    %3528 = vmatprep.subr.mxu0 0.0
    %3529 = vmatpush1.msra.mxu0 0.0
    %3530 = vmatprep.subr.mxu0 0.0
    %3531 = vmatpush1.msra.mxu0 %v3485
    %3532 = vmatprep.subr.mxu0 0.0
    %3533 = vmatpush1.msra.mxu0 %v3484
    %3534 = vmatprep.subr.mxu0 0.0
    %3535 = vmatpush1.msra.mxu0 %v3483
    %3536 = vmatprep.subr.mxu0 0.0
    %3537 = vmatpush1.msra.mxu0 %v3482
    %3538 = vmatprep.subr.mxu0 0.0
    %3539 = vmatpush2.msra.mxu0 0.0
    %3540 = vmatprep.subr.mxu0 0.0
    %3541 = vmatpush2.msra.mxu0 0.0
    %3542 = vmatprep.subr.mxu0 0.0
    %3543 = vmatpush2.msra.mxu0 0.0
    %3544 = vmatprep.subr.mxu0 0.0
    %3545 = vmatpush2.msra.mxu0 0.0
    %3546 = vmatprep.subr.mxu0 0.0
    %3547 = vmatpush2.msra.mxu0 0.0
    %3548 = vmatprep.subr.mxu0 0.0
    %3549 = vmatpush2.msra.mxu0 0.0
    %3550 = vmatprep.subr.mxu0 0.0
    %3551 = vmatpush2.msra.mxu0 0.0
    %3552 = vmatprep.subr.mxu0 0.0
    %3553 = vmatpush2.msra.mxu0 0.0
    %3554 = vmatprep.subr.mxu0 0.0
    %3555 = vmatpush2.msra.mxu0 0.0
    %3556 = vmatprep.subr.mxu0 0.0
    %3557 = vmatpush2.msra.mxu0 0.0
    %3558 = vmatprep.subr.mxu0 0.0
    %3559 = vmatpush2.msra.mxu0 0.0
    %3560 = vmatprep.subr.mxu0 0.0
    %3561 = vmatpush2.msra.mxu0 0.0
    %3562 = vmatprep.subr.mxu0 0.0
    %3563 = vmatpush2.msra.mxu0 0.0
    %3564 = vmatprep.subr.mxu0 0.0
    %3565 = vmatpush2.msra.mxu0 0.0
    %3566 = vmatprep.subr.mxu0 0.0
    %3567 = vmatpush2.msra.mxu0 0.0
    %3568 = vmatprep.subr.mxu0 0.0
    %3569 = vmatpush2.msra.mxu0 0.0
    %3570 = vmatprep.mubr.f32.mxu0 0.0
    %3571 = vmatmul.mubr.f32.gmra.mxu0 %v3498
    %v3572 = vpop.f32.mrf.mxu0
    %v3573 = vadd.f32 0.0, %v3572
    %v3574 = vpop.f32.mrf.mxu0
    %3575 = vmatprep.mubr.f32.mxu0 0.0
    %3576 = vmatmul.mubr.f32.gmra.mxu0 %v3500
    %v3577 = vpop.f32.mrf.mxu0
    %v3578 = vadd.f32 0.0, %v3577
    %v3579 = vpop.f32.mrf.mxu0
    %3580 = vmatprep.mubr.f32.mxu0 0.0
    %3581 = vmatmul.mubr.f32.gmra.mxu0 %v3502
    %v3582 = vpop.f32.mrf.mxu0
    %v3583 = vadd.f32 0.0, %v3582
    %v3584 = vpop.f32.mrf.mxu0
    %3585 = vmatprep.mubr.f32.mxu0 0.0
    %3586 = vmatmul.mubr.f32.gmra.mxu0 %v3504
    %v3587 = vpop.f32.mrf.mxu0
    %v3588 = vadd.f32 0.0, %v3587
    %v3589 = vpop.f32.mrf.mxu0
    %3590 = vdwg.mxu0
    %v3591 = vadd.f32 %v1888, %v3573
    %v3592 = vadd.f32 %v1889, %v3578
    %v3593 = vadd.f32 %v1890, %v3583
    %v3594 = vadd.f32 %v1891, %v3588
    %3595 = vst.msk [vmem:[#allocation14] sm:$0xff] %vm162, %v3591
    %3596 = vst.msk [vmem:[#allocation14 + $0x8] sm:$0xff] %vm162, %v3592
    %3597 = vst.msk [vmem:[#allocation14 + $0x10] sm:$0xff] %vm162, %v3593
    %3598 = vst.msk [vmem:[#allocation14 + $0x18] sm:$0xff] %vm162, %v3594
    // Predicated region
    $region74: #{tpu_custom_call.1} parent=1 // pred_check
      _
    $region75: #{tpu_custom_call.1} parent=1 // pred_check_branch
      %3600 = sbr.rel (0) target = $region77
    $region76: #{tpu_custom_call.1} parent=1 // pred_region
      %s3602 = ssub.s32 512, 512
      %3603 = vsyncadd [#allocation4], %s3602
      %s3604 = sshll.u32 [#allocation14], 4
      %s3605 = int_to_ptr.vmem [resolvable:$true] %s3604
      %3610 = dma.vmem_to_hbm [thread:$0]  %s3605, 512, %s11, [#allocation4], 128, 128, 8
    $region77: #{tpu_custom_call.1} parent=1 // pred_fallthru
      _
    // Predicated region
    $region78: #{tpu_custom_call.1} parent=1 // pred_check
      _
    $region79: #{tpu_custom_call.1} parent=1 // pred_check_branch
      %3612 = sbr.rel (0) target = $region81
    $region80: #{tpu_custom_call.1} parent=1 // pred_region
      %3613 = dma.done [#allocation4], 512
    $region81: #{tpu_custom_call.1} parent=1 // pred_fallthru
      _
    %3614 = vsyncpa [#allocation3], 1
    %3615 = vsyncpa [#allocation6], 1
    %3616 = vsyncpa [#allocation9], 1
    %3617 = vsyncpa [#allocation12], 1
    %3618 = vsyncpa [#allocation4], 1

</llo_original>
